<compile_context>
chip_gen: v6e
topology: v6e:2x2x1
jax: 0.10.0
libtpu: 0.0.40
codegen_flags: <defaults>
</compile_context>

<pallas_src>
import jax
import jax.numpy as jnp
from jax.experimental import pallas as pl
from jax.experimental.pallas import tpu as pltpu

IN_DIM = 784
HIDDEN = 400
LATENT = 10
LANE = 128                 # lane padding for the mu / logvar heads
HEAD_N = 2 * LANE          # fused, lane-aligned [mu | logvar] head width
MAX_TB = 256               # batch tile (fits every generation's scoped VMEM)


def _round_up(n, m):
    return ((n + m - 1) // m) * m


# ----------------------------------------------------------------------------
# Fused kernel: encoder + reparameterization + decoder for one batch tile.
# ----------------------------------------------------------------------------
def _vae_kernel(x_ref, eps_ref,
                w1_ref, b1_ref,
                w2_ref, b2_ref,      # lane-padded [mu | logvar] head (HIDDEN, 256)
                w3_ref, b3_ref,      # lane-padded (128, HIDDEN)
                w4_ref, b4_ref,
                recon_ref, head_ref):
    # ---- encoder: h1 = relu(x @ W1 + b1) ----
    h1 = jnp.dot(x_ref[...], w1_ref[...],
                 preferred_element_type=jnp.float32) + b1_ref[...]
    h1 = jnp.maximum(h1, 0.0)

    # ---- fused, lane-aligned mu / logvar head (single MXU call) ----
    head = jnp.dot(h1.astype(jnp.bfloat16), w2_ref[...],
                   preferred_element_type=jnp.float32) + b2_ref[...]
    mu = head[:, :LANE]          # whole-vreg slice (lane offset 0)
    logvar = head[:, LANE:]      # whole-vreg slice (lane offset 128)

    # ---- reparameterize (training-mode semantics; eps supplied, zero-padded) ----
    z = eps_ref[...] * jnp.exp(0.5 * logvar) + mu

    # ---- decoder: recon = sigmoid(relu(z @ W3 + b3) @ W4 + b4) ----
    h3 = jnp.dot(z.astype(jnp.bfloat16), w3_ref[...],
                 preferred_element_type=jnp.float32) + b3_ref[...]
    h3 = jnp.maximum(h3, 0.0)
    logits = jnp.dot(h3.astype(jnp.bfloat16), w4_ref[...],
                     preferred_element_type=jnp.float32) + b4_ref[...]

    recon_ref[...] = jax.nn.sigmoid(logits)
    head_ref[...] = head


# ----------------------------------------------------------------------------
# Wrapper: pad batch to a sublane-aligned tile, tile the batch over a grid,
# keep weights resident in VMEM, split mu/logvar from the lane-dense head.
# ----------------------------------------------------------------------------
def vae_forward(prepped, x_nchw, eps):
    """x_nchw: (B, 1, 28, 28); eps: (B, LATENT). Returns (recon, mu, logvar)."""
    (w1, b1, w2, b2, w3, b3, w4, b4) = prepped
    B = x_nchw.shape[0]

    # bf16 input (halves x HBM bytes); sublane-aligned batch tile.
    tb = min(MAX_TB, _round_up(B, 16))
    bp = _round_up(B, tb)
    grid = (bp // tb,)

    x = x_nchw.reshape(B, IN_DIM).astype(jnp.bfloat16)
    x_pad = jnp.zeros((bp, IN_DIM), jnp.bfloat16).at[:B].set(x)
    eps_pad = jnp.zeros((bp, LANE), jnp.float32).at[:B, :LATENT].set(
        eps.astype(jnp.float32))

    const = lambda i: (0, 0)          # weights/biases: same block every step
    batch = lambda i: (i, 0)          # batch-tiled operands

    weight_bytes = sum(int(w.size) * w.dtype.itemsize
                       for w in (w1, b1, w2, b2, w3, b3, w4, b4))
    flops = 2 * bp * (IN_DIM * HIDDEN + HIDDEN * HEAD_N
                      + LANE * HIDDEN + HIDDEN * IN_DIM)
    bytes_accessed = (weight_bytes
                      + bp * (IN_DIM * 2 + LANE * 4          # x (bf16) + eps in
                              + IN_DIM * 4 + HEAD_N * 4))    # recon + head out

    recon_pad, head_pad = pl.pallas_call(
        _vae_kernel,
        out_shape=(jax.ShapeDtypeStruct((bp, IN_DIM), jnp.float32),
                   jax.ShapeDtypeStruct((bp, HEAD_N), jnp.float32)),
        grid_spec=pltpu.PrefetchScalarGridSpec(
            num_scalar_prefetch=0,
            grid=grid,
            in_specs=[
                pl.BlockSpec((tb, IN_DIM), batch),     # x
                pl.BlockSpec((tb, LANE), batch),       # eps (lane-padded)
                pl.BlockSpec(w1.shape, const),
                pl.BlockSpec(b1.shape, const),
                pl.BlockSpec(w2.shape, const),
                pl.BlockSpec(b2.shape, const),
                pl.BlockSpec(w3.shape, const),
                pl.BlockSpec(b3.shape, const),
                pl.BlockSpec(w4.shape, const),
                pl.BlockSpec(b4.shape, const),
            ],
            out_specs=[
                pl.BlockSpec((tb, IN_DIM), batch),     # recon
                pl.BlockSpec((tb, HEAD_N), batch),     # fused [mu | logvar]
            ]),
        compiler_params=pltpu.CompilerParams(
            dimension_semantics=("parallel",),         # megacore on v7x
            vmem_limit_bytes=32 * 1024 * 1024),
        cost_estimate=pl.CostEstimate(
            flops=flops,
            transcendentals=bp * (LANE + IN_DIM),
            bytes_accessed=bytes_accessed),
    )(x_pad, eps_pad, w1, b1, w2, b2, w3, b3, w4, b4)

    recon = recon_pad[:B]
    mu = head_pad[:B, :LATENT]
    logvar = head_pad[:B, LANE:LANE + LATENT]
    return recon, mu, logvar


# ----------------------------------------------------------------------------
# Parameter init (synthetic, deterministic; PyTorch Linear layout (out, in))
# and one-time prep into kernel layout (transpose, lane-pad, bf16 weights).
# ----------------------------------------------------------------------------
def init_params(key):
    keys = jax.random.split(key, 10)

    def nrm(k, shape, scale):
        return scale * jax.random.normal(k, shape, jnp.float32)

    return {
        "fc1":  (nrm(keys[0], (HIDDEN, IN_DIM), 0.05), nrm(keys[1], (HIDDEN,), 0.01)),
        "fc21": (nrm(keys[2], (LATENT, HIDDEN), 0.05), nrm(keys[3], (LATENT,), 0.01)),
        "fc22": (nrm(keys[4], (LATENT, HIDDEN), 0.05), nrm(keys[5], (LATENT,), 0.01)),
        "fc3":  (nrm(keys[6], (HIDDEN, LATENT), 0.10), nrm(keys[7], (HIDDEN,), 0.01)),
        "fc4":  (nrm(keys[8], (IN_DIM, HIDDEN), 0.05), nrm(keys[9], (IN_DIM,), 0.01)),
    }


def prepare_params(p):
    """PyTorch (out,in) -> (in,out) bf16 weights, (1,N) f32 biases, lane-padded head."""
    w1 = p["fc1"][0].T.astype(jnp.bfloat16)
    b1 = p["fc1"][1].reshape(1, HIDDEN).astype(jnp.float32)

    # mu head in lanes [0,128), logvar head in [128,256); zero padding elsewhere.
    w2 = jnp.zeros((HIDDEN, HEAD_N), jnp.float32)
    w2 = w2.at[:, :LATENT].set(p["fc21"][0].T)
    w2 = w2.at[:, LANE:LANE + LATENT].set(p["fc22"][0].T).astype(jnp.bfloat16)
    b2 = jnp.zeros((1, HEAD_N), jnp.float32)
    b2 = b2.at[0, :LATENT].set(p["fc21"][1])
    b2 = b2.at[0, LANE:LANE + LATENT].set(p["fc22"][1])

    # decoder input padded to 128 lanes (rows >= LATENT are zero).
    w3 = jnp.zeros((LANE, HIDDEN), jnp.float32)
    w3 = w3.at[:LATENT].set(p["fc3"][0].T).astype(jnp.bfloat16)
    b3 = p["fc3"][1].reshape(1, HIDDEN).astype(jnp.float32)

    w4 = p["fc4"][0].T.astype(jnp.bfloat16)
    b4 = p["fc4"][1].reshape(1, IN_DIM).astype(jnp.float32)
    return (w1, b1, w2, b2, w3, b3, w4, b4)


# ----------------------------------------------------------------------------
# Pure-JAX reference (same bf16 operand / f32 accumulate path) for validation.
# ----------------------------------------------------------------------------
def vae_reference(prepped, x_nchw, eps):
    (w1, b1, w2, b2, w3, b3, w4, b4) = prepped
    B = x_nchw.shape[0]
    x = x_nchw.reshape(B, IN_DIM).astype(jnp.bfloat16)
    eps_p = jnp.zeros((B, LANE), jnp.float32).at[:, :LATENT].set(eps)
    h1 = jnp.maximum(jnp.dot(x, w1, preferred_element_type=jnp.float32) + b1, 0.0)
    head = jnp.dot(h1.astype(jnp.bfloat16), w2,
                   preferred_element_type=jnp.float32) + b2
    mu_p, lv_p = head[:, :LANE], head[:, LANE:]
    z = eps_p * jnp.exp(0.5 * lv_p) + mu_p
    h3 = jnp.maximum(jnp.dot(z.astype(jnp.bfloat16), w3,
                             preferred_element_type=jnp.float32) + b3, 0.0)
    logits = jnp.dot(h3.astype(jnp.bfloat16), w4,
                     preferred_element_type=jnp.float32) + b4
    return jax.nn.sigmoid(logits), mu_p[:, :LATENT], lv_p[:, :LATENT]


if __name__ == "__main__":
    key = jax.random.PRNGKey(0)
    kp, kx, ke = jax.random.split(key, 3)

    params = init_params(kp)
    prepped = prepare_params(params)

    B = 2
    x = jax.random.normal(kx, (B, 1, 28, 28), jnp.float32)   # MNIST-like input
    eps = jax.random.normal(ke, (B, LATENT), jnp.float32)    # reparam noise
    # TODO(synk): eps is a deterministic kernel input; PyTorch draws it with
    # torch.randn_like inside reparameterize() when self.training is True.

    fwd = jax.jit(vae_forward)
    recon, mu, logvar = fwd(prepped, x, eps)
    jax.block_until_ready((recon, mu, logvar))

    # Shape / range checks and comparison against the pure-JAX reference.
    assert recon.shape == (B, IN_DIM)
    assert mu.shape == (B, LATENT) and logvar.shape == (B, LATENT)
    assert bool(jnp.all((recon >= 0.0) & (recon <= 1.0)))    # sigmoid range

    r_ref, m_ref, lv_ref = vae_reference(prepped, x, eps)
    assert bool(jnp.allclose(recon, r_ref, atol=5e-3, rtol=5e-3))
    assert bool(jnp.allclose(mu, m_ref, atol=5e-3, rtol=5e-3))
    assert bool(jnp.allclose(logvar, lv_ref, atol=5e-3, rtol=5e-3))

    print("KERNEL_OK")
</pallas_src>

<mosaic_0001>
module attributes {stable_mosaic.version = 11 : i64} {
  func.func @_vae_kernel(%arg0: i32, %arg1: memref<16x784xbf16, #tpu.memory_space<vmem>>, %arg2: memref<16x128xf32, #tpu.memory_space<vmem>>, %arg3: memref<784x400xbf16, #tpu.memory_space<vmem>>, %arg4: memref<1x400xf32, #tpu.memory_space<vmem>>, %arg5: memref<400x256xbf16, #tpu.memory_space<vmem>>, %arg6: memref<1x256xf32, #tpu.memory_space<vmem>>, %arg7: memref<128x400xbf16, #tpu.memory_space<vmem>>, %arg8: memref<1x400xf32, #tpu.memory_space<vmem>>, %arg9: memref<400x784xbf16, #tpu.memory_space<vmem>>, %arg10: memref<1x784xf32, #tpu.memory_space<vmem>>, %arg11: memref<16x784xf32, #tpu.memory_space<vmem>>, %arg12: memref<16x256xf32, #tpu.memory_space<vmem>>) attributes {dimension_semantics = [#tpu.dimension_semantics<parallel>], iteration_bounds = array<i64: 1>, scalar_prefetch = 0 : i64, scratch_operands = 0 : i64, tpu.core_type = #tpu.core_type<tc>, window_params = [{transform_indices = @transform_0, window_bounds = array<i64: 16, 784>}, {transform_indices = @transform_1, window_bounds = array<i64: 16, 128>}, {pipeline_mode = #tpu.pipeline_mode<synchronous>, transform_indices = @transform_2, window_bounds = array<i64: 784, 400>}, {pipeline_mode = #tpu.pipeline_mode<synchronous>, transform_indices = @transform_3, window_bounds = array<i64: 1, 400>}, {pipeline_mode = #tpu.pipeline_mode<synchronous>, transform_indices = @transform_4, window_bounds = array<i64: 400, 256>}, {pipeline_mode = #tpu.pipeline_mode<synchronous>, transform_indices = @transform_5, window_bounds = array<i64: 1, 256>}, {pipeline_mode = #tpu.pipeline_mode<synchronous>, transform_indices = @transform_6, window_bounds = array<i64: 128, 400>}, {pipeline_mode = #tpu.pipeline_mode<synchronous>, transform_indices = @transform_7, window_bounds = array<i64: 1, 400>}, {pipeline_mode = #tpu.pipeline_mode<synchronous>, transform_indices = @transform_8, window_bounds = array<i64: 400, 784>}, {pipeline_mode = #tpu.pipeline_mode<synchronous>, transform_indices = @transform_9, window_bounds = array<i64: 1, 784>}, {transform_indices = @transform_10, window_bounds = array<i64: 16, 784>}, {transform_indices = @transform_11, window_bounds = array<i64: 16, 256>}]} {
    %c0 = arith.constant 0 : index
    %c0_0 = arith.constant 0 : index
    %0 = vector.load %arg1[%c0, %c0_0] : memref<16x784xbf16, #tpu.memory_space<vmem>>, vector<16x784xbf16>
    %c0_1 = arith.constant 0 : index
    %c0_2 = arith.constant 0 : index
    %1 = vector.load %arg3[%c0_1, %c0_2] : memref<784x400xbf16, #tpu.memory_space<vmem>>, vector<784x400xbf16>
    %cst = arith.constant dense<0.000000e+00> : vector<16x400xf32>
    %2 = tpu.matmul %0, %1, %cst {dimension_numbers = #tpu.dot_dimension_numbers<[1], [0], [0], [1], [0, 0, 1, 1], [], []>} : vector<16x784xbf16>, vector<784x400xbf16>, vector<16x400xf32> -> vector<16x400xf32>
    %c0_3 = arith.constant 0 : index
    %c0_4 = arith.constant 0 : index
    %3 = vector.load %arg4[%c0_3, %c0_4] : memref<1x400xf32, #tpu.memory_space<vmem>>, vector<1x400xf32>
    %4 = vector.broadcast %3 : vector<1x400xf32> to vector<16x400xf32>
    %5 = arith.addf %2, %4 : vector<16x400xf32>
    %cst_5 = arith.constant 0.000000e+00 : f32
    %6 = vector.broadcast %cst_5 : f32 to vector<16x400xf32>
    %7 = arith.maximumf %5, %6 : vector<16x400xf32>
    %8 = arith.truncf %7 : vector<16x400xf32> to vector<16x400xbf16>
    %c0_6 = arith.constant 0 : index
    %c0_7 = arith.constant 0 : index
    %9 = vector.load %arg5[%c0_6, %c0_7] : memref<400x256xbf16, #tpu.memory_space<vmem>>, vector<400x256xbf16>
    %cst_8 = arith.constant dense<0.000000e+00> : vector<16x256xf32>
    %10 = tpu.matmul %8, %9, %cst_8 {dimension_numbers = #tpu.dot_dimension_numbers<[1], [0], [0], [1], [0, 0, 1, 1], [], []>} : vector<16x400xbf16>, vector<400x256xbf16>, vector<16x256xf32> -> vector<16x256xf32>
    %c0_9 = arith.constant 0 : index
    %c0_10 = arith.constant 0 : index
    %11 = vector.load %arg6[%c0_9, %c0_10] : memref<1x256xf32, #tpu.memory_space<vmem>>, vector<1x256xf32>
    %12 = vector.broadcast %11 : vector<1x256xf32> to vector<16x256xf32>
    %13 = arith.addf %10, %12 : vector<16x256xf32>
    %14 = vector.extract_strided_slice %13 {offsets = [0, 0], sizes = [16, 128], strides = [1, 1]} : vector<16x256xf32> to vector<16x128xf32>
    %15 = vector.extract_strided_slice %13 {offsets = [0, 128], sizes = [16, 128], strides = [1, 1]} : vector<16x256xf32> to vector<16x128xf32>
    %c0_11 = arith.constant 0 : index
    %c0_12 = arith.constant 0 : index
    %16 = vector.load %arg2[%c0_11, %c0_12] : memref<16x128xf32, #tpu.memory_space<vmem>>, vector<16x128xf32>
    %cst_13 = arith.constant 5.000000e-01 : f32
    %17 = vector.broadcast %cst_13 : f32 to vector<16x128xf32>
    %18 = arith.mulf %17, %15 : vector<16x128xf32>
    %19 = math.exp %18 : vector<16x128xf32>
    %20 = arith.mulf %16, %19 : vector<16x128xf32>
    %21 = arith.addf %20, %14 : vector<16x128xf32>
    %22 = arith.truncf %21 : vector<16x128xf32> to vector<16x128xbf16>
    %c0_14 = arith.constant 0 : index
    %c0_15 = arith.constant 0 : index
    %23 = vector.load %arg7[%c0_14, %c0_15] : memref<128x400xbf16, #tpu.memory_space<vmem>>, vector<128x400xbf16>
    %cst_16 = arith.constant dense<0.000000e+00> : vector<16x400xf32>
    %24 = tpu.matmul %22, %23, %cst_16 {dimension_numbers = #tpu.dot_dimension_numbers<[1], [0], [0], [1], [0, 0, 1, 1], [], []>} : vector<16x128xbf16>, vector<128x400xbf16>, vector<16x400xf32> -> vector<16x400xf32>
    %c0_17 = arith.constant 0 : index
    %c0_18 = arith.constant 0 : index
    %25 = vector.load %arg8[%c0_17, %c0_18] : memref<1x400xf32, #tpu.memory_space<vmem>>, vector<1x400xf32>
    %26 = vector.broadcast %25 : vector<1x400xf32> to vector<16x400xf32>
    %27 = arith.addf %24, %26 : vector<16x400xf32>
    %cst_19 = arith.constant 0.000000e+00 : f32
    %28 = vector.broadcast %cst_19 : f32 to vector<16x400xf32>
    %29 = arith.maximumf %27, %28 : vector<16x400xf32>
    %30 = arith.truncf %29 : vector<16x400xf32> to vector<16x400xbf16>
    %c0_20 = arith.constant 0 : index
    %c0_21 = arith.constant 0 : index
    %31 = vector.load %arg9[%c0_20, %c0_21] : memref<400x784xbf16, #tpu.memory_space<vmem>>, vector<400x784xbf16>
    %cst_22 = arith.constant dense<0.000000e+00> : vector<16x784xf32>
    %32 = tpu.matmul %30, %31, %cst_22 {dimension_numbers = #tpu.dot_dimension_numbers<[1], [0], [0], [1], [0, 0, 1, 1], [], []>} : vector<16x400xbf16>, vector<400x784xbf16>, vector<16x784xf32> -> vector<16x784xf32>
    %c0_23 = arith.constant 0 : index
    %c0_24 = arith.constant 0 : index
    %33 = vector.load %arg10[%c0_23, %c0_24] : memref<1x784xf32, #tpu.memory_space<vmem>>, vector<1x784xf32>
    %34 = vector.broadcast %33 : vector<1x784xf32> to vector<16x784xf32>
    %35 = arith.addf %32, %34 : vector<16x784xf32>
    %36 = arith.negf %35 : vector<16x784xf32>
    %37 = math.exp %36 : vector<16x784xf32>
    %cst_25 = arith.constant 1.000000e+00 : f32
    %38 = vector.broadcast %cst_25 : f32 to vector<16x784xf32>
    %39 = arith.addf %38, %37 : vector<16x784xf32>
    %40 = arith.divf %38, %39 : vector<16x784xf32>
    %c0_26 = arith.constant 0 : index
    %c0_27 = arith.constant 0 : index
    %41 = vector.load %arg11[%c0_26, %c0_27] : memref<16x784xf32, #tpu.memory_space<vmem>>, vector<16x784xf32>
    tpu.vector_store %arg11[%c0_26, %c0_27], %40 {strides = array<i32>} : memref<16x784xf32, #tpu.memory_space<vmem>>, vector<16x784xf32>,
    %c0_28 = arith.constant 0 : index
    %c0_29 = arith.constant 0 : index
    %42 = vector.load %arg12[%c0_28, %c0_29] : memref<16x256xf32, #tpu.memory_space<vmem>>, vector<16x256xf32>
    tpu.vector_store %arg12[%c0_28, %c0_29], %13 {strides = array<i32>} : memref<16x256xf32, #tpu.memory_space<vmem>>, vector<16x256xf32>,
    return
  }
  func.func @transform_0(%arg0: i32) -> (i32, i32) {
    %c0_i32 = arith.constant 0 : i32
    %c0_i32_0 = arith.constant 0 : i32
    return %arg0, %c0_i32 : i32, i32
  }
  func.func @transform_1(%arg0: i32) -> (i32, i32) {
    %c0_i32 = arith.constant 0 : i32
    %c0_i32_0 = arith.constant 0 : i32
    return %arg0, %c0_i32 : i32, i32
  }
  func.func @transform_2(%arg0: i32) -> (i32, i32) {
    %c0_i32 = arith.constant 0 : i32
    %c0_i32_0 = arith.constant 0 : i32
    %c0_i32_1 = arith.constant 0 : i32
    return %c0_i32, %c0_i32_0 : i32, i32
  }
  func.func @transform_3(%arg0: i32) -> (i32, i32) {
    %c0_i32 = arith.constant 0 : i32
    %c0_i32_0 = arith.constant 0 : i32
    %c0_i32_1 = arith.constant 0 : i32
    return %c0_i32, %c0_i32_0 : i32, i32
  }
  func.func @transform_4(%arg0: i32) -> (i32, i32) {
    %c0_i32 = arith.constant 0 : i32
    %c0_i32_0 = arith.constant 0 : i32
    %c0_i32_1 = arith.constant 0 : i32
    return %c0_i32, %c0_i32_0 : i32, i32
  }
  func.func @transform_5(%arg0: i32) -> (i32, i32) {
    %c0_i32 = arith.constant 0 : i32
    %c0_i32_0 = arith.constant 0 : i32
    %c0_i32_1 = arith.constant 0 : i32
    return %c0_i32, %c0_i32_0 : i32, i32
  }
  func.func @transform_6(%arg0: i32) -> (i32, i32) {
    %c0_i32 = arith.constant 0 : i32
    %c0_i32_0 = arith.constant 0 : i32
    %c0_i32_1 = arith.constant 0 : i32
    return %c0_i32, %c0_i32_0 : i32, i32
  }
  func.func @transform_7(%arg0: i32) -> (i32, i32) {
    %c0_i32 = arith.constant 0 : i32
    %c0_i32_0 = arith.constant 0 : i32
    %c0_i32_1 = arith.constant 0 : i32
    return %c0_i32, %c0_i32_0 : i32, i32
  }
  func.func @transform_8(%arg0: i32) -> (i32, i32) {
    %c0_i32 = arith.constant 0 : i32
    %c0_i32_0 = arith.constant 0 : i32
    %c0_i32_1 = arith.constant 0 : i32
    return %c0_i32, %c0_i32_0 : i32, i32
  }
  func.func @transform_9(%arg0: i32) -> (i32, i32) {
    %c0_i32 = arith.constant 0 : i32
    %c0_i32_0 = arith.constant 0 : i32
    %c0_i32_1 = arith.constant 0 : i32
    return %c0_i32, %c0_i32_0 : i32, i32
  }
  func.func @transform_10(%arg0: i32) -> (i32, i32) {
    %c0_i32 = arith.constant 0 : i32
    %c0_i32_0 = arith.constant 0 : i32
    return %arg0, %c0_i32 : i32, i32
  }
  func.func @transform_11(%arg0: i32) -> (i32, i32) {
    %c0_i32 = arith.constant 0 : i32
    %c0_i32_0 = arith.constant 0 : i32
    return %arg0, %c0_i32 : i32, i32
  }
}

</mosaic_0001>

<llo_original>
// kernel: vae_forward.1
$region0: #{vae_forward.1}
  #allocation0 [shape = 'u32[]', space=smem, size = 0x4, offset = 0x4, fixed_abs, tag = 'smem constant byte address 0x4 - core index']
  #allocation1 [shape = 'u32[144,128]{1,0:T(1,128)}', space=vmem, size = 0x12000, scoped, tag = 'internal scratch']
  %s0 = inlined_call_operand.vmem [shape: bf16[16,784], index: 0, kind: input, shape index: {}]
  %s1 = inlined_call_operand.vmem [shape: f32[16,128], index: 1, kind: input, shape index: {}]
  %s2 = inlined_call_operand.vmem [shape: bf16[784,400], index: 2, kind: input, shape index: {}]
  %s3 = inlined_call_operand.vmem [shape: f32[1,400], index: 3, kind: input, shape index: {}]
  %s4 = inlined_call_operand.vmem [shape: bf16[400,256], index: 4, kind: input, shape index: {}]
  %s5 = inlined_call_operand.vmem [shape: f32[1,256], index: 5, kind: input, shape index: {}]
  %s6 = inlined_call_operand.vmem [shape: bf16[128,400], index: 6, kind: input, shape index: {}]
  %s7 = inlined_call_operand.vmem [shape: f32[1,400], index: 7, kind: input, shape index: {}]
  %s8 = inlined_call_operand.vmem [shape: bf16[400,784], index: 8, kind: input, shape index: {}]
  %s9 = inlined_call_operand.vmem [shape: f32[1,784], index: 9, kind: input, shape index: {}]
  %s10 = inlined_call_operand.vmem [shape: f32[16,784], index: 10, kind: output, shape index: {0}]
  %s11 = inlined_call_operand.vmem [shape: f32[16,256], index: 11, kind: output, shape index: {1}]
  %12 = xla_tuple %s10, %s11
  %s13 = sld [smem:[#allocation0]]
  $region58: #{vae_forward.1} parent=0
    _
  %s15 = ssub.s32 1, %s13
  %s16 = scalar_select 0, %s15, %s13
  // Predicated region
  $region2: #{vae_forward.1} parent=0 // pred_check
    _
  $region3: #{vae_forward.1} parent=0 // pred_check_branch
    %18 = sbr.rel (0) target = $region5
  $region4: #{vae_forward.1} parent=0 // pred_region
    _
  $region5: #{vae_forward.1} parent=0 // pred_fallthru
    _
  // Predicated region
  $region6: #{vae_forward.1} parent=0 // pred_check
    _
  $region7: #{vae_forward.1} parent=0 // pred_check_branch
    %20 = sbr.rel (0) target = $region9
  $region8: #{vae_forward.1} parent=0 // pred_region
    _
  $region9: #{vae_forward.1} parent=0 // pred_fallthru
    _
  // Predicated region
  $region10: #{vae_forward.1} parent=0 // pred_check
    _
  $region11: #{vae_forward.1} parent=0 // pred_check_branch
    %22 = sbr.rel (0) target = $region13
  $region12: #{vae_forward.1} parent=0 // pred_region
    _
  $region13: #{vae_forward.1} parent=0 // pred_fallthru
    _
  // Predicated region
  $region14: #{vae_forward.1} parent=0 // pred_check
    _
  $region15: #{vae_forward.1} parent=0 // pred_check_branch
    %24 = sbr.rel (0) target = $region17
  $region16: #{vae_forward.1} parent=0 // pred_region
    _
  $region17: #{vae_forward.1} parent=0 // pred_fallthru
    _
  // Predicated region
  $region18: #{vae_forward.1} parent=0 // pred_check
    _
  $region19: #{vae_forward.1} parent=0 // pred_check_branch
    %26 = sbr.rel (0) target = $region21
  $region20: #{vae_forward.1} parent=0 // pred_region
    _
  $region21: #{vae_forward.1} parent=0 // pred_fallthru
    _
  // Predicated region
  $region22: #{vae_forward.1} parent=0 // pred_check
    _
  $region23: #{vae_forward.1} parent=0 // pred_check_branch
    %28 = sbr.rel (0) target = $region25
  $region24: #{vae_forward.1} parent=0 // pred_region
    _
  $region25: #{vae_forward.1} parent=0 // pred_fallthru
    _
  // Predicated region
  $region26: #{vae_forward.1} parent=0 // pred_check
    _
  $region27: #{vae_forward.1} parent=0 // pred_check_branch
    %30 = sbr.rel (0) target = $region29
  $region28: #{vae_forward.1} parent=0 // pred_region
    _
  $region29: #{vae_forward.1} parent=0 // pred_fallthru
    _
  // Predicated region
  $region30: #{vae_forward.1} parent=0 // pred_check
    _
  $region31: #{vae_forward.1} parent=0 // pred_check_branch
    %32 = sbr.rel (0) target = $region33
  $region32: #{vae_forward.1} parent=0 // pred_region
    _
  $region33: #{vae_forward.1} parent=0 // pred_fallthru
    _
  // Predicated region
  $region34: #{vae_forward.1} parent=0 // pred_check
    _
  $region35: #{vae_forward.1} parent=0 // pred_check_branch
    %34 = sbr.rel (0) target = $region37
  $region36: #{vae_forward.1} parent=0 // pred_region
    _
  $region37: #{vae_forward.1} parent=0 // pred_fallthru
    _
  // Predicated region
  $region38: #{vae_forward.1} parent=0 // pred_check
    _
  $region39: #{vae_forward.1} parent=0 // pred_check_branch
    %36 = sbr.rel (0) target = $region41
  $region40: #{vae_forward.1} parent=0 // pred_region
    _
  $region41: #{vae_forward.1} parent=0 // pred_fallthru
    _
  %v38 = vld [vmem:[%s0] sm:$0xff]
  %v39 = vld [vmem:[%s0 + $0x8] sm:$0xff]
  %v40 = vld [vmem:[%s0 + $0x10] sm:$0xff]
  %v41 = vld [vmem:[%s0 + $0x18] sm:$0xf]
  %v42 = vld [vmem:[%s0 + $0x1c] sm:$0xff]
  %v43 = vld [vmem:[%s0 + $0x24] sm:$0xff]
  %v44 = vld [vmem:[%s0 + $0x2c] sm:$0xff]
  %v45 = vld [vmem:[%s0 + $0x34] sm:$0xf]
  %v46 = vld [vmem:[%s2] sm:$0xff]
  %v47 = vld [vmem:[%s2 + $0x8] sm:$0xff]
  %v48 = vld [vmem:[%s2 + $0x10] sm:$0xff]
  %v49 = vld [vmem:[%s2 + $0x18] sm:$0xff]
  %v50 = vld [vmem:[%s2 + $0x20] sm:$0xff]
  %v51 = vld [vmem:[%s2 + $0x28] sm:$0xff]
  %v52 = vld [vmem:[%s2 + $0x30] sm:$0xff]
  %v53 = vld [vmem:[%s2 + $0x38] sm:$0xff]
  %v54 = vld [vmem:[%s2 + $0x40] sm:$0xff]
  %v55 = vld [vmem:[%s2 + $0x48] sm:$0xff]
  %v56 = vld [vmem:[%s2 + $0x50] sm:$0xff]
  %v57 = vld [vmem:[%s2 + $0x58] sm:$0xff]
  %v58 = vld [vmem:[%s2 + $0x60] sm:$0xff]
  %v59 = vld [vmem:[%s2 + $0x68] sm:$0xff]
  %v60 = vld [vmem:[%s2 + $0x70] sm:$0xff]
  %v61 = vld [vmem:[%s2 + $0x78] sm:$0xff]
  %v62 = vld [vmem:[%s2 + $0x80] sm:$0xff]
  %v63 = vld [vmem:[%s2 + $0x88] sm:$0xff]
  %v64 = vld [vmem:[%s2 + $0x90] sm:$0xff]
  %v65 = vld [vmem:[%s2 + $0x98] sm:$0xff]
  %v66 = vld [vmem:[%s2 + $0xa0] sm:$0xff]
  %v67 = vld [vmem:[%s2 + $0xa8] sm:$0xff]
  %v68 = vld [vmem:[%s2 + $0xb0] sm:$0xff]
  %v69 = vld [vmem:[%s2 + $0xb8] sm:$0xff]
  %v70 = vld [vmem:[%s2 + $0xc0] sm:$0xff]
  %v71 = vld [vmem:[%s2 + $0xc8] sm:$0xff]
  %v72 = vld [vmem:[%s2 + $0xd0] sm:$0xff]
  %v73 = vld [vmem:[%s2 + $0xd8] sm:$0xff]
  %v74 = vld [vmem:[%s2 + $0xe0] sm:$0xff]
  %v75 = vld [vmem:[%s2 + $0xe8] sm:$0xff]
  %v76 = vld [vmem:[%s2 + $0xf0] sm:$0xff]
  %v77 = vld [vmem:[%s2 + $0xf8] sm:$0xff]
  %v78 = vld [vmem:[%s2 + $0x100] sm:$0xff]
  %v79 = vld [vmem:[%s2 + $0x108] sm:$0xff]
  %v80 = vld [vmem:[%s2 + $0x110] sm:$0xff]
  %v81 = vld [vmem:[%s2 + $0x118] sm:$0xff]
  %v82 = vld [vmem:[%s2 + $0x120] sm:$0xff]
  %v83 = vld [vmem:[%s2 + $0x128] sm:$0xff]
  %v84 = vld [vmem:[%s2 + $0x130] sm:$0xff]
  %v85 = vld [vmem:[%s2 + $0x138] sm:$0xff]
  %v86 = vld [vmem:[%s2 + $0x140] sm:$0xff]
  %v87 = vld [vmem:[%s2 + $0x148] sm:$0xff]
  %v88 = vld [vmem:[%s2 + $0x150] sm:$0xff]
  %v89 = vld [vmem:[%s2 + $0x158] sm:$0xff]
  %v90 = vld [vmem:[%s2 + $0x160] sm:$0xff]
  %v91 = vld [vmem:[%s2 + $0x168] sm:$0xff]
  %v92 = vld [vmem:[%s2 + $0x170] sm:$0xff]
  %v93 = vld [vmem:[%s2 + $0x178] sm:$0xff]
  %v94 = vld [vmem:[%s2 + $0x180] sm:$0xff]
  %v95 = vld [vmem:[%s2 + $0x188] sm:$0xff]
  %v96 = vld [vmem:[%s2 + $0x190] sm:$0xff]
  %v97 = vld [vmem:[%s2 + $0x198] sm:$0xff]
  %v98 = vld [vmem:[%s2 + $0x1a0] sm:$0xff]
  %v99 = vld [vmem:[%s2 + $0x1a8] sm:$0xff]
  %v100 = vld [vmem:[%s2 + $0x1b0] sm:$0xff]
  %v101 = vld [vmem:[%s2 + $0x1b8] sm:$0xff]
  %v102 = vld [vmem:[%s2 + $0x1c0] sm:$0xff]
  %v103 = vld [vmem:[%s2 + $0x1c8] sm:$0xff]
  %v104 = vld [vmem:[%s2 + $0x1d0] sm:$0xff]
  %v105 = vld [vmem:[%s2 + $0x1d8] sm:$0xff]
  %v106 = vld [vmem:[%s2 + $0x1e0] sm:$0xff]
  %v107 = vld [vmem:[%s2 + $0x1e8] sm:$0xff]
  %v108 = vld [vmem:[%s2 + $0x1f0] sm:$0xff]
  %v109 = vld [vmem:[%s2 + $0x1f8] sm:$0xff]
  %v110 = vld [vmem:[%s2 + $0x200] sm:$0xff]
  %v111 = vld [vmem:[%s2 + $0x208] sm:$0xff]
  %v112 = vld [vmem:[%s2 + $0x210] sm:$0xff]
  %v113 = vld [vmem:[%s2 + $0x218] sm:$0xff]
  %v114 = vld [vmem:[%s2 + $0x220] sm:$0xff]
  %v115 = vld [vmem:[%s2 + $0x228] sm:$0xff]
  %v116 = vld [vmem:[%s2 + $0x230] sm:$0xff]
  %v117 = vld [vmem:[%s2 + $0x238] sm:$0xff]
  %v118 = vld [vmem:[%s2 + $0x240] sm:$0xff]
  %v119 = vld [vmem:[%s2 + $0x248] sm:$0xff]
  %v120 = vld [vmem:[%s2 + $0x250] sm:$0xff]
  %v121 = vld [vmem:[%s2 + $0x258] sm:$0xff]
  %v122 = vld [vmem:[%s2 + $0x260] sm:$0xff]
  %v123 = vld [vmem:[%s2 + $0x268] sm:$0xff]
  %v124 = vld [vmem:[%s2 + $0x270] sm:$0xff]
  %v125 = vld [vmem:[%s2 + $0x278] sm:$0xff]
  %v126 = vld [vmem:[%s2 + $0x280] sm:$0xff]
  %v127 = vld [vmem:[%s2 + $0x288] sm:$0xff]
  %v128 = vld [vmem:[%s2 + $0x290] sm:$0xff]
  %v129 = vld [vmem:[%s2 + $0x298] sm:$0xff]
  %v130 = vld [vmem:[%s2 + $0x2a0] sm:$0xff]
  %v131 = vld [vmem:[%s2 + $0x2a8] sm:$0xff]
  %v132 = vld [vmem:[%s2 + $0x2b0] sm:$0xff]
  %v133 = vld [vmem:[%s2 + $0x2b8] sm:$0xff]
  %v134 = vld [vmem:[%s2 + $0x2c0] sm:$0xff]
  %v135 = vld [vmem:[%s2 + $0x2c8] sm:$0xff]
  %v136 = vld [vmem:[%s2 + $0x2d0] sm:$0xff]
  %v137 = vld [vmem:[%s2 + $0x2d8] sm:$0xff]
  %v138 = vld [vmem:[%s2 + $0x2e0] sm:$0xff]
  %v139 = vld [vmem:[%s2 + $0x2e8] sm:$0xff]
  %v140 = vld [vmem:[%s2 + $0x2f0] sm:$0xff]
  %v141 = vld [vmem:[%s2 + $0x2f8] sm:$0xff]
  %v142 = vld [vmem:[%s2 + $0x300] sm:$0xff]
  %v143 = vld [vmem:[%s2 + $0x308] sm:$0xff]
  %v144 = vld [vmem:[%s2 + $0x310] sm:$0xff]
  %v145 = vld [vmem:[%s2 + $0x318] sm:$0xff]
  %v146 = vld [vmem:[%s2 + $0x320] sm:$0xff]
  %v147 = vld [vmem:[%s2 + $0x328] sm:$0xff]
  %v148 = vld [vmem:[%s2 + $0x330] sm:$0xff]
  %v149 = vld [vmem:[%s2 + $0x338] sm:$0xff]
  %v150 = vld [vmem:[%s2 + $0x340] sm:$0xff]
  %v151 = vld [vmem:[%s2 + $0x348] sm:$0xff]
  %v152 = vld [vmem:[%s2 + $0x350] sm:$0xff]
  %v153 = vld [vmem:[%s2 + $0x358] sm:$0xff]
  %v154 = vld [vmem:[%s2 + $0x360] sm:$0xff]
  %v155 = vld [vmem:[%s2 + $0x368] sm:$0xff]
  %v156 = vld [vmem:[%s2 + $0x370] sm:$0xff]
  %v157 = vld [vmem:[%s2 + $0x378] sm:$0xff]
  %v158 = vld [vmem:[%s2 + $0x380] sm:$0xff]
  %v159 = vld [vmem:[%s2 + $0x388] sm:$0xff]
  %v160 = vld [vmem:[%s2 + $0x390] sm:$0xff]
  %v161 = vld [vmem:[%s2 + $0x398] sm:$0xff]
  %v162 = vld [vmem:[%s2 + $0x3a0] sm:$0xff]
  %v163 = vld [vmem:[%s2 + $0x3a8] sm:$0xff]
  %v164 = vld [vmem:[%s2 + $0x3b0] sm:$0xff]
  %v165 = vld [vmem:[%s2 + $0x3b8] sm:$0xff]
  %v166 = vld [vmem:[%s2 + $0x3c0] sm:$0xff]
  %v167 = vld [vmem:[%s2 + $0x3c8] sm:$0xff]
  %v168 = vld [vmem:[%s2 + $0x3d0] sm:$0xff]
  %v169 = vld [vmem:[%s2 + $0x3d8] sm:$0xff]
  %v170 = vld [vmem:[%s2 + $0x3e0] sm:$0xff]
  %v171 = vld [vmem:[%s2 + $0x3e8] sm:$0xff]
  %v172 = vld [vmem:[%s2 + $0x3f0] sm:$0xff]
  %v173 = vld [vmem:[%s2 + $0x3f8] sm:$0xff]
  %v174 = vld [vmem:[%s2 + $0x400] sm:$0xff]
  %v175 = vld [vmem:[%s2 + $0x408] sm:$0xff]
  %v176 = vld [vmem:[%s2 + $0x410] sm:$0xff]
  %v177 = vld [vmem:[%s2 + $0x418] sm:$0xff]
  %v178 = vld [vmem:[%s2 + $0x420] sm:$0xff]
  %v179 = vld [vmem:[%s2 + $0x428] sm:$0xff]
  %v180 = vld [vmem:[%s2 + $0x430] sm:$0xff]
  %v181 = vld [vmem:[%s2 + $0x438] sm:$0xff]
  %v182 = vld [vmem:[%s2 + $0x440] sm:$0xff]
  %v183 = vld [vmem:[%s2 + $0x448] sm:$0xff]
  %v184 = vld [vmem:[%s2 + $0x450] sm:$0xff]
  %v185 = vld [vmem:[%s2 + $0x458] sm:$0xff]
  %v186 = vld [vmem:[%s2 + $0x460] sm:$0xff]
  %v187 = vld [vmem:[%s2 + $0x468] sm:$0xff]
  %v188 = vld [vmem:[%s2 + $0x470] sm:$0xff]
  %v189 = vld [vmem:[%s2 + $0x478] sm:$0xff]
  %v190 = vld [vmem:[%s2 + $0x480] sm:$0xff]
  %v191 = vld [vmem:[%s2 + $0x488] sm:$0xff]
  %v192 = vld [vmem:[%s2 + $0x490] sm:$0xff]
  %v193 = vld [vmem:[%s2 + $0x498] sm:$0xff]
  %v194 = vld [vmem:[%s2 + $0x4a0] sm:$0xff]
  %v195 = vld [vmem:[%s2 + $0x4a8] sm:$0xff]
  %v196 = vld [vmem:[%s2 + $0x4b0] sm:$0xff]
  %v197 = vld [vmem:[%s2 + $0x4b8] sm:$0xff]
  %v198 = vld [vmem:[%s2 + $0x4c0] sm:$0xff]
  %v199 = vld [vmem:[%s2 + $0x4c8] sm:$0xff]
  %v200 = vld [vmem:[%s2 + $0x4d0] sm:$0xff]
  %v201 = vld [vmem:[%s2 + $0x4d8] sm:$0xff]
  %v202 = vld [vmem:[%s2 + $0x4e0] sm:$0xff]
  %v203 = vld [vmem:[%s2 + $0x4e8] sm:$0xff]
  %v204 = vld [vmem:[%s2 + $0x4f0] sm:$0xff]
  %v205 = vld [vmem:[%s2 + $0x4f8] sm:$0xff]
  %v206 = vld [vmem:[%s2 + $0x500] sm:$0xff]
  %v207 = vld [vmem:[%s2 + $0x508] sm:$0xff]
  %v208 = vld [vmem:[%s2 + $0x510] sm:$0xff]
  %v209 = vld [vmem:[%s2 + $0x518] sm:$0xff]
  %v210 = vld [vmem:[%s2 + $0x520] sm:$0xff]
  %v211 = vld [vmem:[%s2 + $0x528] sm:$0xff]
  %v212 = vld [vmem:[%s2 + $0x530] sm:$0xff]
  %v213 = vld [vmem:[%s2 + $0x538] sm:$0xff]
  %v214 = vld [vmem:[%s2 + $0x540] sm:$0xff]
  %v215 = vld [vmem:[%s2 + $0x548] sm:$0xff]
  %v216 = vld [vmem:[%s2 + $0x550] sm:$0xff]
  %v217 = vld [vmem:[%s2 + $0x558] sm:$0xff]
  %v218 = vld [vmem:[%s2 + $0x560] sm:$0xff]
  %v219 = vld [vmem:[%s2 + $0x568] sm:$0xff]
  %v220 = vld [vmem:[%s2 + $0x570] sm:$0xff]
  %v221 = vld [vmem:[%s2 + $0x578] sm:$0xff]
  %v222 = vld [vmem:[%s2 + $0x580] sm:$0xff]
  %v223 = vld [vmem:[%s2 + $0x588] sm:$0xff]
  %v224 = vld [vmem:[%s2 + $0x590] sm:$0xff]
  %v225 = vld [vmem:[%s2 + $0x598] sm:$0xff]
  %v226 = vld [vmem:[%s2 + $0x5a0] sm:$0xff]
  %v227 = vld [vmem:[%s2 + $0x5a8] sm:$0xff]
  %v228 = vld [vmem:[%s2 + $0x5b0] sm:$0xff]
  %v229 = vld [vmem:[%s2 + $0x5b8] sm:$0xff]
  %v230 = vld [vmem:[%s2 + $0x5c0] sm:$0xff]
  %v231 = vld [vmem:[%s2 + $0x5c8] sm:$0xff]
  %v232 = vld [vmem:[%s2 + $0x5d0] sm:$0xff]
  %v233 = vld [vmem:[%s2 + $0x5d8] sm:$0xff]
  %v234 = vld [vmem:[%s2 + $0x5e0] sm:$0xff]
  %v235 = vld [vmem:[%s2 + $0x5e8] sm:$0xff]
  %v236 = vld [vmem:[%s2 + $0x5f0] sm:$0xff]
  %v237 = vld [vmem:[%s2 + $0x5f8] sm:$0xff]
  %v238 = vld [vmem:[%s2 + $0x600] sm:$0xff]
  %v239 = vld [vmem:[%s2 + $0x608] sm:$0xff]
  %v240 = vld [vmem:[%s2 + $0x610] sm:$0xff]
  %v241 = vld [vmem:[%s2 + $0x618] sm:$0xff]
  %v242 = vld [vmem:[%s3] sm:$0xf]
  %v244 = vlaneseq
  %v245 = vshrl.u32 %v244, 7
  %v246 = vsub.s32 0, %v245
  %v247 = vrot.slane %v242, %v246
  %v248 = vlaneseq
  %v249 = vshrl.u32 %v248, 7
  %v250 = vsub.s32 1, %v249
  %v251 = vrot.slane %v242, %v250
  %v252 = vlaneseq
  %v253 = vshrl.u32 %v252, 7
  %v254 = vsub.s32 2, %v253
  %v255 = vrot.slane %v242, %v254
  %v256 = vlaneseq
  %v257 = vshrl.u32 %v256, 7
  %v258 = vsub.s32 3, %v257
  %v259 = vrot.slane %v242, %v258
  %v272 = vunpack.c.l.b16 %v38
  %v273 = vunpack.c.h.b16 %v38
  %v274 = vunpack.c.l.b16 %v39
  %v275 = vunpack.c.h.b16 %v39
  %v276 = vunpack.c.l.b16 %v40
  %v277 = vunpack.c.h.b16 %v40
  %v278 = vunpack.c.l.b16 %v41
  %v279 = vunpack.c.l.b16 %v42
  %v280 = vunpack.c.h.b16 %v42
  %v281 = vunpack.c.l.b16 %v43
  %v282 = vunpack.c.h.b16 %v43
  %v283 = vunpack.c.l.b16 %v44
  %v284 = vunpack.c.h.b16 %v44
  %v285 = vunpack.c.l.b16 %v45
  %v286 = vpack.c.b16 %v279, %v272
  %v287 = vpack.c.b16 %v280, %v273
  %v288 = vpack.c.b16 %v281, %v274
  %v289 = vpack.c.b16 %v282, %v275
  %v290 = vpack.c.b16 %v283, %v276
  %v291 = vpack.c.b16 %v284, %v277
  %v292 = vpack.c.b16 %v285, %v278
  %v495 = vunpack.c.l.b16 %v46
  %v496 = vunpack.c.h.b16 %v46
  %v497 = vunpack.c.l.b16 %v47
  %v498 = vunpack.c.h.b16 %v47
  %v499 = vunpack.c.l.b16 %v48
  %v500 = vunpack.c.h.b16 %v48
  %v501 = vunpack.c.l.b16 %v49
  %v502 = vunpack.c.h.b16 %v49
  %v503 = vunpack.c.l.b16 %v50
  %v504 = vunpack.c.h.b16 %v50
  %v505 = vunpack.c.l.b16 %v51
  %v506 = vunpack.c.h.b16 %v51
  %v507 = vunpack.c.l.b16 %v52
  %v508 = vunpack.c.h.b16 %v52
  %v509 = vunpack.c.l.b16 %v53
  %v510 = vunpack.c.h.b16 %v53
  %v511 = vunpack.c.l.b16 %v54
  %v512 = vunpack.c.h.b16 %v54
  %v513 = vunpack.c.l.b16 %v55
  %v514 = vunpack.c.h.b16 %v55
  %v515 = vunpack.c.l.b16 %v56
  %v516 = vunpack.c.h.b16 %v56
  %v517 = vunpack.c.l.b16 %v57
  %v518 = vunpack.c.h.b16 %v57
  %v519 = vunpack.c.l.b16 %v58
  %v520 = vunpack.c.h.b16 %v58
  %v521 = vunpack.c.l.b16 %v59
  %v522 = vunpack.c.h.b16 %v59
  %v523 = vunpack.c.l.b16 %v60
  %v524 = vunpack.c.h.b16 %v60
  %v525 = vunpack.c.l.b16 %v61
  %v526 = vunpack.c.h.b16 %v61
  %v527 = vunpack.c.l.b16 %v62
  %v528 = vunpack.c.h.b16 %v62
  %v529 = vunpack.c.l.b16 %v63
  %v530 = vunpack.c.h.b16 %v63
  %v531 = vunpack.c.l.b16 %v64
  %v532 = vunpack.c.h.b16 %v64
  %v533 = vunpack.c.l.b16 %v65
  %v534 = vunpack.c.h.b16 %v65
  %v535 = vunpack.c.l.b16 %v66
  %v536 = vunpack.c.h.b16 %v66
  %v537 = vunpack.c.l.b16 %v67
  %v538 = vunpack.c.h.b16 %v67
  %v539 = vunpack.c.l.b16 %v68
  %v540 = vunpack.c.h.b16 %v68
  %v541 = vunpack.c.l.b16 %v69
  %v542 = vunpack.c.h.b16 %v69
  %v543 = vunpack.c.l.b16 %v70
  %v544 = vunpack.c.h.b16 %v70
  %v545 = vunpack.c.l.b16 %v71
  %v546 = vunpack.c.h.b16 %v71
  %v547 = vunpack.c.l.b16 %v72
  %v548 = vunpack.c.h.b16 %v72
  %v549 = vunpack.c.l.b16 %v73
  %v550 = vunpack.c.h.b16 %v73
  %v551 = vunpack.c.l.b16 %v74
  %v552 = vunpack.c.h.b16 %v74
  %v553 = vunpack.c.l.b16 %v75
  %v554 = vunpack.c.h.b16 %v75
  %v555 = vunpack.c.l.b16 %v76
  %v556 = vunpack.c.h.b16 %v76
  %v557 = vunpack.c.l.b16 %v77
  %v558 = vunpack.c.h.b16 %v77
  %v559 = vunpack.c.l.b16 %v78
  %v560 = vunpack.c.h.b16 %v78
  %v561 = vunpack.c.l.b16 %v79
  %v562 = vunpack.c.h.b16 %v79
  %v563 = vunpack.c.l.b16 %v80
  %v564 = vunpack.c.h.b16 %v80
  %v565 = vunpack.c.l.b16 %v81
  %v566 = vunpack.c.h.b16 %v81
  %v567 = vunpack.c.l.b16 %v82
  %v568 = vunpack.c.h.b16 %v82
  %v569 = vunpack.c.l.b16 %v83
  %v570 = vunpack.c.h.b16 %v83
  %v571 = vunpack.c.l.b16 %v84
  %v572 = vunpack.c.h.b16 %v84
  %v573 = vunpack.c.l.b16 %v85
  %v574 = vunpack.c.h.b16 %v85
  %v575 = vunpack.c.l.b16 %v86
  %v576 = vunpack.c.h.b16 %v86
  %v577 = vunpack.c.l.b16 %v87
  %v578 = vunpack.c.h.b16 %v87
  %v579 = vunpack.c.l.b16 %v88
  %v580 = vunpack.c.h.b16 %v88
  %v581 = vunpack.c.l.b16 %v89
  %v582 = vunpack.c.h.b16 %v89
  %v583 = vunpack.c.l.b16 %v90
  %v584 = vunpack.c.h.b16 %v90
  %v585 = vunpack.c.l.b16 %v91
  %v586 = vunpack.c.h.b16 %v91
  %v587 = vunpack.c.l.b16 %v92
  %v588 = vunpack.c.h.b16 %v92
  %v589 = vunpack.c.l.b16 %v93
  %v590 = vunpack.c.h.b16 %v93
  %v591 = vunpack.c.l.b16 %v94
  %v592 = vunpack.c.h.b16 %v94
  %v593 = vunpack.c.l.b16 %v95
  %v594 = vunpack.c.h.b16 %v95
  %v595 = vunpack.c.l.b16 %v96
  %v596 = vunpack.c.h.b16 %v96
  %v597 = vunpack.c.l.b16 %v97
  %v598 = vunpack.c.h.b16 %v97
  %v599 = vunpack.c.l.b16 %v98
  %v600 = vunpack.c.h.b16 %v98
  %v601 = vunpack.c.l.b16 %v99
  %v602 = vunpack.c.h.b16 %v99
  %v603 = vunpack.c.l.b16 %v100
  %v604 = vunpack.c.h.b16 %v100
  %v605 = vunpack.c.l.b16 %v101
  %v606 = vunpack.c.h.b16 %v101
  %v607 = vunpack.c.l.b16 %v102
  %v608 = vunpack.c.h.b16 %v102
  %v609 = vunpack.c.l.b16 %v103
  %v610 = vunpack.c.h.b16 %v103
  %v611 = vunpack.c.l.b16 %v104
  %v612 = vunpack.c.h.b16 %v104
  %v613 = vunpack.c.l.b16 %v105
  %v614 = vunpack.c.h.b16 %v105
  %v615 = vunpack.c.l.b16 %v106
  %v616 = vunpack.c.h.b16 %v106
  %v617 = vunpack.c.l.b16 %v107
  %v618 = vunpack.c.h.b16 %v107
  %v619 = vunpack.c.l.b16 %v108
  %v620 = vunpack.c.h.b16 %v108
  %v621 = vunpack.c.l.b16 %v109
  %v622 = vunpack.c.h.b16 %v109
  %v623 = vunpack.c.l.b16 %v110
  %v624 = vunpack.c.h.b16 %v110
  %v625 = vunpack.c.l.b16 %v111
  %v626 = vunpack.c.h.b16 %v111
  %v627 = vunpack.c.l.b16 %v112
  %v628 = vunpack.c.h.b16 %v112
  %v629 = vunpack.c.l.b16 %v113
  %v630 = vunpack.c.h.b16 %v113
  %v631 = vunpack.c.l.b16 %v114
  %v632 = vunpack.c.h.b16 %v114
  %v633 = vunpack.c.l.b16 %v115
  %v634 = vunpack.c.h.b16 %v115
  %v635 = vunpack.c.l.b16 %v116
  %v636 = vunpack.c.h.b16 %v116
  %v637 = vunpack.c.l.b16 %v117
  %v638 = vunpack.c.h.b16 %v117
  %v639 = vunpack.c.l.b16 %v118
  %v640 = vunpack.c.h.b16 %v118
  %v641 = vunpack.c.l.b16 %v119
  %v642 = vunpack.c.h.b16 %v119
  %v643 = vunpack.c.l.b16 %v120
  %v644 = vunpack.c.h.b16 %v120
  %v645 = vunpack.c.l.b16 %v121
  %v646 = vunpack.c.h.b16 %v121
  %v647 = vunpack.c.l.b16 %v122
  %v648 = vunpack.c.h.b16 %v122
  %v649 = vunpack.c.l.b16 %v123
  %v650 = vunpack.c.h.b16 %v123
  %v651 = vunpack.c.l.b16 %v124
  %v652 = vunpack.c.h.b16 %v124
  %v653 = vunpack.c.l.b16 %v125
  %v654 = vunpack.c.h.b16 %v125
  %v655 = vunpack.c.l.b16 %v126
  %v656 = vunpack.c.h.b16 %v126
  %v657 = vunpack.c.l.b16 %v127
  %v658 = vunpack.c.h.b16 %v127
  %v659 = vunpack.c.l.b16 %v128
  %v660 = vunpack.c.h.b16 %v128
  %v661 = vunpack.c.l.b16 %v129
  %v662 = vunpack.c.h.b16 %v129
  %v663 = vunpack.c.l.b16 %v130
  %v664 = vunpack.c.h.b16 %v130
  %v665 = vunpack.c.l.b16 %v131
  %v666 = vunpack.c.h.b16 %v131
  %v667 = vunpack.c.l.b16 %v132
  %v668 = vunpack.c.h.b16 %v132
  %v669 = vunpack.c.l.b16 %v133
  %v670 = vunpack.c.h.b16 %v133
  %v671 = vunpack.c.l.b16 %v134
  %v672 = vunpack.c.h.b16 %v134
  %v673 = vunpack.c.l.b16 %v135
  %v674 = vunpack.c.h.b16 %v135
  %v675 = vunpack.c.l.b16 %v136
  %v676 = vunpack.c.h.b16 %v136
  %v677 = vunpack.c.l.b16 %v137
  %v678 = vunpack.c.h.b16 %v137
  %v679 = vunpack.c.l.b16 %v138
  %v680 = vunpack.c.h.b16 %v138
  %v681 = vunpack.c.l.b16 %v139
  %v682 = vunpack.c.h.b16 %v139
  %v683 = vunpack.c.l.b16 %v140
  %v684 = vunpack.c.h.b16 %v140
  %v685 = vunpack.c.l.b16 %v141
  %v686 = vunpack.c.h.b16 %v141
  %v687 = vunpack.c.l.b16 %v142
  %v688 = vunpack.c.h.b16 %v142
  %v689 = vunpack.c.l.b16 %v143
  %v690 = vunpack.c.h.b16 %v143
  %v691 = vunpack.c.l.b16 %v144
  %v692 = vunpack.c.h.b16 %v144
  %v693 = vunpack.c.l.b16 %v145
  %v694 = vunpack.c.h.b16 %v145
  %v695 = vunpack.c.l.b16 %v146
  %v696 = vunpack.c.h.b16 %v146
  %v697 = vunpack.c.l.b16 %v147
  %v698 = vunpack.c.h.b16 %v147
  %v699 = vunpack.c.l.b16 %v148
  %v700 = vunpack.c.h.b16 %v148
  %v701 = vunpack.c.l.b16 %v149
  %v702 = vunpack.c.h.b16 %v149
  %v703 = vunpack.c.l.b16 %v150
  %v704 = vunpack.c.h.b16 %v150
  %v705 = vunpack.c.l.b16 %v151
  %v706 = vunpack.c.h.b16 %v151
  %v707 = vunpack.c.l.b16 %v152
  %v708 = vunpack.c.h.b16 %v152
  %v709 = vunpack.c.l.b16 %v153
  %v710 = vunpack.c.h.b16 %v153
  %v711 = vunpack.c.l.b16 %v154
  %v712 = vunpack.c.h.b16 %v154
  %v713 = vunpack.c.l.b16 %v155
  %v714 = vunpack.c.h.b16 %v155
  %v715 = vunpack.c.l.b16 %v156
  %v716 = vunpack.c.h.b16 %v156
  %v717 = vunpack.c.l.b16 %v157
  %v718 = vunpack.c.h.b16 %v157
  %v719 = vunpack.c.l.b16 %v158
  %v720 = vunpack.c.h.b16 %v158
  %v721 = vunpack.c.l.b16 %v159
  %v722 = vunpack.c.h.b16 %v159
  %v723 = vunpack.c.l.b16 %v160
  %v724 = vunpack.c.h.b16 %v160
  %v725 = vunpack.c.l.b16 %v161
  %v726 = vunpack.c.h.b16 %v161
  %v727 = vunpack.c.l.b16 %v162
  %v728 = vunpack.c.h.b16 %v162
  %v729 = vunpack.c.l.b16 %v163
  %v730 = vunpack.c.h.b16 %v163
  %v731 = vunpack.c.l.b16 %v164
  %v732 = vunpack.c.h.b16 %v164
  %v733 = vunpack.c.l.b16 %v165
  %v734 = vunpack.c.h.b16 %v165
  %v735 = vunpack.c.l.b16 %v166
  %v736 = vunpack.c.h.b16 %v166
  %v737 = vunpack.c.l.b16 %v167
  %v738 = vunpack.c.h.b16 %v167
  %v739 = vunpack.c.l.b16 %v168
  %v740 = vunpack.c.h.b16 %v168
  %v741 = vunpack.c.l.b16 %v169
  %v742 = vunpack.c.h.b16 %v169
  %v743 = vunpack.c.l.b16 %v170
  %v744 = vunpack.c.h.b16 %v170
  %v745 = vunpack.c.l.b16 %v171
  %v746 = vunpack.c.h.b16 %v171
  %v747 = vunpack.c.l.b16 %v172
  %v748 = vunpack.c.h.b16 %v172
  %v749 = vunpack.c.l.b16 %v173
  %v750 = vunpack.c.h.b16 %v173
  %v751 = vunpack.c.l.b16 %v174
  %v752 = vunpack.c.h.b16 %v174
  %v753 = vunpack.c.l.b16 %v175
  %v754 = vunpack.c.h.b16 %v175
  %v755 = vunpack.c.l.b16 %v176
  %v756 = vunpack.c.h.b16 %v176
  %v757 = vunpack.c.l.b16 %v177
  %v758 = vunpack.c.h.b16 %v177
  %v759 = vunpack.c.l.b16 %v178
  %v760 = vunpack.c.h.b16 %v178
  %v761 = vunpack.c.l.b16 %v179
  %v762 = vunpack.c.h.b16 %v179
  %v763 = vunpack.c.l.b16 %v180
  %v764 = vunpack.c.h.b16 %v180
  %v765 = vunpack.c.l.b16 %v181
  %v766 = vunpack.c.h.b16 %v181
  %v767 = vunpack.c.l.b16 %v182
  %v768 = vunpack.c.h.b16 %v182
  %v769 = vunpack.c.l.b16 %v183
  %v770 = vunpack.c.h.b16 %v183
  %v771 = vunpack.c.l.b16 %v184
  %v772 = vunpack.c.h.b16 %v184
  %v773 = vunpack.c.l.b16 %v185
  %v774 = vunpack.c.h.b16 %v185
  %v775 = vunpack.c.l.b16 %v186
  %v776 = vunpack.c.h.b16 %v186
  %v777 = vunpack.c.l.b16 %v187
  %v778 = vunpack.c.h.b16 %v187
  %v779 = vunpack.c.l.b16 %v188
  %v780 = vunpack.c.h.b16 %v188
  %v781 = vunpack.c.l.b16 %v189
  %v782 = vunpack.c.h.b16 %v189
  %v783 = vunpack.c.l.b16 %v190
  %v784 = vunpack.c.h.b16 %v190
  %v785 = vunpack.c.l.b16 %v191
  %v786 = vunpack.c.h.b16 %v191
  %v787 = vunpack.c.l.b16 %v192
  %v788 = vunpack.c.h.b16 %v192
  %v789 = vunpack.c.l.b16 %v193
  %v790 = vunpack.c.h.b16 %v193
  %v791 = vunpack.c.l.b16 %v194
  %v792 = vunpack.c.h.b16 %v194
  %v793 = vunpack.c.l.b16 %v195
  %v794 = vunpack.c.h.b16 %v195
  %v795 = vunpack.c.l.b16 %v196
  %v796 = vunpack.c.h.b16 %v196
  %v797 = vunpack.c.l.b16 %v197
  %v798 = vunpack.c.h.b16 %v197
  %v799 = vunpack.c.l.b16 %v198
  %v800 = vunpack.c.h.b16 %v198
  %v801 = vunpack.c.l.b16 %v199
  %v802 = vunpack.c.h.b16 %v199
  %v803 = vunpack.c.l.b16 %v200
  %v804 = vunpack.c.h.b16 %v200
  %v805 = vunpack.c.l.b16 %v201
  %v806 = vunpack.c.h.b16 %v201
  %v807 = vunpack.c.l.b16 %v202
  %v808 = vunpack.c.h.b16 %v202
  %v809 = vunpack.c.l.b16 %v203
  %v810 = vunpack.c.h.b16 %v203
  %v811 = vunpack.c.l.b16 %v204
  %v812 = vunpack.c.h.b16 %v204
  %v813 = vunpack.c.l.b16 %v205
  %v814 = vunpack.c.h.b16 %v205
  %v815 = vunpack.c.l.b16 %v206
  %v816 = vunpack.c.h.b16 %v206
  %v817 = vunpack.c.l.b16 %v207
  %v818 = vunpack.c.h.b16 %v207
  %v819 = vunpack.c.l.b16 %v208
  %v820 = vunpack.c.h.b16 %v208
  %v821 = vunpack.c.l.b16 %v209
  %v822 = vunpack.c.h.b16 %v209
  %v823 = vunpack.c.l.b16 %v210
  %v824 = vunpack.c.h.b16 %v210
  %v825 = vunpack.c.l.b16 %v211
  %v826 = vunpack.c.h.b16 %v211
  %v827 = vunpack.c.l.b16 %v212
  %v828 = vunpack.c.h.b16 %v212
  %v829 = vunpack.c.l.b16 %v213
  %v830 = vunpack.c.h.b16 %v213
  %v831 = vunpack.c.l.b16 %v214
  %v832 = vunpack.c.h.b16 %v214
  %v833 = vunpack.c.l.b16 %v215
  %v834 = vunpack.c.h.b16 %v215
  %v835 = vunpack.c.l.b16 %v216
  %v836 = vunpack.c.h.b16 %v216
  %v837 = vunpack.c.l.b16 %v217
  %v838 = vunpack.c.h.b16 %v217
  %v839 = vunpack.c.l.b16 %v218
  %v840 = vunpack.c.h.b16 %v218
  %v841 = vunpack.c.l.b16 %v219
  %v842 = vunpack.c.h.b16 %v219
  %v843 = vunpack.c.l.b16 %v220
  %v844 = vunpack.c.h.b16 %v220
  %v845 = vunpack.c.l.b16 %v221
  %v846 = vunpack.c.h.b16 %v221
  %v847 = vunpack.c.l.b16 %v222
  %v848 = vunpack.c.h.b16 %v222
  %v849 = vunpack.c.l.b16 %v223
  %v850 = vunpack.c.h.b16 %v223
  %v851 = vunpack.c.l.b16 %v224
  %v852 = vunpack.c.h.b16 %v224
  %v853 = vunpack.c.l.b16 %v225
  %v854 = vunpack.c.h.b16 %v225
  %v855 = vunpack.c.l.b16 %v226
  %v856 = vunpack.c.h.b16 %v226
  %v857 = vunpack.c.l.b16 %v227
  %v858 = vunpack.c.h.b16 %v227
  %v859 = vunpack.c.l.b16 %v228
  %v860 = vunpack.c.h.b16 %v228
  %v861 = vunpack.c.l.b16 %v229
  %v862 = vunpack.c.h.b16 %v229
  %v863 = vunpack.c.l.b16 %v230
  %v864 = vunpack.c.h.b16 %v230
  %v865 = vunpack.c.l.b16 %v231
  %v866 = vunpack.c.h.b16 %v231
  %v867 = vunpack.c.l.b16 %v232
  %v868 = vunpack.c.h.b16 %v232
  %v869 = vunpack.c.l.b16 %v233
  %v870 = vunpack.c.h.b16 %v233
  %v871 = vunpack.c.l.b16 %v234
  %v872 = vunpack.c.h.b16 %v234
  %v873 = vunpack.c.l.b16 %v235
  %v874 = vunpack.c.h.b16 %v235
  %v875 = vunpack.c.l.b16 %v236
  %v876 = vunpack.c.h.b16 %v236
  %v877 = vunpack.c.l.b16 %v237
  %v878 = vunpack.c.h.b16 %v237
  %v879 = vunpack.c.l.b16 %v238
  %v880 = vunpack.c.h.b16 %v238
  %v881 = vunpack.c.l.b16 %v239
  %v882 = vunpack.c.h.b16 %v239
  %v883 = vunpack.c.l.b16 %v240
  %v884 = vunpack.c.h.b16 %v240
  %v885 = vunpack.c.l.b16 %v241
  %v886 = vunpack.c.h.b16 %v241
  %v887 = vpack.c.b16 %v499, %v495
  %v888 = vpack.c.b16 %v500, %v496
  %v889 = vpack.c.b16 %v501, %v497
  %v890 = vpack.c.b16 %v502, %v498
  %v891 = vpack.c.b16 %v507, %v503
  %v892 = vpack.c.b16 %v508, %v504
  %v893 = vpack.c.b16 %v509, %v505
  %v894 = vpack.c.b16 %v510, %v506
  %v895 = vpack.c.b16 %v515, %v511
  %v896 = vpack.c.b16 %v516, %v512
  %v897 = vpack.c.b16 %v517, %v513
  %v898 = vpack.c.b16 %v518, %v514
  %v899 = vpack.c.b16 %v523, %v519
  %v900 = vpack.c.b16 %v524, %v520
  %v901 = vpack.c.b16 %v525, %v521
  %v902 = vpack.c.b16 %v526, %v522
  %v903 = vpack.c.b16 %v531, %v527
  %v904 = vpack.c.b16 %v532, %v528
  %v905 = vpack.c.b16 %v533, %v529
  %v906 = vpack.c.b16 %v534, %v530
  %v907 = vpack.c.b16 %v539, %v535
  %v908 = vpack.c.b16 %v540, %v536
  %v909 = vpack.c.b16 %v541, %v537
  %v910 = vpack.c.b16 %v542, %v538
  %v911 = vpack.c.b16 %v547, %v543
  %v912 = vpack.c.b16 %v548, %v544
  %v913 = vpack.c.b16 %v549, %v545
  %v914 = vpack.c.b16 %v550, %v546
  %v915 = vpack.c.b16 %v555, %v551
  %v916 = vpack.c.b16 %v556, %v552
  %v917 = vpack.c.b16 %v557, %v553
  %v918 = vpack.c.b16 %v558, %v554
  %v919 = vpack.c.b16 %v563, %v559
  %v920 = vpack.c.b16 %v564, %v560
  %v921 = vpack.c.b16 %v565, %v561
  %v922 = vpack.c.b16 %v566, %v562
  %v923 = vpack.c.b16 %v571, %v567
  %v924 = vpack.c.b16 %v572, %v568
  %v925 = vpack.c.b16 %v573, %v569
  %v926 = vpack.c.b16 %v574, %v570
  %v927 = vpack.c.b16 %v579, %v575
  %v928 = vpack.c.b16 %v580, %v576
  %v929 = vpack.c.b16 %v581, %v577
  %v930 = vpack.c.b16 %v582, %v578
  %v931 = vpack.c.b16 %v587, %v583
  %v932 = vpack.c.b16 %v588, %v584
  %v933 = vpack.c.b16 %v589, %v585
  %v934 = vpack.c.b16 %v590, %v586
  %v935 = vpack.c.b16 %v595, %v591
  %v936 = vpack.c.b16 %v596, %v592
  %v937 = vpack.c.b16 %v597, %v593
  %v938 = vpack.c.b16 %v598, %v594
  %v939 = vpack.c.b16 %v603, %v599
  %v940 = vpack.c.b16 %v604, %v600
  %v941 = vpack.c.b16 %v605, %v601
  %v942 = vpack.c.b16 %v606, %v602
  %v943 = vpack.c.b16 %v611, %v607
  %v944 = vpack.c.b16 %v612, %v608
  %v945 = vpack.c.b16 %v613, %v609
  %v946 = vpack.c.b16 %v614, %v610
  %v947 = vpack.c.b16 %v619, %v615
  %v948 = vpack.c.b16 %v620, %v616
  %v949 = vpack.c.b16 %v621, %v617
  %v950 = vpack.c.b16 %v622, %v618
  %v951 = vpack.c.b16 %v627, %v623
  %v952 = vpack.c.b16 %v628, %v624
  %v953 = vpack.c.b16 %v629, %v625
  %v954 = vpack.c.b16 %v630, %v626
  %v955 = vpack.c.b16 %v635, %v631
  %v956 = vpack.c.b16 %v636, %v632
  %v957 = vpack.c.b16 %v637, %v633
  %v958 = vpack.c.b16 %v638, %v634
  %v959 = vpack.c.b16 %v643, %v639
  %v960 = vpack.c.b16 %v644, %v640
  %v961 = vpack.c.b16 %v645, %v641
  %v962 = vpack.c.b16 %v646, %v642
  %v963 = vpack.c.b16 %v651, %v647
  %v964 = vpack.c.b16 %v652, %v648
  %v965 = vpack.c.b16 %v653, %v649
  %v966 = vpack.c.b16 %v654, %v650
  %v967 = vpack.c.b16 %v659, %v655
  %v968 = vpack.c.b16 %v660, %v656
  %v969 = vpack.c.b16 %v661, %v657
  %v970 = vpack.c.b16 %v662, %v658
  %v971 = vpack.c.b16 %v667, %v663
  %v972 = vpack.c.b16 %v668, %v664
  %v973 = vpack.c.b16 %v669, %v665
  %v974 = vpack.c.b16 %v670, %v666
  %v975 = vpack.c.b16 %v675, %v671
  %v976 = vpack.c.b16 %v676, %v672
  %v977 = vpack.c.b16 %v677, %v673
  %v978 = vpack.c.b16 %v678, %v674
  %v979 = vpack.c.b16 %v683, %v679
  %v980 = vpack.c.b16 %v684, %v680
  %v981 = vpack.c.b16 %v685, %v681
  %v982 = vpack.c.b16 %v686, %v682
  %v983 = vpack.c.b16 %v691, %v687
  %v984 = vpack.c.b16 %v692, %v688
  %v985 = vpack.c.b16 %v693, %v689
  %v986 = vpack.c.b16 %v694, %v690
  %v987 = vpack.c.b16 %v699, %v695
  %v988 = vpack.c.b16 %v700, %v696
  %v989 = vpack.c.b16 %v701, %v697
  %v990 = vpack.c.b16 %v702, %v698
  %v991 = vpack.c.b16 %v707, %v703
  %v992 = vpack.c.b16 %v708, %v704
  %v993 = vpack.c.b16 %v709, %v705
  %v994 = vpack.c.b16 %v710, %v706
  %v995 = vpack.c.b16 %v715, %v711
  %v996 = vpack.c.b16 %v716, %v712
  %v997 = vpack.c.b16 %v717, %v713
  %v998 = vpack.c.b16 %v718, %v714
  %v999 = vpack.c.b16 %v723, %v719
  %v1000 = vpack.c.b16 %v724, %v720
  %v1001 = vpack.c.b16 %v725, %v721
  %v1002 = vpack.c.b16 %v726, %v722
  %v1003 = vpack.c.b16 %v731, %v727
  %v1004 = vpack.c.b16 %v732, %v728
  %v1005 = vpack.c.b16 %v733, %v729
  %v1006 = vpack.c.b16 %v734, %v730
  %v1007 = vpack.c.b16 %v739, %v735
  %v1008 = vpack.c.b16 %v740, %v736
  %v1009 = vpack.c.b16 %v741, %v737
  %v1010 = vpack.c.b16 %v742, %v738
  %v1011 = vpack.c.b16 %v747, %v743
  %v1012 = vpack.c.b16 %v748, %v744
  %v1013 = vpack.c.b16 %v749, %v745
  %v1014 = vpack.c.b16 %v750, %v746
  %v1015 = vpack.c.b16 %v755, %v751
  %v1016 = vpack.c.b16 %v756, %v752
  %v1017 = vpack.c.b16 %v757, %v753
  %v1018 = vpack.c.b16 %v758, %v754
  %v1019 = vpack.c.b16 %v763, %v759
  %v1020 = vpack.c.b16 %v764, %v760
  %v1021 = vpack.c.b16 %v765, %v761
  %v1022 = vpack.c.b16 %v766, %v762
  %v1023 = vpack.c.b16 %v771, %v767
  %v1024 = vpack.c.b16 %v772, %v768
  %v1025 = vpack.c.b16 %v773, %v769
  %v1026 = vpack.c.b16 %v774, %v770
  %v1027 = vpack.c.b16 %v779, %v775
  %v1028 = vpack.c.b16 %v780, %v776
  %v1029 = vpack.c.b16 %v781, %v777
  %v1030 = vpack.c.b16 %v782, %v778
  %v1031 = vpack.c.b16 %v787, %v783
  %v1032 = vpack.c.b16 %v788, %v784
  %v1033 = vpack.c.b16 %v789, %v785
  %v1034 = vpack.c.b16 %v790, %v786
  %v1035 = vpack.c.b16 %v795, %v791
  %v1036 = vpack.c.b16 %v796, %v792
  %v1037 = vpack.c.b16 %v797, %v793
  %v1038 = vpack.c.b16 %v798, %v794
  %v1039 = vpack.c.b16 %v803, %v799
  %v1040 = vpack.c.b16 %v804, %v800
  %v1041 = vpack.c.b16 %v805, %v801
  %v1042 = vpack.c.b16 %v806, %v802
  %v1043 = vpack.c.b16 %v811, %v807
  %v1044 = vpack.c.b16 %v812, %v808
  %v1045 = vpack.c.b16 %v813, %v809
  %v1046 = vpack.c.b16 %v814, %v810
  %v1047 = vpack.c.b16 %v819, %v815
  %v1048 = vpack.c.b16 %v820, %v816
  %v1049 = vpack.c.b16 %v821, %v817
  %v1050 = vpack.c.b16 %v822, %v818
  %v1051 = vpack.c.b16 %v827, %v823
  %v1052 = vpack.c.b16 %v828, %v824
  %v1053 = vpack.c.b16 %v829, %v825
  %v1054 = vpack.c.b16 %v830, %v826
  %v1055 = vpack.c.b16 %v835, %v831
  %v1056 = vpack.c.b16 %v836, %v832
  %v1057 = vpack.c.b16 %v837, %v833
  %v1058 = vpack.c.b16 %v838, %v834
  %v1059 = vpack.c.b16 %v843, %v839
  %v1060 = vpack.c.b16 %v844, %v840
  %v1061 = vpack.c.b16 %v845, %v841
  %v1062 = vpack.c.b16 %v846, %v842
  %v1063 = vpack.c.b16 %v851, %v847
  %v1064 = vpack.c.b16 %v852, %v848
  %v1065 = vpack.c.b16 %v853, %v849
  %v1066 = vpack.c.b16 %v854, %v850
  %v1067 = vpack.c.b16 %v859, %v855
  %v1068 = vpack.c.b16 %v860, %v856
  %v1069 = vpack.c.b16 %v861, %v857
  %v1070 = vpack.c.b16 %v862, %v858
  %v1071 = vpack.c.b16 %v867, %v863
  %v1072 = vpack.c.b16 %v868, %v864
  %v1073 = vpack.c.b16 %v869, %v865
  %v1074 = vpack.c.b16 %v870, %v866
  %v1075 = vpack.c.b16 %v875, %v871
  %v1076 = vpack.c.b16 %v876, %v872
  %v1077 = vpack.c.b16 %v877, %v873
  %v1078 = vpack.c.b16 %v878, %v874
  %v1079 = vpack.c.b16 %v883, %v879
  %v1080 = vpack.c.b16 %v884, %v880
  %v1081 = vpack.c.b16 %v885, %v881
  %v1082 = vpack.c.b16 %v886, %v882
  %vm1279 = vcmask 130048
  %v1281 = vsel %vm1279, %v292, 0
  %1283 = vmatprep.subr.bf16.mxu0 %v916
  %1284 = vmatpush1.bf16.msra.mxu0 %v915
  %1285 = vmatprep.subr.bf16.mxu0 %v912
  %1286 = vmatpush1.bf16.msra.mxu0 %v911
  %1287 = vmatprep.subr.bf16.mxu0 %v908
  %1288 = vmatpush1.bf16.msra.mxu0 %v907
  %1289 = vmatprep.subr.bf16.mxu0 %v904
  %1290 = vmatpush1.bf16.msra.mxu0 %v903
  %1291 = vmatprep.subr.bf16.mxu0 %v900
  %1292 = vmatpush1.bf16.msra.mxu0 %v899
  %1293 = vmatprep.subr.bf16.mxu0 %v896
  %1294 = vmatpush1.bf16.msra.mxu0 %v895
  %1295 = vmatprep.subr.bf16.mxu0 %v892
  %1296 = vmatpush1.bf16.msra.mxu0 %v891
  %1297 = vmatprep.subr.bf16.mxu0 %v888
  %1298 = vmatpush1.bf16.msra.mxu0 %v887
  %1299 = vmatprep.subr.bf16.mxu0 %v948
  %1300 = vmatpush2.bf16.msra.mxu0 %v947
  %1301 = vmatprep.subr.bf16.mxu0 %v944
  %1302 = vmatpush2.bf16.msra.mxu0 %v943
  %1303 = vmatprep.subr.bf16.mxu0 %v940
  %1304 = vmatpush2.bf16.msra.mxu0 %v939
  %1305 = vmatprep.subr.bf16.mxu0 %v936
  %1306 = vmatpush2.bf16.msra.mxu0 %v935
  %1307 = vmatprep.subr.bf16.mxu0 %v932
  %1308 = vmatpush2.bf16.msra.mxu0 %v931
  %1309 = vmatprep.subr.bf16.mxu0 %v928
  %1310 = vmatpush2.bf16.msra.mxu0 %v927
  %1311 = vmatprep.subr.bf16.mxu0 %v924
  %1312 = vmatpush2.bf16.msra.mxu0 %v923
  %1313 = vmatprep.subr.bf16.mxu0 %v920
  %1314 = vmatpush2.bf16.msra.mxu0 %v919
  %1315 = vmatprep.mubr.bf16.mxu0 %v287
  %1316 = vmatmul.mubr.bf16.gmra.mxu0 %v286
  %v1317 = vpop.f32.mrf.mxu0
  %v1318 = vadd.f32 %v247, %v1317
  %v1319 = vpop.f32.mrf.mxu0
  %v1320 = vadd.f32 %v251, %v1319
  %v1321 = vpop.f32.mrf.mxu0
  %v1322 = vadd.f32 %v247, %v1321
  %v1323 = vpop.f32.mrf.mxu0
  %v1324 = vadd.f32 %v251, %v1323
  %1325 = vdwg.mxu0
  %1326 = vmatprep.subr.bf16.mxu0 %v980
  %1327 = vmatpush1.bf16.msra.mxu0 %v979
  %1328 = vmatprep.subr.bf16.mxu0 %v976
  %1329 = vmatpush1.bf16.msra.mxu0 %v975
  %1330 = vmatprep.subr.bf16.mxu0 %v972
  %1331 = vmatpush1.bf16.msra.mxu0 %v971
  %1332 = vmatprep.subr.bf16.mxu0 %v968
  %1333 = vmatpush1.bf16.msra.mxu0 %v967
  %1334 = vmatprep.subr.bf16.mxu0 %v964
  %1335 = vmatpush1.bf16.msra.mxu0 %v963
  %1336 = vmatprep.subr.bf16.mxu0 %v960
  %1337 = vmatpush1.bf16.msra.mxu0 %v959
  %1338 = vmatprep.subr.bf16.mxu0 %v956
  %1339 = vmatpush1.bf16.msra.mxu0 %v955
  %1340 = vmatprep.subr.bf16.mxu0 %v952
  %1341 = vmatpush1.bf16.msra.mxu0 %v951
  %1342 = vmatprep.subr.bf16.mxu0 %v1012
  %1343 = vmatpush2.bf16.msra.mxu0 %v1011
  %1344 = vmatprep.subr.bf16.mxu0 %v1008
  %1345 = vmatpush2.bf16.msra.mxu0 %v1007
  %1346 = vmatprep.subr.bf16.mxu0 %v1004
  %1347 = vmatpush2.bf16.msra.mxu0 %v1003
  %1348 = vmatprep.subr.bf16.mxu0 %v1000
  %1349 = vmatpush2.bf16.msra.mxu0 %v999
  %1350 = vmatprep.subr.bf16.mxu0 %v996
  %1351 = vmatpush2.bf16.msra.mxu0 %v995
  %1352 = vmatprep.subr.bf16.mxu0 %v992
  %1353 = vmatpush2.bf16.msra.mxu0 %v991
  %1354 = vmatprep.subr.bf16.mxu0 %v988
  %1355 = vmatpush2.bf16.msra.mxu0 %v987
  %1356 = vmatprep.subr.bf16.mxu0 %v984
  %1357 = vmatpush2.bf16.msra.mxu0 %v983
  %1358 = vmatprep.mubr.bf16.mxu0 %v289
  %1359 = vmatmul.mubr.bf16.gmra.mxu0 %v288
  %v1360 = vpop.f32.mrf.mxu0
  %v1361 = vadd.f32 %v1318, %v1360
  %v1362 = vpop.f32.mrf.mxu0
  %v1363 = vadd.f32 %v1320, %v1362
  %v1364 = vpop.f32.mrf.mxu0
  %v1365 = vadd.f32 %v1322, %v1364
  %v1366 = vpop.f32.mrf.mxu0
  %v1367 = vadd.f32 %v1324, %v1366
  %1368 = vdwg.mxu0
  %1369 = vmatprep.subr.bf16.mxu0 %v1044
  %1370 = vmatpush1.bf16.msra.mxu0 %v1043
  %1371 = vmatprep.subr.bf16.mxu0 %v1040
  %1372 = vmatpush1.bf16.msra.mxu0 %v1039
  %1373 = vmatprep.subr.bf16.mxu0 %v1036
  %1374 = vmatpush1.bf16.msra.mxu0 %v1035
  %1375 = vmatprep.subr.bf16.mxu0 %v1032
  %1376 = vmatpush1.bf16.msra.mxu0 %v1031
  %1377 = vmatprep.subr.bf16.mxu0 %v1028
  %1378 = vmatpush1.bf16.msra.mxu0 %v1027
  %1379 = vmatprep.subr.bf16.mxu0 %v1024
  %1380 = vmatpush1.bf16.msra.mxu0 %v1023
  %1381 = vmatprep.subr.bf16.mxu0 %v1020
  %1382 = vmatpush1.bf16.msra.mxu0 %v1019
  %1383 = vmatprep.subr.bf16.mxu0 %v1016
  %1384 = vmatpush1.bf16.msra.mxu0 %v1015
  %1385 = vmatprep.subr.bf16.mxu0 %v1076
  %1386 = vmatpush2.bf16.msra.mxu0 %v1075
  %1387 = vmatprep.subr.bf16.mxu0 %v1072
  %1388 = vmatpush2.bf16.msra.mxu0 %v1071
  %1389 = vmatprep.subr.bf16.mxu0 %v1068
  %1390 = vmatpush2.bf16.msra.mxu0 %v1067
  %1391 = vmatprep.subr.bf16.mxu0 %v1064
  %1392 = vmatpush2.bf16.msra.mxu0 %v1063
  %1393 = vmatprep.subr.bf16.mxu0 %v1060
  %1394 = vmatpush2.bf16.msra.mxu0 %v1059
  %1395 = vmatprep.subr.bf16.mxu0 %v1056
  %1396 = vmatpush2.bf16.msra.mxu0 %v1055
  %1397 = vmatprep.subr.bf16.mxu0 %v1052
  %1398 = vmatpush2.bf16.msra.mxu0 %v1051
  %1399 = vmatprep.subr.bf16.mxu0 %v1048
  %1400 = vmatpush2.bf16.msra.mxu0 %v1047
  %1401 = vmatprep.mubr.bf16.mxu0 %v291
  %1402 = vmatmul.mubr.bf16.gmra.mxu0 %v290
  %v1403 = vpop.f32.mrf.mxu0
  %v1404 = vadd.f32 %v1361, %v1403
  %v1405 = vpop.f32.mrf.mxu0
  %v1406 = vadd.f32 %v1363, %v1405
  %v1407 = vpop.f32.mrf.mxu0
  %v1408 = vadd.f32 %v1365, %v1407
  %v1409 = vpop.f32.mrf.mxu0
  %v1410 = vadd.f32 %v1367, %v1409
  %1411 = vdwg.mxu0
  %1412 = vmatprep.subr.bf16.mxu0 0
  %1413 = vmatpush1.bf16.msra.mxu0 0
  %1414 = vmatprep.subr.bf16.mxu0 0
  %1415 = vmatpush1.bf16.msra.mxu0 0
  %1416 = vmatprep.subr.bf16.mxu0 0
  %1417 = vmatpush1.bf16.msra.mxu0 0
  %1418 = vmatprep.subr.bf16.mxu0 0
  %1419 = vmatpush1.bf16.msra.mxu0 0
  %1420 = vmatprep.subr.bf16.mxu0 0
  %1421 = vmatpush1.bf16.msra.mxu0 0
  %1422 = vmatprep.subr.bf16.mxu0 0
  %1423 = vmatpush1.bf16.msra.mxu0 0
  %1424 = vmatprep.subr.bf16.mxu0 0
  %1425 = vmatpush1.bf16.msra.mxu0 0
  %1426 = vmatprep.subr.bf16.mxu0 %v1080
  %1427 = vmatpush1.bf16.msra.mxu0 %v1079
  %1428 = vmatprep.subr.bf16.mxu0 0
  %1429 = vmatpush2.bf16.msra.mxu0 0
  %1430 = vmatprep.subr.bf16.mxu0 0
  %1431 = vmatpush2.bf16.msra.mxu0 0
  %1432 = vmatprep.subr.bf16.mxu0 0
  %1433 = vmatpush2.bf16.msra.mxu0 0
  %1434 = vmatprep.subr.bf16.mxu0 0
  %1435 = vmatpush2.bf16.msra.mxu0 0
  %1436 = vmatprep.subr.bf16.mxu0 0
  %1437 = vmatpush2.bf16.msra.mxu0 0
  %1438 = vmatprep.subr.bf16.mxu0 0
  %1439 = vmatpush2.bf16.msra.mxu0 0
  %1440 = vmatprep.subr.bf16.mxu0 0
  %1441 = vmatpush2.bf16.msra.mxu0 0
  %1442 = vmatprep.subr.bf16.mxu0 0
  %1443 = vmatpush2.bf16.msra.mxu0 0
  %1444 = vmatprep.mubr.bf16.mxu0 0
  %1445 = vmatmul.mubr.bf16.gmra.mxu0 %v1281
  %v1446 = vpop.f32.mrf.mxu0
  %v1447 = vadd.f32 %v1404, %v1446
  %v1448 = vpop.f32.mrf.mxu0
  %v1449 = vadd.f32 %v1406, %v1448
  %v1450 = vpop.f32.mrf.mxu0
  %v1451 = vadd.f32 %v1408, %v1450
  %v1452 = vpop.f32.mrf.mxu0
  %v1453 = vadd.f32 %v1410, %v1452
  %1454 = vdwg.mxu0
  %1455 = vmatprep.subr.bf16.mxu0 %v918
  %1456 = vmatpush1.bf16.msra.mxu0 %v917
  %1457 = vmatprep.subr.bf16.mxu0 %v914
  %1458 = vmatpush1.bf16.msra.mxu0 %v913
  %1459 = vmatprep.subr.bf16.mxu0 %v910
  %1460 = vmatpush1.bf16.msra.mxu0 %v909
  %1461 = vmatprep.subr.bf16.mxu0 %v906
  %1462 = vmatpush1.bf16.msra.mxu0 %v905
  %1463 = vmatprep.subr.bf16.mxu0 %v902
  %1464 = vmatpush1.bf16.msra.mxu0 %v901
  %1465 = vmatprep.subr.bf16.mxu0 %v898
  %1466 = vmatpush1.bf16.msra.mxu0 %v897
  %1467 = vmatprep.subr.bf16.mxu0 %v894
  %1468 = vmatpush1.bf16.msra.mxu0 %v893
  %1469 = vmatprep.subr.bf16.mxu0 %v890
  %1470 = vmatpush1.bf16.msra.mxu0 %v889
  %1471 = vmatprep.subr.bf16.mxu0 %v950
  %1472 = vmatpush2.bf16.msra.mxu0 %v949
  %1473 = vmatprep.subr.bf16.mxu0 %v946
  %1474 = vmatpush2.bf16.msra.mxu0 %v945
  %1475 = vmatprep.subr.bf16.mxu0 %v942
  %1476 = vmatpush2.bf16.msra.mxu0 %v941
  %1477 = vmatprep.subr.bf16.mxu0 %v938
  %1478 = vmatpush2.bf16.msra.mxu0 %v937
  %1479 = vmatprep.subr.bf16.mxu0 %v934
  %1480 = vmatpush2.bf16.msra.mxu0 %v933
  %1481 = vmatprep.subr.bf16.mxu0 %v930
  %1482 = vmatpush2.bf16.msra.mxu0 %v929
  %1483 = vmatprep.subr.bf16.mxu0 %v926
  %1484 = vmatpush2.bf16.msra.mxu0 %v925
  %1485 = vmatprep.subr.bf16.mxu0 %v922
  %1486 = vmatpush2.bf16.msra.mxu0 %v921
  %1487 = vmatprep.mubr.bf16.mxu0 %v287
  %1488 = vmatmul.mubr.bf16.gmra.mxu0 %v286
  %v1489 = vpop.f32.mrf.mxu0
  %v1490 = vadd.f32 %v255, %v1489
  %v1491 = vpop.f32.mrf.mxu0
  %v1492 = vadd.f32 %v259, %v1491
  %v1493 = vpop.f32.mrf.mxu0
  %v1494 = vadd.f32 %v255, %v1493
  %v1495 = vpop.f32.mrf.mxu0
  %v1496 = vadd.f32 %v259, %v1495
  %1497 = vdwg.mxu0
  %1498 = vmatprep.subr.bf16.mxu0 %v982
  %1499 = vmatpush1.bf16.msra.mxu0 %v981
  %1500 = vmatprep.subr.bf16.mxu0 %v978
  %1501 = vmatpush1.bf16.msra.mxu0 %v977
  %1502 = vmatprep.subr.bf16.mxu0 %v974
  %1503 = vmatpush1.bf16.msra.mxu0 %v973
  %1504 = vmatprep.subr.bf16.mxu0 %v970
  %1505 = vmatpush1.bf16.msra.mxu0 %v969
  %1506 = vmatprep.subr.bf16.mxu0 %v966
  %1507 = vmatpush1.bf16.msra.mxu0 %v965
  %1508 = vmatprep.subr.bf16.mxu0 %v962
  %1509 = vmatpush1.bf16.msra.mxu0 %v961
  %1510 = vmatprep.subr.bf16.mxu0 %v958
  %1511 = vmatpush1.bf16.msra.mxu0 %v957
  %1512 = vmatprep.subr.bf16.mxu0 %v954
  %1513 = vmatpush1.bf16.msra.mxu0 %v953
  %1514 = vmatprep.subr.bf16.mxu0 %v1014
  %1515 = vmatpush2.bf16.msra.mxu0 %v1013
  %1516 = vmatprep.subr.bf16.mxu0 %v1010
  %1517 = vmatpush2.bf16.msra.mxu0 %v1009
  %1518 = vmatprep.subr.bf16.mxu0 %v1006
  %1519 = vmatpush2.bf16.msra.mxu0 %v1005
  %1520 = vmatprep.subr.bf16.mxu0 %v1002
  %1521 = vmatpush2.bf16.msra.mxu0 %v1001
  %1522 = vmatprep.subr.bf16.mxu0 %v998
  %1523 = vmatpush2.bf16.msra.mxu0 %v997
  %1524 = vmatprep.subr.bf16.mxu0 %v994
  %1525 = vmatpush2.bf16.msra.mxu0 %v993
  %1526 = vmatprep.subr.bf16.mxu0 %v990
  %1527 = vmatpush2.bf16.msra.mxu0 %v989
  %1528 = vmatprep.subr.bf16.mxu0 %v986
  %1529 = vmatpush2.bf16.msra.mxu0 %v985
  %1530 = vmatprep.mubr.bf16.mxu0 %v289
  %1531 = vmatmul.mubr.bf16.gmra.mxu0 %v288
  %v1532 = vpop.f32.mrf.mxu0
  %v1533 = vadd.f32 %v1490, %v1532
  %v1534 = vpop.f32.mrf.mxu0
  %v1535 = vadd.f32 %v1492, %v1534
  %v1536 = vpop.f32.mrf.mxu0
  %v1537 = vadd.f32 %v1494, %v1536
  %v1538 = vpop.f32.mrf.mxu0
  %v1539 = vadd.f32 %v1496, %v1538
  %1540 = vdwg.mxu0
  %1541 = vmatprep.subr.bf16.mxu0 %v1046
  %1542 = vmatpush1.bf16.msra.mxu0 %v1045
  %1543 = vmatprep.subr.bf16.mxu0 %v1042
  %1544 = vmatpush1.bf16.msra.mxu0 %v1041
  %1545 = vmatprep.subr.bf16.mxu0 %v1038
  %1546 = vmatpush1.bf16.msra.mxu0 %v1037
  %1547 = vmatprep.subr.bf16.mxu0 %v1034
  %1548 = vmatpush1.bf16.msra.mxu0 %v1033
  %1549 = vmatprep.subr.bf16.mxu0 %v1030
  %1550 = vmatpush1.bf16.msra.mxu0 %v1029
  %1551 = vmatprep.subr.bf16.mxu0 %v1026
  %1552 = vmatpush1.bf16.msra.mxu0 %v1025
  %1553 = vmatprep.subr.bf16.mxu0 %v1022
  %1554 = vmatpush1.bf16.msra.mxu0 %v1021
  %1555 = vmatprep.subr.bf16.mxu0 %v1018
  %1556 = vmatpush1.bf16.msra.mxu0 %v1017
  %1557 = vmatprep.subr.bf16.mxu0 %v1078
  %1558 = vmatpush2.bf16.msra.mxu0 %v1077
  %1559 = vmatprep.subr.bf16.mxu0 %v1074
  %1560 = vmatpush2.bf16.msra.mxu0 %v1073
  %1561 = vmatprep.subr.bf16.mxu0 %v1070
  %1562 = vmatpush2.bf16.msra.mxu0 %v1069
  %1563 = vmatprep.subr.bf16.mxu0 %v1066
  %1564 = vmatpush2.bf16.msra.mxu0 %v1065
  %1565 = vmatprep.subr.bf16.mxu0 %v1062
  %1566 = vmatpush2.bf16.msra.mxu0 %v1061
  %1567 = vmatprep.subr.bf16.mxu0 %v1058
  %1568 = vmatpush2.bf16.msra.mxu0 %v1057
  %1569 = vmatprep.subr.bf16.mxu0 %v1054
  %1570 = vmatpush2.bf16.msra.mxu0 %v1053
  %1571 = vmatprep.subr.bf16.mxu0 %v1050
  %1572 = vmatpush2.bf16.msra.mxu0 %v1049
  %1573 = vmatprep.mubr.bf16.mxu0 %v291
  %1574 = vmatmul.mubr.bf16.gmra.mxu0 %v290
  %v1575 = vpop.f32.mrf.mxu0
  %v1576 = vadd.f32 %v1533, %v1575
  %v1577 = vpop.f32.mrf.mxu0
  %v1578 = vadd.f32 %v1535, %v1577
  %v1579 = vpop.f32.mrf.mxu0
  %v1580 = vadd.f32 %v1537, %v1579
  %v1581 = vpop.f32.mrf.mxu0
  %v1582 = vadd.f32 %v1539, %v1581
  %1583 = vdwg.mxu0
  %1584 = vmatprep.subr.bf16.mxu0 0
  %1585 = vmatpush1.bf16.msra.mxu0 0
  %1586 = vmatprep.subr.bf16.mxu0 0
  %1587 = vmatpush1.bf16.msra.mxu0 0
  %1588 = vmatprep.subr.bf16.mxu0 0
  %1589 = vmatpush1.bf16.msra.mxu0 0
  %1590 = vmatprep.subr.bf16.mxu0 0
  %1591 = vmatpush1.bf16.msra.mxu0 0
  %1592 = vmatprep.subr.bf16.mxu0 0
  %1593 = vmatpush1.bf16.msra.mxu0 0
  %1594 = vmatprep.subr.bf16.mxu0 0
  %1595 = vmatpush1.bf16.msra.mxu0 0
  %1596 = vmatprep.subr.bf16.mxu0 0
  %1597 = vmatpush1.bf16.msra.mxu0 0
  %1598 = vmatprep.subr.bf16.mxu0 %v1082
  %1599 = vmatpush1.bf16.msra.mxu0 %v1081
  %1600 = vmatprep.subr.bf16.mxu0 0
  %1601 = vmatpush2.bf16.msra.mxu0 0
  %1602 = vmatprep.subr.bf16.mxu0 0
  %1603 = vmatpush2.bf16.msra.mxu0 0
  %1604 = vmatprep.subr.bf16.mxu0 0
  %1605 = vmatpush2.bf16.msra.mxu0 0
  %1606 = vmatprep.subr.bf16.mxu0 0
  %1607 = vmatpush2.bf16.msra.mxu0 0
  %1608 = vmatprep.subr.bf16.mxu0 0
  %1609 = vmatpush2.bf16.msra.mxu0 0
  %1610 = vmatprep.subr.bf16.mxu0 0
  %1611 = vmatpush2.bf16.msra.mxu0 0
  %1612 = vmatprep.subr.bf16.mxu0 0
  %1613 = vmatpush2.bf16.msra.mxu0 0
  %1614 = vmatprep.subr.bf16.mxu0 0
  %1615 = vmatpush2.bf16.msra.mxu0 0
  %1616 = vmatprep.mubr.bf16.mxu0 0
  %1617 = vmatmul.mubr.bf16.gmra.mxu0 %v1281
  %v1618 = vpop.f32.mrf.mxu0
  %v1619 = vadd.f32 %v1576, %v1618
  %v1620 = vpop.f32.mrf.mxu0
  %v1621 = vadd.f32 %v1578, %v1620
  %v1622 = vpop.f32.mrf.mxu0
  %v1623 = vadd.f32 %v1580, %v1622
  %v1624 = vpop.f32.mrf.mxu0
  %v1625 = vadd.f32 %v1582, %v1624
  %1626 = vdwg.mxu0
  %v1627 = vmax.f32 %v1447, 0.0
  %v1628 = vmax.f32 %v1449, 0.0
  %v1629 = vmax.f32 %v1619, 0.0
  %v1630 = vmax.f32 %v1621, 0.0
  %v1631 = vmax.f32 %v1451, 0.0
  %v1632 = vmax.f32 %v1453, 0.0
  %v1633 = vmax.f32 %v1623, 0.0
  %v1634 = vmax.f32 %v1625, 0.0
  %v1635 = vpack.c.bf16 %v1631, %v1627
  %v1636 = vpack.c.bf16 %v1632, %v1628
  %v1637 = vpack.c.bf16 %v1633, %v1629
  %v1638 = vpack.c.bf16 %v1634, %v1630
  %v1639 = vld [vmem:[%s4] sm:$0xff]
  %v1640 = vld [vmem:[%s4 + $0x8] sm:$0xff]
  %v1641 = vld [vmem:[%s4 + $0x10] sm:$0xff]
  %v1642 = vld [vmem:[%s4 + $0x18] sm:$0xff]
  %v1643 = vld [vmem:[%s4 + $0x20] sm:$0xff]
  %v1644 = vld [vmem:[%s4 + $0x28] sm:$0xff]
  %v1645 = vld [vmem:[%s4 + $0x30] sm:$0xff]
  %v1646 = vld [vmem:[%s4 + $0x38] sm:$0xff]
  %v1647 = vld [vmem:[%s4 + $0x40] sm:$0xff]
  %v1648 = vld [vmem:[%s4 + $0x48] sm:$0xff]
  %v1649 = vld [vmem:[%s4 + $0x50] sm:$0xff]
  %v1650 = vld [vmem:[%s4 + $0x58] sm:$0xff]
  %v1651 = vld [vmem:[%s4 + $0x60] sm:$0xff]
  %v1652 = vld [vmem:[%s4 + $0x68] sm:$0xff]
  %v1653 = vld [vmem:[%s4 + $0x70] sm:$0xff]
  %v1654 = vld [vmem:[%s4 + $0x78] sm:$0xff]
  %v1655 = vld [vmem:[%s4 + $0x80] sm:$0xff]
  %v1656 = vld [vmem:[%s4 + $0x88] sm:$0xff]
  %v1657 = vld [vmem:[%s4 + $0x90] sm:$0xff]
  %v1658 = vld [vmem:[%s4 + $0x98] sm:$0xff]
  %v1659 = vld [vmem:[%s4 + $0xa0] sm:$0xff]
  %v1660 = vld [vmem:[%s4 + $0xa8] sm:$0xff]
  %v1661 = vld [vmem:[%s4 + $0xb0] sm:$0xff]
  %v1662 = vld [vmem:[%s4 + $0xb8] sm:$0xff]
  %v1663 = vld [vmem:[%s4 + $0xc0] sm:$0xff]
  %v1664 = vld [vmem:[%s4 + $0xc8] sm:$0xff]
  %v1665 = vld [vmem:[%s4 + $0xd0] sm:$0xff]
  %v1666 = vld [vmem:[%s4 + $0xd8] sm:$0xff]
  %v1667 = vld [vmem:[%s4 + $0xe0] sm:$0xff]
  %v1668 = vld [vmem:[%s4 + $0xe8] sm:$0xff]
  %v1669 = vld [vmem:[%s4 + $0xf0] sm:$0xff]
  %v1670 = vld [vmem:[%s4 + $0xf8] sm:$0xff]
  %v1671 = vld [vmem:[%s4 + $0x100] sm:$0xff]
  %v1672 = vld [vmem:[%s4 + $0x108] sm:$0xff]
  %v1673 = vld [vmem:[%s4 + $0x110] sm:$0xff]
  %v1674 = vld [vmem:[%s4 + $0x118] sm:$0xff]
  %v1675 = vld [vmem:[%s4 + $0x120] sm:$0xff]
  %v1676 = vld [vmem:[%s4 + $0x128] sm:$0xff]
  %v1677 = vld [vmem:[%s4 + $0x130] sm:$0xff]
  %v1678 = vld [vmem:[%s4 + $0x138] sm:$0xff]
  %v1679 = vld [vmem:[%s4 + $0x140] sm:$0xff]
  %v1680 = vld [vmem:[%s4 + $0x148] sm:$0xff]
  %v1681 = vld [vmem:[%s4 + $0x150] sm:$0xff]
  %v1682 = vld [vmem:[%s4 + $0x158] sm:$0xff]
  %v1683 = vld [vmem:[%s4 + $0x160] sm:$0xff]
  %v1684 = vld [vmem:[%s4 + $0x168] sm:$0xff]
  %v1685 = vld [vmem:[%s4 + $0x170] sm:$0xff]
  %v1686 = vld [vmem:[%s4 + $0x178] sm:$0xff]
  %v1687 = vld [vmem:[%s4 + $0x180] sm:$0xff]
  %v1688 = vld [vmem:[%s4 + $0x188] sm:$0xff]
  %v1689 = vld [vmem:[%s5] sm:$0x3]
  %v1691 = vlaneseq
  %v1692 = vshrl.u32 %v1691, 7
  %v1693 = vsub.s32 0, %v1692
  %v1694 = vrot.slane %v1689, %v1693
  %v1695 = vlaneseq
  %v1696 = vshrl.u32 %v1695, 7
  %v1697 = vsub.s32 1, %v1696
  %v1698 = vrot.slane %v1689, %v1697
  %v1751 = vunpack.c.l.b16 %v1639
  %v1752 = vunpack.c.h.b16 %v1639
  %v1753 = vunpack.c.l.b16 %v1640
  %v1754 = vunpack.c.h.b16 %v1640
  %v1755 = vunpack.c.l.b16 %v1641
  %v1756 = vunpack.c.h.b16 %v1641
  %v1757 = vunpack.c.l.b16 %v1642
  %v1758 = vunpack.c.h.b16 %v1642
  %v1759 = vunpack.c.l.b16 %v1643
  %v1760 = vunpack.c.h.b16 %v1643
  %v1761 = vunpack.c.l.b16 %v1644
  %v1762 = vunpack.c.h.b16 %v1644
  %v1763 = vunpack.c.l.b16 %v1645
  %v1764 = vunpack.c.h.b16 %v1645
  %v1765 = vunpack.c.l.b16 %v1646
  %v1766 = vunpack.c.h.b16 %v1646
  %v1767 = vunpack.c.l.b16 %v1647
  %v1768 = vunpack.c.h.b16 %v1647
  %v1769 = vunpack.c.l.b16 %v1648
  %v1770 = vunpack.c.h.b16 %v1648
  %v1771 = vunpack.c.l.b16 %v1649
  %v1772 = vunpack.c.h.b16 %v1649
  %v1773 = vunpack.c.l.b16 %v1650
  %v1774 = vunpack.c.h.b16 %v1650
  %v1775 = vunpack.c.l.b16 %v1651
  %v1776 = vunpack.c.h.b16 %v1651
  %v1777 = vunpack.c.l.b16 %v1652
  %v1778 = vunpack.c.h.b16 %v1652
  %v1779 = vunpack.c.l.b16 %v1653
  %v1780 = vunpack.c.h.b16 %v1653
  %v1781 = vunpack.c.l.b16 %v1654
  %v1782 = vunpack.c.h.b16 %v1654
  %v1783 = vunpack.c.l.b16 %v1655
  %v1784 = vunpack.c.h.b16 %v1655
  %v1785 = vunpack.c.l.b16 %v1656
  %v1786 = vunpack.c.h.b16 %v1656
  %v1787 = vunpack.c.l.b16 %v1657
  %v1788 = vunpack.c.h.b16 %v1657
  %v1789 = vunpack.c.l.b16 %v1658
  %v1790 = vunpack.c.h.b16 %v1658
  %v1791 = vunpack.c.l.b16 %v1659
  %v1792 = vunpack.c.h.b16 %v1659
  %v1793 = vunpack.c.l.b16 %v1660
  %v1794 = vunpack.c.h.b16 %v1660
  %v1795 = vunpack.c.l.b16 %v1661
  %v1796 = vunpack.c.h.b16 %v1661
  %v1797 = vunpack.c.l.b16 %v1662
  %v1798 = vunpack.c.h.b16 %v1662
  %v1799 = vunpack.c.l.b16 %v1663
  %v1800 = vunpack.c.h.b16 %v1663
  %v1801 = vunpack.c.l.b16 %v1664
  %v1802 = vunpack.c.h.b16 %v1664
  %v1803 = vunpack.c.l.b16 %v1665
  %v1804 = vunpack.c.h.b16 %v1665
  %v1805 = vunpack.c.l.b16 %v1666
  %v1806 = vunpack.c.h.b16 %v1666
  %v1807 = vunpack.c.l.b16 %v1667
  %v1808 = vunpack.c.h.b16 %v1667
  %v1809 = vunpack.c.l.b16 %v1668
  %v1810 = vunpack.c.h.b16 %v1668
  %v1811 = vunpack.c.l.b16 %v1669
  %v1812 = vunpack.c.h.b16 %v1669
  %v1813 = vunpack.c.l.b16 %v1670
  %v1814 = vunpack.c.h.b16 %v1670
  %v1815 = vunpack.c.l.b16 %v1671
  %v1816 = vunpack.c.h.b16 %v1671
  %v1817 = vunpack.c.l.b16 %v1672
  %v1818 = vunpack.c.h.b16 %v1672
  %v1819 = vunpack.c.l.b16 %v1673
  %v1820 = vunpack.c.h.b16 %v1673
  %v1821 = vunpack.c.l.b16 %v1674
  %v1822 = vunpack.c.h.b16 %v1674
  %v1823 = vunpack.c.l.b16 %v1675
  %v1824 = vunpack.c.h.b16 %v1675
  %v1825 = vunpack.c.l.b16 %v1676
  %v1826 = vunpack.c.h.b16 %v1676
  %v1827 = vunpack.c.l.b16 %v1677
  %v1828 = vunpack.c.h.b16 %v1677
  %v1829 = vunpack.c.l.b16 %v1678
  %v1830 = vunpack.c.h.b16 %v1678
  %v1831 = vunpack.c.l.b16 %v1679
  %v1832 = vunpack.c.h.b16 %v1679
  %v1833 = vunpack.c.l.b16 %v1680
  %v1834 = vunpack.c.h.b16 %v1680
  %v1835 = vunpack.c.l.b16 %v1681
  %v1836 = vunpack.c.h.b16 %v1681
  %v1837 = vunpack.c.l.b16 %v1682
  %v1838 = vunpack.c.h.b16 %v1682
  %v1839 = vunpack.c.l.b16 %v1683
  %v1840 = vunpack.c.h.b16 %v1683
  %v1841 = vunpack.c.l.b16 %v1684
  %v1842 = vunpack.c.h.b16 %v1684
  %v1843 = vunpack.c.l.b16 %v1685
  %v1844 = vunpack.c.h.b16 %v1685
  %v1845 = vunpack.c.l.b16 %v1686
  %v1846 = vunpack.c.h.b16 %v1686
  %v1847 = vunpack.c.l.b16 %v1687
  %v1848 = vunpack.c.h.b16 %v1687
  %v1849 = vunpack.c.l.b16 %v1688
  %v1850 = vunpack.c.h.b16 %v1688
  %v1851 = vpack.c.b16 %v1753, %v1751
  %v1852 = vpack.c.b16 %v1754, %v1752
  %v1853 = vpack.c.b16 %v1757, %v1755
  %v1854 = vpack.c.b16 %v1758, %v1756
  %v1855 = vpack.c.b16 %v1761, %v1759
  %v1856 = vpack.c.b16 %v1762, %v1760
  %v1857 = vpack.c.b16 %v1765, %v1763
  %v1858 = vpack.c.b16 %v1766, %v1764
  %v1859 = vpack.c.b16 %v1769, %v1767
  %v1860 = vpack.c.b16 %v1770, %v1768
  %v1861 = vpack.c.b16 %v1773, %v1771
  %v1862 = vpack.c.b16 %v1774, %v1772
  %v1863 = vpack.c.b16 %v1777, %v1775
  %v1864 = vpack.c.b16 %v1778, %v1776
  %v1865 = vpack.c.b16 %v1781, %v1779
  %v1866 = vpack.c.b16 %v1782, %v1780
  %v1867 = vpack.c.b16 %v1785, %v1783
  %v1868 = vpack.c.b16 %v1786, %v1784
  %v1869 = vpack.c.b16 %v1789, %v1787
  %v1870 = vpack.c.b16 %v1790, %v1788
  %v1871 = vpack.c.b16 %v1793, %v1791
  %v1872 = vpack.c.b16 %v1794, %v1792
  %v1873 = vpack.c.b16 %v1797, %v1795
  %v1874 = vpack.c.b16 %v1798, %v1796
  %v1875 = vpack.c.b16 %v1801, %v1799
  %v1876 = vpack.c.b16 %v1802, %v1800
  %v1877 = vpack.c.b16 %v1805, %v1803
  %v1878 = vpack.c.b16 %v1806, %v1804
  %v1879 = vpack.c.b16 %v1809, %v1807
  %v1880 = vpack.c.b16 %v1810, %v1808
  %v1881 = vpack.c.b16 %v1813, %v1811
  %v1882 = vpack.c.b16 %v1814, %v1812
  %v1883 = vpack.c.b16 %v1817, %v1815
  %v1884 = vpack.c.b16 %v1818, %v1816
  %v1885 = vpack.c.b16 %v1821, %v1819
  %v1886 = vpack.c.b16 %v1822, %v1820
  %v1887 = vpack.c.b16 %v1825, %v1823
  %v1888 = vpack.c.b16 %v1826, %v1824
  %v1889 = vpack.c.b16 %v1829, %v1827
  %v1890 = vpack.c.b16 %v1830, %v1828
  %v1891 = vpack.c.b16 %v1833, %v1831
  %v1892 = vpack.c.b16 %v1834, %v1832
  %v1893 = vpack.c.b16 %v1837, %v1835
  %v1894 = vpack.c.b16 %v1838, %v1836
  %v1895 = vpack.c.b16 %v1841, %v1839
  %v1896 = vpack.c.b16 %v1842, %v1840
  %v1897 = vpack.c.b16 %v1845, %v1843
  %v1898 = vpack.c.b16 %v1846, %v1844
  %v1899 = vpack.c.b16 %v1849, %v1847
  %v1900 = vpack.c.b16 %v1850, %v1848
  %v1952 = vsel %vm1279, %v1638, 0
  %1954 = vmatprep.subr.bf16.mxu0 %v1866
  %1955 = vmatpush1.bf16.msra.mxu0 %v1865
  %1956 = vmatprep.subr.bf16.mxu0 %v1864
  %1957 = vmatpush1.bf16.msra.mxu0 %v1863
  %1958 = vmatprep.subr.bf16.mxu0 %v1862
  %1959 = vmatpush1.bf16.msra.mxu0 %v1861
  %1960 = vmatprep.subr.bf16.mxu0 %v1860
  %1961 = vmatpush1.bf16.msra.mxu0 %v1859
  %1962 = vmatprep.subr.bf16.mxu0 %v1858
  %1963 = vmatpush1.bf16.msra.mxu0 %v1857
  %1964 = vmatprep.subr.bf16.mxu0 %v1856
  %1965 = vmatpush1.bf16.msra.mxu0 %v1855
  %1966 = vmatprep.subr.bf16.mxu0 %v1854
  %1967 = vmatpush1.bf16.msra.mxu0 %v1853
  %1968 = vmatprep.subr.bf16.mxu0 %v1852
  %1969 = vmatpush1.bf16.msra.mxu0 %v1851
  %1970 = vmatprep.subr.bf16.mxu0 %v1882
  %1971 = vmatpush2.bf16.msra.mxu0 %v1881
  %1972 = vmatprep.subr.bf16.mxu0 %v1880
  %1973 = vmatpush2.bf16.msra.mxu0 %v1879
  %1974 = vmatprep.subr.bf16.mxu0 %v1878
  %1975 = vmatpush2.bf16.msra.mxu0 %v1877
  %1976 = vmatprep.subr.bf16.mxu0 %v1876
  %1977 = vmatpush2.bf16.msra.mxu0 %v1875
  %1978 = vmatprep.subr.bf16.mxu0 %v1874
  %1979 = vmatpush2.bf16.msra.mxu0 %v1873
  %1980 = vmatprep.subr.bf16.mxu0 %v1872
  %1981 = vmatpush2.bf16.msra.mxu0 %v1871
  %1982 = vmatprep.subr.bf16.mxu0 %v1870
  %1983 = vmatpush2.bf16.msra.mxu0 %v1869
  %1984 = vmatprep.subr.bf16.mxu0 %v1868
  %1985 = vmatpush2.bf16.msra.mxu0 %v1867
  %1986 = vmatprep.mubr.bf16.mxu0 %v1636
  %1987 = vmatmul.mubr.bf16.gmra.mxu0 %v1635
  %v1988 = vpop.f32.mrf.mxu0
  %v1989 = vadd.f32 %v1694, %v1988
  %v1990 = vpop.f32.mrf.mxu0
  %v1991 = vadd.f32 %v1698, %v1990
  %v1992 = vpop.f32.mrf.mxu0
  %v1993 = vadd.f32 %v1694, %v1992
  %v1994 = vpop.f32.mrf.mxu0
  %v1995 = vadd.f32 %v1698, %v1994
  %1996 = vdwg.mxu0
  %1997 = vmatprep.subr.bf16.mxu0 %v1898
  %1998 = vmatpush1.bf16.msra.mxu0 %v1897
  %1999 = vmatprep.subr.bf16.mxu0 %v1896
  %2000 = vmatpush1.bf16.msra.mxu0 %v1895
  %2001 = vmatprep.subr.bf16.mxu0 %v1894
  %2002 = vmatpush1.bf16.msra.mxu0 %v1893
  %2003 = vmatprep.subr.bf16.mxu0 %v1892
  %2004 = vmatpush1.bf16.msra.mxu0 %v1891
  %2005 = vmatprep.subr.bf16.mxu0 %v1890
  %2006 = vmatpush1.bf16.msra.mxu0 %v1889
  %2007 = vmatprep.subr.bf16.mxu0 %v1888
  %2008 = vmatpush1.bf16.msra.mxu0 %v1887
  %2009 = vmatprep.subr.bf16.mxu0 %v1886
  %2010 = vmatpush1.bf16.msra.mxu0 %v1885
  %2011 = vmatprep.subr.bf16.mxu0 %v1884
  %2012 = vmatpush1.bf16.msra.mxu0 %v1883
  %2013 = vmatprep.subr.bf16.mxu0 0
  %2014 = vmatpush2.bf16.msra.mxu0 0
  %2015 = vmatprep.subr.bf16.mxu0 0
  %2016 = vmatpush2.bf16.msra.mxu0 0
  %2017 = vmatprep.subr.bf16.mxu0 0
  %2018 = vmatpush2.bf16.msra.mxu0 0
  %2019 = vmatprep.subr.bf16.mxu0 0
  %2020 = vmatpush2.bf16.msra.mxu0 0
  %2021 = vmatprep.subr.bf16.mxu0 0
  %2022 = vmatpush2.bf16.msra.mxu0 0
  %2023 = vmatprep.subr.bf16.mxu0 0
  %2024 = vmatpush2.bf16.msra.mxu0 0
  %2025 = vmatprep.subr.bf16.mxu0 0
  %2026 = vmatpush2.bf16.msra.mxu0 0
  %2027 = vmatprep.subr.bf16.mxu0 %v1900
  %2028 = vmatpush2.bf16.msra.mxu0 %v1899
  %2029 = vmatprep.mubr.bf16.mxu0 %v1952
  %2030 = vmatmul.mubr.bf16.gmra.mxu0 %v1637
  %v2031 = vpop.f32.mrf.mxu0
  %v2032 = vadd.f32 %v1989, %v2031
  %v2033 = vpop.f32.mrf.mxu0
  %v2034 = vadd.f32 %v1991, %v2033
  %v2035 = vpop.f32.mrf.mxu0
  %v2036 = vadd.f32 %v1993, %v2035
  %v2037 = vpop.f32.mrf.mxu0
  %v2038 = vadd.f32 %v1995, %v2037
  %2039 = vdwg.mxu0
  %v2040 = vld [vmem:[%s1] sm:$0xff]
  %v2041 = vld [vmem:[%s1 + $0x8] sm:$0xff]
  %v2042 = vmul.f32 %v2034, 0.5
  %v2043 = vmul.f32 %v2038, 0.5
  %v2044 = vmul.f32 %v2042, 1.442695
  %v2045 = vpow.pop %v2044
  %v2046 = vmul.f32 %v2043, 1.442695
  %v2047 = vpow.pop %v2046
  %v2048 = vmul.f32 %v2040, %v2045
  %v2049 = vmul.f32 %v2041, %v2047
  %v2050 = vadd.f32 %v2048, %v2032
  %v2051 = vadd.f32 %v2049, %v2036
  %v2052 = vpack.c.bf16 %v2051, %v2050
  %v2053 = vld [vmem:[%s6] sm:$0xff]
  %v2054 = vld [vmem:[%s6 + $0x8] sm:$0xff]
  %v2055 = vld [vmem:[%s6 + $0x10] sm:$0xff]
  %v2056 = vld [vmem:[%s6 + $0x18] sm:$0xff]
  %v2057 = vld [vmem:[%s6 + $0x20] sm:$0xff]
  %v2058 = vld [vmem:[%s6 + $0x28] sm:$0xff]
  %v2059 = vld [vmem:[%s6 + $0x30] sm:$0xff]
  %v2060 = vld [vmem:[%s6 + $0x38] sm:$0xff]
  %v2061 = vld [vmem:[%s6 + $0x40] sm:$0xff]
  %v2062 = vld [vmem:[%s6 + $0x48] sm:$0xff]
  %v2063 = vld [vmem:[%s6 + $0x50] sm:$0xff]
  %v2064 = vld [vmem:[%s6 + $0x58] sm:$0xff]
  %v2065 = vld [vmem:[%s6 + $0x60] sm:$0xff]
  %v2066 = vld [vmem:[%s6 + $0x68] sm:$0xff]
  %v2067 = vld [vmem:[%s6 + $0x70] sm:$0xff]
  %v2068 = vld [vmem:[%s6 + $0x78] sm:$0xff]
  %v2069 = vld [vmem:[%s6 + $0x80] sm:$0xff]
  %v2070 = vld [vmem:[%s6 + $0x88] sm:$0xff]
  %v2071 = vld [vmem:[%s6 + $0x90] sm:$0xff]
  %v2072 = vld [vmem:[%s6 + $0x98] sm:$0xff]
  %v2073 = vld [vmem:[%s6 + $0xa0] sm:$0xff]
  %v2074 = vld [vmem:[%s6 + $0xa8] sm:$0xff]
  %v2075 = vld [vmem:[%s6 + $0xb0] sm:$0xff]
  %v2076 = vld [vmem:[%s6 + $0xb8] sm:$0xff]
  %v2077 = vld [vmem:[%s6 + $0xc0] sm:$0xff]
  %v2078 = vld [vmem:[%s6 + $0xc8] sm:$0xff]
  %v2079 = vld [vmem:[%s6 + $0xd0] sm:$0xff]
  %v2080 = vld [vmem:[%s6 + $0xd8] sm:$0xff]
  %v2081 = vld [vmem:[%s6 + $0xe0] sm:$0xff]
  %v2082 = vld [vmem:[%s6 + $0xe8] sm:$0xff]
  %v2083 = vld [vmem:[%s6 + $0xf0] sm:$0xff]
  %v2084 = vld [vmem:[%s6 + $0xf8] sm:$0xff]
  %v2085 = vld [vmem:[%s7] sm:$0xf]
  %v2087 = vlaneseq
  %v2088 = vshrl.u32 %v2087, 7
  %v2089 = vsub.s32 0, %v2088
  %v2090 = vrot.slane %v2085, %v2089
  %v2091 = vlaneseq
  %v2092 = vshrl.u32 %v2091, 7
  %v2093 = vsub.s32 1, %v2092
  %v2094 = vrot.slane %v2085, %v2093
  %v2095 = vlaneseq
  %v2096 = vshrl.u32 %v2095, 7
  %v2097 = vsub.s32 2, %v2096
  %v2098 = vrot.slane %v2085, %v2097
  %v2099 = vlaneseq
  %v2100 = vshrl.u32 %v2099, 7
  %v2101 = vsub.s32 3, %v2100
  %v2102 = vrot.slane %v2085, %v2101
  %v2139 = vunpack.c.l.b16 %v2053
  %v2140 = vunpack.c.h.b16 %v2053
  %v2141 = vunpack.c.l.b16 %v2054
  %v2142 = vunpack.c.h.b16 %v2054
  %v2143 = vunpack.c.l.b16 %v2055
  %v2144 = vunpack.c.h.b16 %v2055
  %v2145 = vunpack.c.l.b16 %v2056
  %v2146 = vunpack.c.h.b16 %v2056
  %v2147 = vunpack.c.l.b16 %v2057
  %v2148 = vunpack.c.h.b16 %v2057
  %v2149 = vunpack.c.l.b16 %v2058
  %v2150 = vunpack.c.h.b16 %v2058
  %v2151 = vunpack.c.l.b16 %v2059
  %v2152 = vunpack.c.h.b16 %v2059
  %v2153 = vunpack.c.l.b16 %v2060
  %v2154 = vunpack.c.h.b16 %v2060
  %v2155 = vunpack.c.l.b16 %v2061
  %v2156 = vunpack.c.h.b16 %v2061
  %v2157 = vunpack.c.l.b16 %v2062
  %v2158 = vunpack.c.h.b16 %v2062
  %v2159 = vunpack.c.l.b16 %v2063
  %v2160 = vunpack.c.h.b16 %v2063
  %v2161 = vunpack.c.l.b16 %v2064
  %v2162 = vunpack.c.h.b16 %v2064
  %v2163 = vunpack.c.l.b16 %v2065
  %v2164 = vunpack.c.h.b16 %v2065
  %v2165 = vunpack.c.l.b16 %v2066
  %v2166 = vunpack.c.h.b16 %v2066
  %v2167 = vunpack.c.l.b16 %v2067
  %v2168 = vunpack.c.h.b16 %v2067
  %v2169 = vunpack.c.l.b16 %v2068
  %v2170 = vunpack.c.h.b16 %v2068
  %v2171 = vunpack.c.l.b16 %v2069
  %v2172 = vunpack.c.h.b16 %v2069
  %v2173 = vunpack.c.l.b16 %v2070
  %v2174 = vunpack.c.h.b16 %v2070
  %v2175 = vunpack.c.l.b16 %v2071
  %v2176 = vunpack.c.h.b16 %v2071
  %v2177 = vunpack.c.l.b16 %v2072
  %v2178 = vunpack.c.h.b16 %v2072
  %v2179 = vunpack.c.l.b16 %v2073
  %v2180 = vunpack.c.h.b16 %v2073
  %v2181 = vunpack.c.l.b16 %v2074
  %v2182 = vunpack.c.h.b16 %v2074
  %v2183 = vunpack.c.l.b16 %v2075
  %v2184 = vunpack.c.h.b16 %v2075
  %v2185 = vunpack.c.l.b16 %v2076
  %v2186 = vunpack.c.h.b16 %v2076
  %v2187 = vunpack.c.l.b16 %v2077
  %v2188 = vunpack.c.h.b16 %v2077
  %v2189 = vunpack.c.l.b16 %v2078
  %v2190 = vunpack.c.h.b16 %v2078
  %v2191 = vunpack.c.l.b16 %v2079
  %v2192 = vunpack.c.h.b16 %v2079
  %v2193 = vunpack.c.l.b16 %v2080
  %v2194 = vunpack.c.h.b16 %v2080
  %v2195 = vunpack.c.l.b16 %v2081
  %v2196 = vunpack.c.h.b16 %v2081
  %v2197 = vunpack.c.l.b16 %v2082
  %v2198 = vunpack.c.h.b16 %v2082
  %v2199 = vunpack.c.l.b16 %v2083
  %v2200 = vunpack.c.h.b16 %v2083
  %v2201 = vunpack.c.l.b16 %v2084
  %v2202 = vunpack.c.h.b16 %v2084
  %v2203 = vpack.c.b16 %v2143, %v2139
  %v2204 = vpack.c.b16 %v2144, %v2140
  %v2205 = vpack.c.b16 %v2145, %v2141
  %v2206 = vpack.c.b16 %v2146, %v2142
  %v2207 = vpack.c.b16 %v2151, %v2147
  %v2208 = vpack.c.b16 %v2152, %v2148
  %v2209 = vpack.c.b16 %v2153, %v2149
  %v2210 = vpack.c.b16 %v2154, %v2150
  %v2211 = vpack.c.b16 %v2159, %v2155
  %v2212 = vpack.c.b16 %v2160, %v2156
  %v2213 = vpack.c.b16 %v2161, %v2157
  %v2214 = vpack.c.b16 %v2162, %v2158
  %v2215 = vpack.c.b16 %v2167, %v2163
  %v2216 = vpack.c.b16 %v2168, %v2164
  %v2217 = vpack.c.b16 %v2169, %v2165
  %v2218 = vpack.c.b16 %v2170, %v2166
  %v2219 = vpack.c.b16 %v2175, %v2171
  %v2220 = vpack.c.b16 %v2176, %v2172
  %v2221 = vpack.c.b16 %v2177, %v2173
  %v2222 = vpack.c.b16 %v2178, %v2174
  %v2223 = vpack.c.b16 %v2183, %v2179
  %v2224 = vpack.c.b16 %v2184, %v2180
  %v2225 = vpack.c.b16 %v2185, %v2181
  %v2226 = vpack.c.b16 %v2186, %v2182
  %v2227 = vpack.c.b16 %v2191, %v2187
  %v2228 = vpack.c.b16 %v2192, %v2188
  %v2229 = vpack.c.b16 %v2193, %v2189
  %v2230 = vpack.c.b16 %v2194, %v2190
  %v2231 = vpack.c.b16 %v2199, %v2195
  %v2232 = vpack.c.b16 %v2200, %v2196
  %v2233 = vpack.c.b16 %v2201, %v2197
  %v2234 = vpack.c.b16 %v2202, %v2198
  %2267 = vmatprep.subr.bf16.mxu0 %v2232
  %2268 = vmatpush1.bf16.msra.mxu0 %v2231
  %2269 = vmatprep.subr.bf16.mxu0 %v2228
  %2270 = vmatpush1.bf16.msra.mxu0 %v2227
  %2271 = vmatprep.subr.bf16.mxu0 %v2224
  %2272 = vmatpush1.bf16.msra.mxu0 %v2223
  %2273 = vmatprep.subr.bf16.mxu0 %v2220
  %2274 = vmatpush1.bf16.msra.mxu0 %v2219
  %2275 = vmatprep.subr.bf16.mxu0 %v2216
  %2276 = vmatpush1.bf16.msra.mxu0 %v2215
  %2277 = vmatprep.subr.bf16.mxu0 %v2212
  %2278 = vmatpush1.bf16.msra.mxu0 %v2211
  %2279 = vmatprep.subr.bf16.mxu0 %v2208
  %2280 = vmatpush1.bf16.msra.mxu0 %v2207
  %2281 = vmatprep.subr.bf16.mxu0 %v2204
  %2282 = vmatpush1.bf16.msra.mxu0 %v2203
  %2283 = vmatprep.subr.bf16.mxu0 0
  %2284 = vmatpush2.bf16.msra.mxu0 0
  %2285 = vmatprep.subr.bf16.mxu0 0
  %2286 = vmatpush2.bf16.msra.mxu0 0
  %2287 = vmatprep.subr.bf16.mxu0 0
  %2288 = vmatpush2.bf16.msra.mxu0 0
  %2289 = vmatprep.subr.bf16.mxu0 0
  %2290 = vmatpush2.bf16.msra.mxu0 0
  %2291 = vmatprep.subr.bf16.mxu0 0
  %2292 = vmatpush2.bf16.msra.mxu0 0
  %2293 = vmatprep.subr.bf16.mxu0 0
  %2294 = vmatpush2.bf16.msra.mxu0 0
  %2295 = vmatprep.subr.bf16.mxu0 0
  %2296 = vmatpush2.bf16.msra.mxu0 0
  %2297 = vmatprep.subr.bf16.mxu0 0
  %2298 = vmatpush2.bf16.msra.mxu0 0
  %2299 = vmatprep.mubr.bf16.mxu0 0
  %2300 = vmatmul.mubr.bf16.gmra.mxu0 %v2052
  %v2301 = vpop.f32.mrf.mxu0
  %v2302 = vadd.f32 %v2090, %v2301
  %v2303 = vpop.f32.mrf.mxu0
  %v2304 = vadd.f32 %v2094, %v2303
  %v2305 = vpop.f32.mrf.mxu0
  %v2306 = vadd.f32 %v2090, %v2305
  %v2307 = vpop.f32.mrf.mxu0
  %v2308 = vadd.f32 %v2094, %v2307
  %2309 = vdwg.mxu0
  %2310 = vmatprep.subr.bf16.mxu0 %v2234
  %2311 = vmatpush1.bf16.msra.mxu0 %v2233
  %2312 = vmatprep.subr.bf16.mxu0 %v2230
  %2313 = vmatpush1.bf16.msra.mxu0 %v2229
  %2314 = vmatprep.subr.bf16.mxu0 %v2226
  %2315 = vmatpush1.bf16.msra.mxu0 %v2225
  %2316 = vmatprep.subr.bf16.mxu0 %v2222
  %2317 = vmatpush1.bf16.msra.mxu0 %v2221
  %2318 = vmatprep.subr.bf16.mxu0 %v2218
  %2319 = vmatpush1.bf16.msra.mxu0 %v2217
  %2320 = vmatprep.subr.bf16.mxu0 %v2214
  %2321 = vmatpush1.bf16.msra.mxu0 %v2213
  %2322 = vmatprep.subr.bf16.mxu0 %v2210
  %2323 = vmatpush1.bf16.msra.mxu0 %v2209
  %2324 = vmatprep.subr.bf16.mxu0 %v2206
  %2325 = vmatpush1.bf16.msra.mxu0 %v2205
  %2326 = vmatprep.subr.bf16.mxu0 0
  %2327 = vmatpush2.bf16.msra.mxu0 0
  %2328 = vmatprep.subr.bf16.mxu0 0
  %2329 = vmatpush2.bf16.msra.mxu0 0
  %2330 = vmatprep.subr.bf16.mxu0 0
  %2331 = vmatpush2.bf16.msra.mxu0 0
  %2332 = vmatprep.subr.bf16.mxu0 0
  %2333 = vmatpush2.bf16.msra.mxu0 0
  %2334 = vmatprep.subr.bf16.mxu0 0
  %2335 = vmatpush2.bf16.msra.mxu0 0
  %2336 = vmatprep.subr.bf16.mxu0 0
  %2337 = vmatpush2.bf16.msra.mxu0 0
  %2338 = vmatprep.subr.bf16.mxu0 0
  %2339 = vmatpush2.bf16.msra.mxu0 0
  %2340 = vmatprep.subr.bf16.mxu0 0
  %2341 = vmatpush2.bf16.msra.mxu0 0
  %2342 = vmatprep.mubr.bf16.mxu0 0
  %2343 = vmatmul.mubr.bf16.gmra.mxu0 %v2052
  %v2344 = vpop.f32.mrf.mxu0
  %v2345 = vadd.f32 %v2098, %v2344
  %v2346 = vpop.f32.mrf.mxu0
  %v2347 = vadd.f32 %v2102, %v2346
  %v2348 = vpop.f32.mrf.mxu0
  %v2349 = vadd.f32 %v2098, %v2348
  %v2350 = vpop.f32.mrf.mxu0
  %v2351 = vadd.f32 %v2102, %v2350
  %2352 = vdwg.mxu0
  %v2353 = vmax.f32 %v2302, 0.0
  %v2354 = vmax.f32 %v2304, 0.0
  %v2355 = vmax.f32 %v2345, 0.0
  %v2356 = vmax.f32 %v2347, 0.0
  %v2357 = vmax.f32 %v2306, 0.0
  %v2358 = vmax.f32 %v2308, 0.0
  %v2359 = vmax.f32 %v2349, 0.0
  %v2360 = vmax.f32 %v2351, 0.0
  %v2361 = vpack.c.bf16 %v2357, %v2353
  %v2362 = vpack.c.bf16 %v2358, %v2354
  %v2363 = vpack.c.bf16 %v2359, %v2355
  %v2364 = vpack.c.bf16 %v2360, %v2356
  %v2365 = vld [vmem:[%s8] sm:$0xff]
  %v2366 = vld [vmem:[%s8 + $0x8] sm:$0xff]
  %v2367 = vld [vmem:[%s8 + $0x10] sm:$0xff]
  %v2368 = vld [vmem:[%s8 + $0x18] sm:$0xf]
  %v2369 = vld [vmem:[%s8 + $0x1c] sm:$0xff]
  %v2370 = vld [vmem:[%s8 + $0x24] sm:$0xff]
  %v2371 = vld [vmem:[%s8 + $0x2c] sm:$0xff]
  %v2372 = vld [vmem:[%s8 + $0x34] sm:$0xf]
  %v2373 = vld [vmem:[%s8 + $0x38] sm:$0xff]
  %v2374 = vld [vmem:[%s8 + $0x40] sm:$0xff]
  %v2375 = vld [vmem:[%s8 + $0x48] sm:$0xff]
  %v2376 = vld [vmem:[%s8 + $0x50] sm:$0xf]
  %v2377 = vld [vmem:[%s8 + $0x54] sm:$0xff]
  %v2378 = vld [vmem:[%s8 + $0x5c] sm:$0xff]
  %v2379 = vld [vmem:[%s8 + $0x64] sm:$0xff]
  %v2380 = vld [vmem:[%s8 + $0x6c] sm:$0xf]
  %v2381 = vld [vmem:[%s8 + $0x70] sm:$0xff]
  %v2382 = vld [vmem:[%s8 + $0x78] sm:$0xff]
  %v2383 = vld [vmem:[%s8 + $0x80] sm:$0xff]
  %v2384 = vld [vmem:[%s8 + $0x88] sm:$0xf]
  %v2385 = vld [vmem:[%s8 + $0x8c] sm:$0xff]
  %v2386 = vld [vmem:[%s8 + $0x94] sm:$0xff]
  %v2387 = vld [vmem:[%s8 + $0x9c] sm:$0xff]
  %v2388 = vld [vmem:[%s8 + $0xa4] sm:$0xf]
  %v2389 = vld [vmem:[%s8 + $0xa8] sm:$0xff]
  %v2390 = vld [vmem:[%s8 + $0xb0] sm:$0xff]
  %v2391 = vld [vmem:[%s8 + $0xb8] sm:$0xff]
  %v2392 = vld [vmem:[%s8 + $0xc0] sm:$0xf]
  %v2393 = vld [vmem:[%s8 + $0xc4] sm:$0xff]
  %v2394 = vld [vmem:[%s8 + $0xcc] sm:$0xff]
  %v2395 = vld [vmem:[%s8 + $0xd4] sm:$0xff]
  %v2396 = vld [vmem:[%s8 + $0xdc] sm:$0xf]
  %v2397 = vld [vmem:[%s8 + $0xe0] sm:$0xff]
  %v2398 = vld [vmem:[%s8 + $0xe8] sm:$0xff]
  %v2399 = vld [vmem:[%s8 + $0xf0] sm:$0xff]
  %v2400 = vld [vmem:[%s8 + $0xf8] sm:$0xf]
  %v2401 = vld [vmem:[%s8 + $0xfc] sm:$0xff]
  %v2402 = vld [vmem:[%s8 + $0x104] sm:$0xff]
  %v2403 = vld [vmem:[%s8 + $0x10c] sm:$0xff]
  %v2404 = vld [vmem:[%s8 + $0x114] sm:$0xf]
  %v2405 = vld [vmem:[%s8 + $0x118] sm:$0xff]
  %v2406 = vld [vmem:[%s8 + $0x120] sm:$0xff]
  %v2407 = vld [vmem:[%s8 + $0x128] sm:$0xff]
  %v2408 = vld [vmem:[%s8 + $0x130] sm:$0xf]
  %v2409 = vld [vmem:[%s8 + $0x134] sm:$0xff]
  %v2410 = vld [vmem:[%s8 + $0x13c] sm:$0xff]
  %v2411 = vld [vmem:[%s8 + $0x144] sm:$0xff]
  %v2412 = vld [vmem:[%s8 + $0x14c] sm:$0xf]
  %v2413 = vld [vmem:[%s8 + $0x150] sm:$0xff]
  %v2414 = vld [vmem:[%s8 + $0x158] sm:$0xff]
  %v2415 = vld [vmem:[%s8 + $0x160] sm:$0xff]
  %v2416 = vld [vmem:[%s8 + $0x168] sm:$0xf]
  %v2417 = vld [vmem:[%s8 + $0x16c] sm:$0xff]
  %v2418 = vld [vmem:[%s8 + $0x174] sm:$0xff]
  %v2419 = vld [vmem:[%s8 + $0x17c] sm:$0xff]
  %v2420 = vld [vmem:[%s8 + $0x184] sm:$0xf]
  %v2421 = vld [vmem:[%s8 + $0x188] sm:$0xff]
  %v2422 = vld [vmem:[%s8 + $0x190] sm:$0xff]
  %v2423 = vld [vmem:[%s8 + $0x198] sm:$0xff]
  %v2424 = vld [vmem:[%s8 + $0x1a0] sm:$0xf]
  %v2425 = vld [vmem:[%s8 + $0x1a4] sm:$0xff]
  %v2426 = vld [vmem:[%s8 + $0x1ac] sm:$0xff]
  %v2427 = vld [vmem:[%s8 + $0x1b4] sm:$0xff]
  %v2428 = vld [vmem:[%s8 + $0x1bc] sm:$0xf]
  %v2429 = vld [vmem:[%s8 + $0x1c0] sm:$0xff]
  %v2430 = vld [vmem:[%s8 + $0x1c8] sm:$0xff]
  %v2431 = vld [vmem:[%s8 + $0x1d0] sm:$0xff]
  %v2432 = vld [vmem:[%s8 + $0x1d8] sm:$0xf]
  %v2433 = vld [vmem:[%s8 + $0x1dc] sm:$0xff]
  %v2434 = vld [vmem:[%s8 + $0x1e4] sm:$0xff]
  %v2435 = vld [vmem:[%s8 + $0x1ec] sm:$0xff]
  %v2436 = vld [vmem:[%s8 + $0x1f4] sm:$0xf]
  %v2437 = vld [vmem:[%s8 + $0x1f8] sm:$0xff]
  %v2438 = vld [vmem:[%s8 + $0x200] sm:$0xff]
  %v2439 = vld [vmem:[%s8 + $0x208] sm:$0xff]
  %v2440 = vld [vmem:[%s8 + $0x210] sm:$0xf]
  %v2441 = vld [vmem:[%s8 + $0x214] sm:$0xff]
  %v2442 = vld [vmem:[%s8 + $0x21c] sm:$0xff]
  %v2443 = vld [vmem:[%s8 + $0x224] sm:$0xff]
  %v2444 = vld [vmem:[%s8 + $0x22c] sm:$0xf]
  %v2445 = vld [vmem:[%s8 + $0x230] sm:$0xff]
  %v2446 = vld [vmem:[%s8 + $0x238] sm:$0xff]
  %v2447 = vld [vmem:[%s8 + $0x240] sm:$0xff]
  %v2448 = vld [vmem:[%s8 + $0x248] sm:$0xf]
  %v2449 = vld [vmem:[%s8 + $0x24c] sm:$0xff]
  %v2450 = vld [vmem:[%s8 + $0x254] sm:$0xff]
  %v2451 = vld [vmem:[%s8 + $0x25c] sm:$0xff]
  %v2452 = vld [vmem:[%s8 + $0x264] sm:$0xf]
  %v2453 = vld [vmem:[%s8 + $0x268] sm:$0xff]
  %v2454 = vld [vmem:[%s8 + $0x270] sm:$0xff]
  %v2455 = vld [vmem:[%s8 + $0x278] sm:$0xff]
  %v2456 = vld [vmem:[%s8 + $0x280] sm:$0xf]
  %v2457 = vld [vmem:[%s8 + $0x284] sm:$0xff]
  %v2458 = vld [vmem:[%s8 + $0x28c] sm:$0xff]
  %v2459 = vld [vmem:[%s8 + $0x294] sm:$0xff]
  %v2460 = vld [vmem:[%s8 + $0x29c] sm:$0xf]
  %v2461 = vld [vmem:[%s8 + $0x2a0] sm:$0xff]
  %v2462 = vld [vmem:[%s8 + $0x2a8] sm:$0xff]
  %v2463 = vld [vmem:[%s8 + $0x2b0] sm:$0xff]
  %v2464 = vld [vmem:[%s8 + $0x2b8] sm:$0xf]
  %v2465 = vld [vmem:[%s8 + $0x2bc] sm:$0xff]
  %v2466 = vld [vmem:[%s8 + $0x2c4] sm:$0xff]
  %v2467 = vld [vmem:[%s8 + $0x2cc] sm:$0xff]
  %v2468 = vld [vmem:[%s8 + $0x2d4] sm:$0xf]
  %v2469 = vld [vmem:[%s8 + $0x2d8] sm:$0xff]
  %v2470 = vld [vmem:[%s8 + $0x2e0] sm:$0xff]
  %v2471 = vld [vmem:[%s8 + $0x2e8] sm:$0xff]
  %v2472 = vld [vmem:[%s8 + $0x2f0] sm:$0xf]
  %v2473 = vld [vmem:[%s8 + $0x2f4] sm:$0xff]
  %v2474 = vld [vmem:[%s8 + $0x2fc] sm:$0xff]
  %v2475 = vld [vmem:[%s8 + $0x304] sm:$0xff]
  %v2476 = vld [vmem:[%s8 + $0x30c] sm:$0xf]
  %v2477 = vld [vmem:[%s8 + $0x310] sm:$0xff]
  %v2478 = vld [vmem:[%s8 + $0x318] sm:$0xff]
  %v2479 = vld [vmem:[%s8 + $0x320] sm:$0xff]
  %v2480 = vld [vmem:[%s8 + $0x328] sm:$0xf]
  %v2481 = vld [vmem:[%s8 + $0x32c] sm:$0xff]
  %v2482 = vld [vmem:[%s8 + $0x334] sm:$0xff]
  %v2483 = vld [vmem:[%s8 + $0x33c] sm:$0xff]
  %v2484 = vld [vmem:[%s8 + $0x344] sm:$0xf]
  %v2485 = vld [vmem:[%s8 + $0x348] sm:$0xff]
  %v2486 = vld [vmem:[%s8 + $0x350] sm:$0xff]
  %v2487 = vld [vmem:[%s8 + $0x358] sm:$0xff]
  %v2488 = vld [vmem:[%s8 + $0x360] sm:$0xf]
  %v2489 = vld [vmem:[%s8 + $0x364] sm:$0xff]
  %v2490 = vld [vmem:[%s8 + $0x36c] sm:$0xff]
  %v2491 = vld [vmem:[%s8 + $0x374] sm:$0xff]
  %v2492 = vld [vmem:[%s8 + $0x37c] sm:$0xf]
  %v2493 = vld [vmem:[%s8 + $0x380] sm:$0xff]
  %v2494 = vld [vmem:[%s8 + $0x388] sm:$0xff]
  %v2495 = vld [vmem:[%s8 + $0x390] sm:$0xff]
  %v2496 = vld [vmem:[%s8 + $0x398] sm:$0xf]
  %v2497 = vld [vmem:[%s8 + $0x39c] sm:$0xff]
  %v2498 = vld [vmem:[%s8 + $0x3a4] sm:$0xff]
  %v2499 = vld [vmem:[%s8 + $0x3ac] sm:$0xff]
  %v2500 = vld [vmem:[%s8 + $0x3b4] sm:$0xf]
  %v2501 = vld [vmem:[%s8 + $0x3b8] sm:$0xff]
  %v2502 = vld [vmem:[%s8 + $0x3c0] sm:$0xff]
  %v2503 = vld [vmem:[%s8 + $0x3c8] sm:$0xff]
  %v2504 = vld [vmem:[%s8 + $0x3d0] sm:$0xf]
  %v2505 = vld [vmem:[%s8 + $0x3d4] sm:$0xff]
  %v2506 = vld [vmem:[%s8 + $0x3dc] sm:$0xff]
  %v2507 = vld [vmem:[%s8 + $0x3e4] sm:$0xff]
  %v2508 = vld [vmem:[%s8 + $0x3ec] sm:$0xf]
  %v2509 = vld [vmem:[%s8 + $0x3f0] sm:$0xff]
  %v2510 = vld [vmem:[%s8 + $0x3f8] sm:$0xff]
  %v2511 = vld [vmem:[%s8 + $0x400] sm:$0xff]
  %v2512 = vld [vmem:[%s8 + $0x408] sm:$0xf]
  %v2513 = vld [vmem:[%s8 + $0x40c] sm:$0xff]
  %v2514 = vld [vmem:[%s8 + $0x414] sm:$0xff]
  %v2515 = vld [vmem:[%s8 + $0x41c] sm:$0xff]
  %v2516 = vld [vmem:[%s8 + $0x424] sm:$0xf]
  %v2517 = vld [vmem:[%s8 + $0x428] sm:$0xff]
  %v2518 = vld [vmem:[%s8 + $0x430] sm:$0xff]
  %v2519 = vld [vmem:[%s8 + $0x438] sm:$0xff]
  %v2520 = vld [vmem:[%s8 + $0x440] sm:$0xf]
  %v2521 = vld [vmem:[%s8 + $0x444] sm:$0xff]
  %v2522 = vld [vmem:[%s8 + $0x44c] sm:$0xff]
  %v2523 = vld [vmem:[%s8 + $0x454] sm:$0xff]
  %v2524 = vld [vmem:[%s8 + $0x45c] sm:$0xf]
  %v2525 = vld [vmem:[%s8 + $0x460] sm:$0xff]
  %v2526 = vld [vmem:[%s8 + $0x468] sm:$0xff]
  %v2527 = vld [vmem:[%s8 + $0x470] sm:$0xff]
  %v2528 = vld [vmem:[%s8 + $0x478] sm:$0xf]
  %v2529 = vld [vmem:[%s8 + $0x47c] sm:$0xff]
  %v2530 = vld [vmem:[%s8 + $0x484] sm:$0xff]
  %v2531 = vld [vmem:[%s8 + $0x48c] sm:$0xff]
  %v2532 = vld [vmem:[%s8 + $0x494] sm:$0xf]
  %v2533 = vld [vmem:[%s8 + $0x498] sm:$0xff]
  %v2534 = vld [vmem:[%s8 + $0x4a0] sm:$0xff]
  %v2535 = vld [vmem:[%s8 + $0x4a8] sm:$0xff]
  %v2536 = vld [vmem:[%s8 + $0x4b0] sm:$0xf]
  %v2537 = vld [vmem:[%s8 + $0x4b4] sm:$0xff]
  %v2538 = vld [vmem:[%s8 + $0x4bc] sm:$0xff]
  %v2539 = vld [vmem:[%s8 + $0x4c4] sm:$0xff]
  %v2540 = vld [vmem:[%s8 + $0x4cc] sm:$0xf]
  %v2541 = vld [vmem:[%s8 + $0x4d0] sm:$0xff]
  %v2542 = vld [vmem:[%s8 + $0x4d8] sm:$0xff]
  %v2543 = vld [vmem:[%s8 + $0x4e0] sm:$0xff]
  %v2544 = vld [vmem:[%s8 + $0x4e8] sm:$0xf]
  %v2545 = vld [vmem:[%s8 + $0x4ec] sm:$0xff]
  %v2546 = vld [vmem:[%s8 + $0x4f4] sm:$0xff]
  %v2547 = vld [vmem:[%s8 + $0x4fc] sm:$0xff]
  %v2548 = vld [vmem:[%s8 + $0x504] sm:$0xf]
  %v2549 = vld [vmem:[%s8 + $0x508] sm:$0xff]
  %v2550 = vld [vmem:[%s8 + $0x510] sm:$0xff]
  %v2551 = vld [vmem:[%s8 + $0x518] sm:$0xff]
  %v2552 = vld [vmem:[%s8 + $0x520] sm:$0xf]
  %v2553 = vld [vmem:[%s8 + $0x524] sm:$0xff]
  %v2554 = vld [vmem:[%s8 + $0x52c] sm:$0xff]
  %v2555 = vld [vmem:[%s8 + $0x534] sm:$0xff]
  %v2556 = vld [vmem:[%s8 + $0x53c] sm:$0xf]
  %v2557 = vld [vmem:[%s8 + $0x540] sm:$0xff]
  %v2558 = vld [vmem:[%s8 + $0x548] sm:$0xff]
  %v2559 = vld [vmem:[%s8 + $0x550] sm:$0xff]
  %v2560 = vld [vmem:[%s8 + $0x558] sm:$0xf]
  %v2561 = vld [vmem:[%s8 + $0x55c] sm:$0xff]
  %v2562 = vld [vmem:[%s8 + $0x564] sm:$0xff]
  %v2563 = vld [vmem:[%s8 + $0x56c] sm:$0xff]
  %v2564 = vld [vmem:[%s8 + $0x574] sm:$0xf]
  %v2565 = vld [vmem:[%s9] sm:$0x7f]
  %v2567 = vlaneseq
  %v2568 = vshrl.u32 %v2567, 7
  %v2569 = vsub.s32 0, %v2568
  %v2570 = vrot.slane %v2565, %v2569
  %v2571 = vlaneseq
  %v2572 = vshrl.u32 %v2571, 7
  %v2573 = vsub.s32 1, %v2572
  %v2574 = vrot.slane %v2565, %v2573
  %v2575 = vlaneseq
  %v2576 = vshrl.u32 %v2575, 7
  %v2577 = vsub.s32 2, %v2576
  %v2578 = vrot.slane %v2565, %v2577
  %v2579 = vlaneseq
  %v2580 = vshrl.u32 %v2579, 7
  %v2581 = vsub.s32 3, %v2580
  %v2582 = vrot.slane %v2565, %v2581
  %v2583 = vlaneseq
  %v2584 = vshrl.u32 %v2583, 7
  %v2585 = vsub.s32 4, %v2584
  %v2586 = vrot.slane %v2565, %v2585
  %v2587 = vlaneseq
  %v2588 = vshrl.u32 %v2587, 7
  %v2589 = vsub.s32 5, %v2588
  %v2590 = vrot.slane %v2565, %v2589
  %v2591 = vlaneseq
  %v2592 = vshrl.u32 %v2591, 7
  %v2593 = vsub.s32 6, %v2592
  %v2594 = vrot.slane %v2565, %v2593
  %v2802 = vunpack.c.l.b16 %v2365
  %v2803 = vunpack.c.h.b16 %v2365
  %v2804 = vunpack.c.l.b16 %v2366
  %v2805 = vunpack.c.h.b16 %v2366
  %v2806 = vunpack.c.l.b16 %v2367
  %v2807 = vunpack.c.h.b16 %v2367
  %v2808 = vunpack.c.l.b16 %v2368
  %v2809 = vunpack.c.l.b16 %v2369
  %v2810 = vunpack.c.h.b16 %v2369
  %v2811 = vunpack.c.l.b16 %v2370
  %v2812 = vunpack.c.h.b16 %v2370
  %v2813 = vunpack.c.l.b16 %v2371
  %v2814 = vunpack.c.h.b16 %v2371
  %v2815 = vunpack.c.l.b16 %v2372
  %v2816 = vunpack.c.l.b16 %v2373
  %v2817 = vunpack.c.h.b16 %v2373
  %v2818 = vunpack.c.l.b16 %v2374
  %v2819 = vunpack.c.h.b16 %v2374
  %v2820 = vunpack.c.l.b16 %v2375
  %v2821 = vunpack.c.h.b16 %v2375
  %v2822 = vunpack.c.l.b16 %v2376
  %v2823 = vunpack.c.l.b16 %v2377
  %v2824 = vunpack.c.h.b16 %v2377
  %v2825 = vunpack.c.l.b16 %v2378
  %v2826 = vunpack.c.h.b16 %v2378
  %v2827 = vunpack.c.l.b16 %v2379
  %v2828 = vunpack.c.h.b16 %v2379
  %v2829 = vunpack.c.l.b16 %v2380
  %v2830 = vunpack.c.l.b16 %v2381
  %v2831 = vunpack.c.h.b16 %v2381
  %v2832 = vunpack.c.l.b16 %v2382
  %v2833 = vunpack.c.h.b16 %v2382
  %v2834 = vunpack.c.l.b16 %v2383
  %v2835 = vunpack.c.h.b16 %v2383
  %v2836 = vunpack.c.l.b16 %v2384
  %v2837 = vunpack.c.l.b16 %v2385
  %v2838 = vunpack.c.h.b16 %v2385
  %v2839 = vunpack.c.l.b16 %v2386
  %v2840 = vunpack.c.h.b16 %v2386
  %v2841 = vunpack.c.l.b16 %v2387
  %v2842 = vunpack.c.h.b16 %v2387
  %v2843 = vunpack.c.l.b16 %v2388
  %v2844 = vunpack.c.l.b16 %v2389
  %v2845 = vunpack.c.h.b16 %v2389
  %v2846 = vunpack.c.l.b16 %v2390
  %v2847 = vunpack.c.h.b16 %v2390
  %v2848 = vunpack.c.l.b16 %v2391
  %v2849 = vunpack.c.h.b16 %v2391
  %v2850 = vunpack.c.l.b16 %v2392
  %v2851 = vunpack.c.l.b16 %v2393
  %v2852 = vunpack.c.h.b16 %v2393
  %v2853 = vunpack.c.l.b16 %v2394
  %v2854 = vunpack.c.h.b16 %v2394
  %v2855 = vunpack.c.l.b16 %v2395
  %v2856 = vunpack.c.h.b16 %v2395
  %v2857 = vunpack.c.l.b16 %v2396
  %v2858 = vunpack.c.l.b16 %v2397
  %v2859 = vunpack.c.h.b16 %v2397
  %v2860 = vunpack.c.l.b16 %v2398
  %v2861 = vunpack.c.h.b16 %v2398
  %v2862 = vunpack.c.l.b16 %v2399
  %v2863 = vunpack.c.h.b16 %v2399
  %v2864 = vunpack.c.l.b16 %v2400
  %v2865 = vunpack.c.l.b16 %v2401
  %v2866 = vunpack.c.h.b16 %v2401
  %v2867 = vunpack.c.l.b16 %v2402
  %v2868 = vunpack.c.h.b16 %v2402
  %v2869 = vunpack.c.l.b16 %v2403
  %v2870 = vunpack.c.h.b16 %v2403
  %v2871 = vunpack.c.l.b16 %v2404
  %v2872 = vunpack.c.l.b16 %v2405
  %v2873 = vunpack.c.h.b16 %v2405
  %v2874 = vunpack.c.l.b16 %v2406
  %v2875 = vunpack.c.h.b16 %v2406
  %v2876 = vunpack.c.l.b16 %v2407
  %v2877 = vunpack.c.h.b16 %v2407
  %v2878 = vunpack.c.l.b16 %v2408
  %v2879 = vunpack.c.l.b16 %v2409
  %v2880 = vunpack.c.h.b16 %v2409
  %v2881 = vunpack.c.l.b16 %v2410
  %v2882 = vunpack.c.h.b16 %v2410
  %v2883 = vunpack.c.l.b16 %v2411
  %v2884 = vunpack.c.h.b16 %v2411
  %v2885 = vunpack.c.l.b16 %v2412
  %v2886 = vunpack.c.l.b16 %v2413
  %v2887 = vunpack.c.h.b16 %v2413
  %v2888 = vunpack.c.l.b16 %v2414
  %v2889 = vunpack.c.h.b16 %v2414
  %v2890 = vunpack.c.l.b16 %v2415
  %v2891 = vunpack.c.h.b16 %v2415
  %v2892 = vunpack.c.l.b16 %v2416
  %v2893 = vunpack.c.l.b16 %v2417
  %v2894 = vunpack.c.h.b16 %v2417
  %v2895 = vunpack.c.l.b16 %v2418
  %v2896 = vunpack.c.h.b16 %v2418
  %v2897 = vunpack.c.l.b16 %v2419
  %v2898 = vunpack.c.h.b16 %v2419
  %v2899 = vunpack.c.l.b16 %v2420
  %v2900 = vunpack.c.l.b16 %v2421
  %v2901 = vunpack.c.h.b16 %v2421
  %v2902 = vunpack.c.l.b16 %v2422
  %v2903 = vunpack.c.h.b16 %v2422
  %v2904 = vunpack.c.l.b16 %v2423
  %v2905 = vunpack.c.h.b16 %v2423
  %v2906 = vunpack.c.l.b16 %v2424
  %v2907 = vunpack.c.l.b16 %v2425
  %v2908 = vunpack.c.h.b16 %v2425
  %v2909 = vunpack.c.l.b16 %v2426
  %v2910 = vunpack.c.h.b16 %v2426
  %v2911 = vunpack.c.l.b16 %v2427
  %v2912 = vunpack.c.h.b16 %v2427
  %v2913 = vunpack.c.l.b16 %v2428
  %v2914 = vunpack.c.l.b16 %v2429
  %v2915 = vunpack.c.h.b16 %v2429
  %v2916 = vunpack.c.l.b16 %v2430
  %v2917 = vunpack.c.h.b16 %v2430
  %v2918 = vunpack.c.l.b16 %v2431
  %v2919 = vunpack.c.h.b16 %v2431
  %v2920 = vunpack.c.l.b16 %v2432
  %v2921 = vunpack.c.l.b16 %v2433
  %v2922 = vunpack.c.h.b16 %v2433
  %v2923 = vunpack.c.l.b16 %v2434
  %v2924 = vunpack.c.h.b16 %v2434
  %v2925 = vunpack.c.l.b16 %v2435
  %v2926 = vunpack.c.h.b16 %v2435
  %v2927 = vunpack.c.l.b16 %v2436
  %v2928 = vunpack.c.l.b16 %v2437
  %v2929 = vunpack.c.h.b16 %v2437
  %v2930 = vunpack.c.l.b16 %v2438
  %v2931 = vunpack.c.h.b16 %v2438
  %v2932 = vunpack.c.l.b16 %v2439
  %v2933 = vunpack.c.h.b16 %v2439
  %v2934 = vunpack.c.l.b16 %v2440
  %v2935 = vunpack.c.l.b16 %v2441
  %v2936 = vunpack.c.h.b16 %v2441
  %v2937 = vunpack.c.l.b16 %v2442
  %v2938 = vunpack.c.h.b16 %v2442
  %v2939 = vunpack.c.l.b16 %v2443
  %v2940 = vunpack.c.h.b16 %v2443
  %v2941 = vunpack.c.l.b16 %v2444
  %v2942 = vunpack.c.l.b16 %v2445
  %v2943 = vunpack.c.h.b16 %v2445
  %v2944 = vunpack.c.l.b16 %v2446
  %v2945 = vunpack.c.h.b16 %v2446
  %v2946 = vunpack.c.l.b16 %v2447
  %v2947 = vunpack.c.h.b16 %v2447
  %v2948 = vunpack.c.l.b16 %v2448
  %v2949 = vunpack.c.l.b16 %v2449
  %v2950 = vunpack.c.h.b16 %v2449
  %v2951 = vunpack.c.l.b16 %v2450
  %v2952 = vunpack.c.h.b16 %v2450
  %v2953 = vunpack.c.l.b16 %v2451
  %v2954 = vunpack.c.h.b16 %v2451
  %v2955 = vunpack.c.l.b16 %v2452
  %v2956 = vunpack.c.l.b16 %v2453
  %v2957 = vunpack.c.h.b16 %v2453
  %v2958 = vunpack.c.l.b16 %v2454
  %v2959 = vunpack.c.h.b16 %v2454
  %v2960 = vunpack.c.l.b16 %v2455
  %v2961 = vunpack.c.h.b16 %v2455
  %v2962 = vunpack.c.l.b16 %v2456
  %v2963 = vunpack.c.l.b16 %v2457
  %v2964 = vunpack.c.h.b16 %v2457
  %v2965 = vunpack.c.l.b16 %v2458
  %v2966 = vunpack.c.h.b16 %v2458
  %v2967 = vunpack.c.l.b16 %v2459
  %v2968 = vunpack.c.h.b16 %v2459
  %v2969 = vunpack.c.l.b16 %v2460
  %v2970 = vunpack.c.l.b16 %v2461
  %v2971 = vunpack.c.h.b16 %v2461
  %v2972 = vunpack.c.l.b16 %v2462
  %v2973 = vunpack.c.h.b16 %v2462
  %v2974 = vunpack.c.l.b16 %v2463
  %v2975 = vunpack.c.h.b16 %v2463
  %v2976 = vunpack.c.l.b16 %v2464
  %v2977 = vunpack.c.l.b16 %v2465
  %v2978 = vunpack.c.h.b16 %v2465
  %v2979 = vunpack.c.l.b16 %v2466
  %v2980 = vunpack.c.h.b16 %v2466
  %v2981 = vunpack.c.l.b16 %v2467
  %v2982 = vunpack.c.h.b16 %v2467
  %v2983 = vunpack.c.l.b16 %v2468
  %v2984 = vunpack.c.l.b16 %v2469
  %v2985 = vunpack.c.h.b16 %v2469
  %v2986 = vunpack.c.l.b16 %v2470
  %v2987 = vunpack.c.h.b16 %v2470
  %v2988 = vunpack.c.l.b16 %v2471
  %v2989 = vunpack.c.h.b16 %v2471
  %v2990 = vunpack.c.l.b16 %v2472
  %v2991 = vunpack.c.l.b16 %v2473
  %v2992 = vunpack.c.h.b16 %v2473
  %v2993 = vunpack.c.l.b16 %v2474
  %v2994 = vunpack.c.h.b16 %v2474
  %v2995 = vunpack.c.l.b16 %v2475
  %v2996 = vunpack.c.h.b16 %v2475
  %v2997 = vunpack.c.l.b16 %v2476
  %v2998 = vunpack.c.l.b16 %v2477
  %v2999 = vunpack.c.h.b16 %v2477
  %v3000 = vunpack.c.l.b16 %v2478
  %v3001 = vunpack.c.h.b16 %v2478
  %v3002 = vunpack.c.l.b16 %v2479
  %v3003 = vunpack.c.h.b16 %v2479
  %v3004 = vunpack.c.l.b16 %v2480
  %v3005 = vunpack.c.l.b16 %v2481
  %v3006 = vunpack.c.h.b16 %v2481
  %v3007 = vunpack.c.l.b16 %v2482
  %v3008 = vunpack.c.h.b16 %v2482
  %v3009 = vunpack.c.l.b16 %v2483
  %v3010 = vunpack.c.h.b16 %v2483
  %v3011 = vunpack.c.l.b16 %v2484
  %v3012 = vunpack.c.l.b16 %v2485
  %v3013 = vunpack.c.h.b16 %v2485
  %v3014 = vunpack.c.l.b16 %v2486
  %v3015 = vunpack.c.h.b16 %v2486
  %v3016 = vunpack.c.l.b16 %v2487
  %v3017 = vunpack.c.h.b16 %v2487
  %v3018 = vunpack.c.l.b16 %v2488
  %v3019 = vunpack.c.l.b16 %v2489
  %v3020 = vunpack.c.h.b16 %v2489
  %v3021 = vunpack.c.l.b16 %v2490
  %v3022 = vunpack.c.h.b16 %v2490
  %v3023 = vunpack.c.l.b16 %v2491
  %v3024 = vunpack.c.h.b16 %v2491
  %v3025 = vunpack.c.l.b16 %v2492
  %v3026 = vunpack.c.l.b16 %v2493
  %v3027 = vunpack.c.h.b16 %v2493
  %v3028 = vunpack.c.l.b16 %v2494
  %v3029 = vunpack.c.h.b16 %v2494
  %v3030 = vunpack.c.l.b16 %v2495
  %v3031 = vunpack.c.h.b16 %v2495
  %v3032 = vunpack.c.l.b16 %v2496
  %v3033 = vunpack.c.l.b16 %v2497
  %v3034 = vunpack.c.h.b16 %v2497
  %v3035 = vunpack.c.l.b16 %v2498
  %v3036 = vunpack.c.h.b16 %v2498
  %v3037 = vunpack.c.l.b16 %v2499
  %v3038 = vunpack.c.h.b16 %v2499
  %v3039 = vunpack.c.l.b16 %v2500
  %v3040 = vunpack.c.l.b16 %v2501
  %v3041 = vunpack.c.h.b16 %v2501
  %v3042 = vunpack.c.l.b16 %v2502
  %v3043 = vunpack.c.h.b16 %v2502
  %v3044 = vunpack.c.l.b16 %v2503
  %v3045 = vunpack.c.h.b16 %v2503
  %v3046 = vunpack.c.l.b16 %v2504
  %v3047 = vunpack.c.l.b16 %v2505
  %v3048 = vunpack.c.h.b16 %v2505
  %v3049 = vunpack.c.l.b16 %v2506
  %v3050 = vunpack.c.h.b16 %v2506
  %v3051 = vunpack.c.l.b16 %v2507
  %v3052 = vunpack.c.h.b16 %v2507
  %v3053 = vunpack.c.l.b16 %v2508
  %v3054 = vunpack.c.l.b16 %v2509
  %v3055 = vunpack.c.h.b16 %v2509
  %v3056 = vunpack.c.l.b16 %v2510
  %v3057 = vunpack.c.h.b16 %v2510
  %v3058 = vunpack.c.l.b16 %v2511
  %v3059 = vunpack.c.h.b16 %v2511
  %v3060 = vunpack.c.l.b16 %v2512
  %v3061 = vunpack.c.l.b16 %v2513
  %v3062 = vunpack.c.h.b16 %v2513
  %v3063 = vunpack.c.l.b16 %v2514
  %v3064 = vunpack.c.h.b16 %v2514
  %v3065 = vunpack.c.l.b16 %v2515
  %v3066 = vunpack.c.h.b16 %v2515
  %v3067 = vunpack.c.l.b16 %v2516
  %v3068 = vunpack.c.l.b16 %v2517
  %v3069 = vunpack.c.h.b16 %v2517
  %v3070 = vunpack.c.l.b16 %v2518
  %v3071 = vunpack.c.h.b16 %v2518
  %v3072 = vunpack.c.l.b16 %v2519
  %v3073 = vunpack.c.h.b16 %v2519
  %v3074 = vunpack.c.l.b16 %v2520
  %v3075 = vunpack.c.l.b16 %v2521
  %v3076 = vunpack.c.h.b16 %v2521
  %v3077 = vunpack.c.l.b16 %v2522
  %v3078 = vunpack.c.h.b16 %v2522
  %v3079 = vunpack.c.l.b16 %v2523
  %v3080 = vunpack.c.h.b16 %v2523
  %v3081 = vunpack.c.l.b16 %v2524
  %v3082 = vunpack.c.l.b16 %v2525
  %v3083 = vunpack.c.h.b16 %v2525
  %v3084 = vunpack.c.l.b16 %v2526
  %v3085 = vunpack.c.h.b16 %v2526
  %v3086 = vunpack.c.l.b16 %v2527
  %v3087 = vunpack.c.h.b16 %v2527
  %v3088 = vunpack.c.l.b16 %v2528
  %v3089 = vunpack.c.l.b16 %v2529
  %v3090 = vunpack.c.h.b16 %v2529
  %v3091 = vunpack.c.l.b16 %v2530
  %v3092 = vunpack.c.h.b16 %v2530
  %v3093 = vunpack.c.l.b16 %v2531
  %v3094 = vunpack.c.h.b16 %v2531
  %v3095 = vunpack.c.l.b16 %v2532
  %v3096 = vunpack.c.l.b16 %v2533
  %v3097 = vunpack.c.h.b16 %v2533
  %v3098 = vunpack.c.l.b16 %v2534
  %v3099 = vunpack.c.h.b16 %v2534
  %v3100 = vunpack.c.l.b16 %v2535
  %v3101 = vunpack.c.h.b16 %v2535
  %v3102 = vunpack.c.l.b16 %v2536
  %v3103 = vunpack.c.l.b16 %v2537
  %v3104 = vunpack.c.h.b16 %v2537
  %v3105 = vunpack.c.l.b16 %v2538
  %v3106 = vunpack.c.h.b16 %v2538
  %v3107 = vunpack.c.l.b16 %v2539
  %v3108 = vunpack.c.h.b16 %v2539
  %v3109 = vunpack.c.l.b16 %v2540
  %v3110 = vunpack.c.l.b16 %v2541
  %v3111 = vunpack.c.h.b16 %v2541
  %v3112 = vunpack.c.l.b16 %v2542
  %v3113 = vunpack.c.h.b16 %v2542
  %v3114 = vunpack.c.l.b16 %v2543
  %v3115 = vunpack.c.h.b16 %v2543
  %v3116 = vunpack.c.l.b16 %v2544
  %v3117 = vunpack.c.l.b16 %v2545
  %v3118 = vunpack.c.h.b16 %v2545
  %v3119 = vunpack.c.l.b16 %v2546
  %v3120 = vunpack.c.h.b16 %v2546
  %v3121 = vunpack.c.l.b16 %v2547
  %v3122 = vunpack.c.h.b16 %v2547
  %v3123 = vunpack.c.l.b16 %v2548
  %v3124 = vunpack.c.l.b16 %v2549
  %v3125 = vunpack.c.h.b16 %v2549
  %v3126 = vunpack.c.l.b16 %v2550
  %v3127 = vunpack.c.h.b16 %v2550
  %v3128 = vunpack.c.l.b16 %v2551
  %v3129 = vunpack.c.h.b16 %v2551
  %v3130 = vunpack.c.l.b16 %v2552
  %v3131 = vunpack.c.l.b16 %v2553
  %v3132 = vunpack.c.h.b16 %v2553
  %v3133 = vunpack.c.l.b16 %v2554
  %v3134 = vunpack.c.h.b16 %v2554
  %v3135 = vunpack.c.l.b16 %v2555
  %v3136 = vunpack.c.h.b16 %v2555
  %v3137 = vunpack.c.l.b16 %v2556
  %v3138 = vunpack.c.l.b16 %v2557
  %v3139 = vunpack.c.h.b16 %v2557
  %v3140 = vunpack.c.l.b16 %v2558
  %v3141 = vunpack.c.h.b16 %v2558
  %v3142 = vunpack.c.l.b16 %v2559
  %v3143 = vunpack.c.h.b16 %v2559
  %v3144 = vunpack.c.l.b16 %v2560
  %v3145 = vunpack.c.l.b16 %v2561
  %v3146 = vunpack.c.h.b16 %v2561
  %v3147 = vunpack.c.l.b16 %v2562
  %v3148 = vunpack.c.h.b16 %v2562
  %v3149 = vunpack.c.l.b16 %v2563
  %v3150 = vunpack.c.h.b16 %v2563
  %v3151 = vunpack.c.l.b16 %v2564
  %v3152 = vpack.c.b16 %v2809, %v2802
  %v3153 = vpack.c.b16 %v2810, %v2803
  %v3154 = vpack.c.b16 %v2811, %v2804
  %v3155 = vpack.c.b16 %v2812, %v2805
  %v3156 = vpack.c.b16 %v2813, %v2806
  %v3157 = vpack.c.b16 %v2814, %v2807
  %v3158 = vpack.c.b16 %v2815, %v2808
  %v3159 = vpack.c.b16 %v2823, %v2816
  %v3160 = vpack.c.b16 %v2824, %v2817
  %v3161 = vpack.c.b16 %v2825, %v2818
  %v3162 = vpack.c.b16 %v2826, %v2819
  %v3163 = vpack.c.b16 %v2827, %v2820
  %v3164 = vpack.c.b16 %v2828, %v2821
  %v3165 = vpack.c.b16 %v2829, %v2822
  %v3166 = vpack.c.b16 %v2837, %v2830
  %v3167 = vpack.c.b16 %v2838, %v2831
  %v3168 = vpack.c.b16 %v2839, %v2832
  %v3169 = vpack.c.b16 %v2840, %v2833
  %v3170 = vpack.c.b16 %v2841, %v2834
  %v3171 = vpack.c.b16 %v2842, %v2835
  %v3172 = vpack.c.b16 %v2843, %v2836
  %v3173 = vpack.c.b16 %v2851, %v2844
  %v3174 = vpack.c.b16 %v2852, %v2845
  %v3175 = vpack.c.b16 %v2853, %v2846
  %v3176 = vpack.c.b16 %v2854, %v2847
  %v3177 = vpack.c.b16 %v2855, %v2848
  %v3178 = vpack.c.b16 %v2856, %v2849
  %v3179 = vpack.c.b16 %v2857, %v2850
  %v3180 = vpack.c.b16 %v2865, %v2858
  %v3181 = vpack.c.b16 %v2866, %v2859
  %v3182 = vpack.c.b16 %v2867, %v2860
  %v3183 = vpack.c.b16 %v2868, %v2861
  %v3184 = vpack.c.b16 %v2869, %v2862
  %v3185 = vpack.c.b16 %v2870, %v2863
  %v3186 = vpack.c.b16 %v2871, %v2864
  %v3187 = vpack.c.b16 %v2879, %v2872
  %v3188 = vpack.c.b16 %v2880, %v2873
  %v3189 = vpack.c.b16 %v2881, %v2874
  %v3190 = vpack.c.b16 %v2882, %v2875
  %v3191 = vpack.c.b16 %v2883, %v2876
  %v3192 = vpack.c.b16 %v2884, %v2877
  %v3193 = vpack.c.b16 %v2885, %v2878
  %v3194 = vpack.c.b16 %v2893, %v2886
  %v3195 = vpack.c.b16 %v2894, %v2887
  %v3196 = vpack.c.b16 %v2895, %v2888
  %v3197 = vpack.c.b16 %v2896, %v2889
  %v3198 = vpack.c.b16 %v2897, %v2890
  %v3199 = vpack.c.b16 %v2898, %v2891
  %v3200 = vpack.c.b16 %v2899, %v2892
  %v3201 = vpack.c.b16 %v2907, %v2900
  %v3202 = vpack.c.b16 %v2908, %v2901
  %v3203 = vpack.c.b16 %v2909, %v2902
  %v3204 = vpack.c.b16 %v2910, %v2903
  %v3205 = vpack.c.b16 %v2911, %v2904
  %v3206 = vpack.c.b16 %v2912, %v2905
  %v3207 = vpack.c.b16 %v2913, %v2906
  %v3208 = vpack.c.b16 %v2921, %v2914
  %v3209 = vpack.c.b16 %v2922, %v2915
  %v3210 = vpack.c.b16 %v2923, %v2916
  %v3211 = vpack.c.b16 %v2924, %v2917
  %v3212 = vpack.c.b16 %v2925, %v2918
  %v3213 = vpack.c.b16 %v2926, %v2919
  %v3214 = vpack.c.b16 %v2927, %v2920
  %v3215 = vpack.c.b16 %v2935, %v2928
  %v3216 = vpack.c.b16 %v2936, %v2929
  %v3217 = vpack.c.b16 %v2937, %v2930
  %v3218 = vpack.c.b16 %v2938, %v2931
  %v3219 = vpack.c.b16 %v2939, %v2932
  %v3220 = vpack.c.b16 %v2940, %v2933
  %v3221 = vpack.c.b16 %v2941, %v2934
  %v3222 = vpack.c.b16 %v2949, %v2942
  %v3223 = vpack.c.b16 %v2950, %v2943
  %v3224 = vpack.c.b16 %v2951, %v2944
  %v3225 = vpack.c.b16 %v2952, %v2945
  %v3226 = vpack.c.b16 %v2953, %v2946
  %v3227 = vpack.c.b16 %v2954, %v2947
  %v3228 = vpack.c.b16 %v2955, %v2948
  %v3229 = vpack.c.b16 %v2963, %v2956
  %v3230 = vpack.c.b16 %v2964, %v2957
  %v3231 = vpack.c.b16 %v2965, %v2958
  %v3232 = vpack.c.b16 %v2966, %v2959
  %v3233 = vpack.c.b16 %v2967, %v2960
  %v3234 = vpack.c.b16 %v2968, %v2961
  %v3235 = vpack.c.b16 %v2969, %v2962
  %v3236 = vpack.c.b16 %v2977, %v2970
  %v3237 = vpack.c.b16 %v2978, %v2971
  %v3238 = vpack.c.b16 %v2979, %v2972
  %v3239 = vpack.c.b16 %v2980, %v2973
  %v3240 = vpack.c.b16 %v2981, %v2974
  %v3241 = vpack.c.b16 %v2982, %v2975
  %v3242 = vpack.c.b16 %v2983, %v2976
  %v3243 = vpack.c.b16 %v2991, %v2984
  %v3244 = vpack.c.b16 %v2992, %v2985
  %v3245 = vpack.c.b16 %v2993, %v2986
  %v3246 = vpack.c.b16 %v2994, %v2987
  %v3247 = vpack.c.b16 %v2995, %v2988
  %v3248 = vpack.c.b16 %v2996, %v2989
  %v3249 = vpack.c.b16 %v2997, %v2990
  %v3250 = vpack.c.b16 %v3005, %v2998
  %v3251 = vpack.c.b16 %v3006, %v2999
  %v3252 = vpack.c.b16 %v3007, %v3000
  %v3253 = vpack.c.b16 %v3008, %v3001
  %v3254 = vpack.c.b16 %v3009, %v3002
  %v3255 = vpack.c.b16 %v3010, %v3003
  %v3256 = vpack.c.b16 %v3011, %v3004
  %v3257 = vpack.c.b16 %v3019, %v3012
  %v3258 = vpack.c.b16 %v3020, %v3013
  %v3259 = vpack.c.b16 %v3021, %v3014
  %v3260 = vpack.c.b16 %v3022, %v3015
  %v3261 = vpack.c.b16 %v3023, %v3016
  %v3262 = vpack.c.b16 %v3024, %v3017
  %v3263 = vpack.c.b16 %v3025, %v3018
  %v3264 = vpack.c.b16 %v3033, %v3026
  %v3265 = vpack.c.b16 %v3034, %v3027
  %v3266 = vpack.c.b16 %v3035, %v3028
  %v3267 = vpack.c.b16 %v3036, %v3029
  %v3268 = vpack.c.b16 %v3037, %v3030
  %v3269 = vpack.c.b16 %v3038, %v3031
  %v3270 = vpack.c.b16 %v3039, %v3032
  %v3271 = vpack.c.b16 %v3047, %v3040
  %v3272 = vpack.c.b16 %v3048, %v3041
  %v3273 = vpack.c.b16 %v3049, %v3042
  %v3274 = vpack.c.b16 %v3050, %v3043
  %v3275 = vpack.c.b16 %v3051, %v3044
  %v3276 = vpack.c.b16 %v3052, %v3045
  %v3277 = vpack.c.b16 %v3053, %v3046
  %v3278 = vpack.c.b16 %v3061, %v3054
  %v3279 = vpack.c.b16 %v3062, %v3055
  %v3280 = vpack.c.b16 %v3063, %v3056
  %v3281 = vpack.c.b16 %v3064, %v3057
  %v3282 = vpack.c.b16 %v3065, %v3058
  %v3283 = vpack.c.b16 %v3066, %v3059
  %v3284 = vpack.c.b16 %v3067, %v3060
  %v3285 = vpack.c.b16 %v3075, %v3068
  %v3286 = vpack.c.b16 %v3076, %v3069
  %v3287 = vpack.c.b16 %v3077, %v3070
  %v3288 = vpack.c.b16 %v3078, %v3071
  %v3289 = vpack.c.b16 %v3079, %v3072
  %v3290 = vpack.c.b16 %v3080, %v3073
  %v3291 = vpack.c.b16 %v3081, %v3074
  %v3292 = vpack.c.b16 %v3089, %v3082
  %v3293 = vpack.c.b16 %v3090, %v3083
  %v3294 = vpack.c.b16 %v3091, %v3084
  %v3295 = vpack.c.b16 %v3092, %v3085
  %v3296 = vpack.c.b16 %v3093, %v3086
  %v3297 = vpack.c.b16 %v3094, %v3087
  %v3298 = vpack.c.b16 %v3095, %v3088
  %v3299 = vpack.c.b16 %v3103, %v3096
  %v3300 = vpack.c.b16 %v3104, %v3097
  %v3301 = vpack.c.b16 %v3105, %v3098
  %v3302 = vpack.c.b16 %v3106, %v3099
  %v3303 = vpack.c.b16 %v3107, %v3100
  %v3304 = vpack.c.b16 %v3108, %v3101
  %v3305 = vpack.c.b16 %v3109, %v3102
  %v3306 = vpack.c.b16 %v3117, %v3110
  %v3307 = vpack.c.b16 %v3118, %v3111
  %v3308 = vpack.c.b16 %v3119, %v3112
  %v3309 = vpack.c.b16 %v3120, %v3113
  %v3310 = vpack.c.b16 %v3121, %v3114
  %v3311 = vpack.c.b16 %v3122, %v3115
  %v3312 = vpack.c.b16 %v3123, %v3116
  %v3313 = vpack.c.b16 %v3131, %v3124
  %v3314 = vpack.c.b16 %v3132, %v3125
  %v3315 = vpack.c.b16 %v3133, %v3126
  %v3316 = vpack.c.b16 %v3134, %v3127
  %v3317 = vpack.c.b16 %v3135, %v3128
  %v3318 = vpack.c.b16 %v3136, %v3129
  %v3319 = vpack.c.b16 %v3137, %v3130
  %v3320 = vpack.c.b16 %v3145, %v3138
  %v3321 = vpack.c.b16 %v3146, %v3139
  %v3322 = vpack.c.b16 %v3147, %v3140
  %v3323 = vpack.c.b16 %v3148, %v3141
  %v3324 = vpack.c.b16 %v3149, %v3142
  %v3325 = vpack.c.b16 %v3150, %v3143
  %v3326 = vpack.c.b16 %v3151, %v3144
  %v3503 = vsel %vm1279, %v2364, 0
  %3505 = vmatprep.subr.bf16.mxu0 %v3202
  %3506 = vmatpush1.bf16.msra.mxu0 %v3201
  %3507 = vmatprep.subr.bf16.mxu0 %v3195
  %3508 = vmatpush1.bf16.msra.mxu0 %v3194
  %3509 = vmatprep.subr.bf16.mxu0 %v3188
  %3510 = vmatpush1.bf16.msra.mxu0 %v3187
  %3511 = vmatprep.subr.bf16.mxu0 %v3181
  %3512 = vmatpush1.bf16.msra.mxu0 %v3180
  %3513 = vmatprep.subr.bf16.mxu0 %v3174
  %3514 = vmatpush1.bf16.msra.mxu0 %v3173
  %3515 = vmatprep.subr.bf16.mxu0 %v3167
  %3516 = vmatpush1.bf16.msra.mxu0 %v3166
  %3517 = vmatprep.subr.bf16.mxu0 %v3160
  %3518 = vmatpush1.bf16.msra.mxu0 %v3159
  %3519 = vmatprep.subr.bf16.mxu0 %v3153
  %3520 = vmatpush1.bf16.msra.mxu0 %v3152
  %3521 = vmatprep.subr.bf16.mxu0 %v3258
  %3522 = vmatpush2.bf16.msra.mxu0 %v3257
  %3523 = vmatprep.subr.bf16.mxu0 %v3251
  %3524 = vmatpush2.bf16.msra.mxu0 %v3250
  %3525 = vmatprep.subr.bf16.mxu0 %v3244
  %3526 = vmatpush2.bf16.msra.mxu0 %v3243
  %3527 = vmatprep.subr.bf16.mxu0 %v3237
  %3528 = vmatpush2.bf16.msra.mxu0 %v3236
  %3529 = vmatprep.subr.bf16.mxu0 %v3230
  %3530 = vmatpush2.bf16.msra.mxu0 %v3229
  %3531 = vmatprep.subr.bf16.mxu0 %v3223
  %3532 = vmatpush2.bf16.msra.mxu0 %v3222
  %3533 = vmatprep.subr.bf16.mxu0 %v3216
  %3534 = vmatpush2.bf16.msra.mxu0 %v3215
  %3535 = vmatprep.subr.bf16.mxu0 %v3209
  %3536 = vmatpush2.bf16.msra.mxu0 %v3208
  %3537 = vmatprep.mubr.bf16.mxu0 %v2362
  %3538 = vmatmul.mubr.bf16.gmra.mxu0 %v2361
  %v3539 = vpop.f32.mrf.mxu0
  %v3540 = vadd.f32 %v2570, %v3539
  %v3541 = vpop.f32.mrf.mxu0
  %v3542 = vadd.f32 %v2574, %v3541
  %v3543 = vpop.f32.mrf.mxu0
  %v3544 = vadd.f32 %v2570, %v3543
  %v3545 = vpop.f32.mrf.mxu0
  %v3546 = vadd.f32 %v2574, %v3545
  %3547 = vdwg.mxu0
  %3548 = vmatprep.subr.bf16.mxu0 %v3314
  %3549 = vmatpush1.bf16.msra.mxu0 %v3313
  %3550 = vmatprep.subr.bf16.mxu0 %v3307
  %3551 = vmatpush1.bf16.msra.mxu0 %v3306
  %3552 = vmatprep.subr.bf16.mxu0 %v3300
  %3553 = vmatpush1.bf16.msra.mxu0 %v3299
  %3554 = vmatprep.subr.bf16.mxu0 %v3293
  %3555 = vmatpush1.bf16.msra.mxu0 %v3292
  %3556 = vmatprep.subr.bf16.mxu0 %v3286
  %3557 = vmatpush1.bf16.msra.mxu0 %v3285
  %3558 = vmatprep.subr.bf16.mxu0 %v3279
  %3559 = vmatpush1.bf16.msra.mxu0 %v3278
  %3560 = vmatprep.subr.bf16.mxu0 %v3272
  %3561 = vmatpush1.bf16.msra.mxu0 %v3271
  %3562 = vmatprep.subr.bf16.mxu0 %v3265
  %3563 = vmatpush1.bf16.msra.mxu0 %v3264
  %3564 = vmatprep.subr.bf16.mxu0 0
  %3565 = vmatpush2.bf16.msra.mxu0 0
  %3566 = vmatprep.subr.bf16.mxu0 0
  %3567 = vmatpush2.bf16.msra.mxu0 0
  %3568 = vmatprep.subr.bf16.mxu0 0
  %3569 = vmatpush2.bf16.msra.mxu0 0
  %3570 = vmatprep.subr.bf16.mxu0 0
  %3571 = vmatpush2.bf16.msra.mxu0 0
  %3572 = vmatprep.subr.bf16.mxu0 0
  %3573 = vmatpush2.bf16.msra.mxu0 0
  %3574 = vmatprep.subr.bf16.mxu0 0
  %3575 = vmatpush2.bf16.msra.mxu0 0
  %3576 = vmatprep.subr.bf16.mxu0 0
  %3577 = vmatpush2.bf16.msra.mxu0 0
  %3578 = vmatprep.subr.bf16.mxu0 %v3321
  %3579 = vmatpush2.bf16.msra.mxu0 %v3320
  %3580 = vmatprep.mubr.bf16.mxu0 %v3503
  %3581 = vmatmul.mubr.bf16.gmra.mxu0 %v2363
  %v3582 = vpop.f32.mrf.mxu0
  %v3583 = vadd.f32 %v3540, %v3582
  %v3584 = vpop.f32.mrf.mxu0
  %v3585 = vadd.f32 %v3542, %v3584
  %v3586 = vpop.f32.mrf.mxu0
  %v3587 = vadd.f32 %v3544, %v3586
  %v3588 = vpop.f32.mrf.mxu0
  %v3589 = vadd.f32 %v3546, %v3588
  %3590 = vdwg.mxu0
  %3591 = vmatprep.subr.bf16.mxu0 %v3204
  %3592 = vmatpush1.bf16.msra.mxu0 %v3203
  %3593 = vmatprep.subr.bf16.mxu0 %v3197
  %3594 = vmatpush1.bf16.msra.mxu0 %v3196
  %3595 = vmatprep.subr.bf16.mxu0 %v3190
  %3596 = vmatpush1.bf16.msra.mxu0 %v3189
  %3597 = vmatprep.subr.bf16.mxu0 %v3183
  %3598 = vmatpush1.bf16.msra.mxu0 %v3182
  %3599 = vmatprep.subr.bf16.mxu0 %v3176
  %3600 = vmatpush1.bf16.msra.mxu0 %v3175
  %3601 = vmatprep.subr.bf16.mxu0 %v3169
  %3602 = vmatpush1.bf16.msra.mxu0 %v3168
  %3603 = vmatprep.subr.bf16.mxu0 %v3162
  %3604 = vmatpush1.bf16.msra.mxu0 %v3161
  %3605 = vmatprep.subr.bf16.mxu0 %v3155
  %3606 = vmatpush1.bf16.msra.mxu0 %v3154
  %3607 = vmatprep.subr.bf16.mxu0 %v3260
  %3608 = vmatpush2.bf16.msra.mxu0 %v3259
  %3609 = vmatprep.subr.bf16.mxu0 %v3253
  %3610 = vmatpush2.bf16.msra.mxu0 %v3252
  %3611 = vmatprep.subr.bf16.mxu0 %v3246
  %3612 = vmatpush2.bf16.msra.mxu0 %v3245
  %3613 = vmatprep.subr.bf16.mxu0 %v3239
  %3614 = vmatpush2.bf16.msra.mxu0 %v3238
  %3615 = vmatprep.subr.bf16.mxu0 %v3232
  %3616 = vmatpush2.bf16.msra.mxu0 %v3231
  %3617 = vmatprep.subr.bf16.mxu0 %v3225
  %3618 = vmatpush2.bf16.msra.mxu0 %v3224
  %3619 = vmatprep.subr.bf16.mxu0 %v3218
  %3620 = vmatpush2.bf16.msra.mxu0 %v3217
  %3621 = vmatprep.subr.bf16.mxu0 %v3211
  %3622 = vmatpush2.bf16.msra.mxu0 %v3210
  %3623 = vmatprep.mubr.bf16.mxu0 %v2362
  %3624 = vmatmul.mubr.bf16.gmra.mxu0 %v2361
  %v3625 = vpop.f32.mrf.mxu0
  %v3626 = vadd.f32 %v2578, %v3625
  %v3627 = vpop.f32.mrf.mxu0
  %v3628 = vadd.f32 %v2582, %v3627
  %v3629 = vpop.f32.mrf.mxu0
  %v3630 = vadd.f32 %v2578, %v3629
  %v3631 = vpop.f32.mrf.mxu0
  %v3632 = vadd.f32 %v2582, %v3631
  %3633 = vdwg.mxu0
  %3634 = vmatprep.subr.bf16.mxu0 %v3316
  %3635 = vmatpush1.bf16.msra.mxu0 %v3315
  %3636 = vmatprep.subr.bf16.mxu0 %v3309
  %3637 = vmatpush1.bf16.msra.mxu0 %v3308
  %3638 = vmatprep.subr.bf16.mxu0 %v3302
  %3639 = vmatpush1.bf16.msra.mxu0 %v3301
  %3640 = vmatprep.subr.bf16.mxu0 %v3295
  %3641 = vmatpush1.bf16.msra.mxu0 %v3294
  %3642 = vmatprep.subr.bf16.mxu0 %v3288
  %3643 = vmatpush1.bf16.msra.mxu0 %v3287
  %3644 = vmatprep.subr.bf16.mxu0 %v3281
  %3645 = vmatpush1.bf16.msra.mxu0 %v3280
  %3646 = vmatprep.subr.bf16.mxu0 %v3274
  %3647 = vmatpush1.bf16.msra.mxu0 %v3273
  %3648 = vmatprep.subr.bf16.mxu0 %v3267
  %3649 = vmatpush1.bf16.msra.mxu0 %v3266
  %3650 = vmatprep.subr.bf16.mxu0 0
  %3651 = vmatpush2.bf16.msra.mxu0 0
  %3652 = vmatprep.subr.bf16.mxu0 0
  %3653 = vmatpush2.bf16.msra.mxu0 0
  %3654 = vmatprep.subr.bf16.mxu0 0
  %3655 = vmatpush2.bf16.msra.mxu0 0
  %3656 = vmatprep.subr.bf16.mxu0 0
  %3657 = vmatpush2.bf16.msra.mxu0 0
  %3658 = vmatprep.subr.bf16.mxu0 0
  %3659 = vmatpush2.bf16.msra.mxu0 0
  %3660 = vmatprep.subr.bf16.mxu0 0
  %3661 = vmatpush2.bf16.msra.mxu0 0
  %3662 = vmatprep.subr.bf16.mxu0 0
  %3663 = vmatpush2.bf16.msra.mxu0 0
  %3664 = vmatprep.subr.bf16.mxu0 %v3323
  %3665 = vmatpush2.bf16.msra.mxu0 %v3322
  %3666 = vmatprep.mubr.bf16.mxu0 %v3503
  %3667 = vmatmul.mubr.bf16.gmra.mxu0 %v2363
  %v3668 = vpop.f32.mrf.mxu0
  %v3669 = vadd.f32 %v3626, %v3668
  %v3670 = vpop.f32.mrf.mxu0
  %v3671 = vadd.f32 %v3628, %v3670
  %v3672 = vpop.f32.mrf.mxu0
  %v3673 = vadd.f32 %v3630, %v3672
  %v3674 = vpop.f32.mrf.mxu0
  %v3675 = vadd.f32 %v3632, %v3674
  %3676 = vdwg.mxu0
  %3677 = vmatprep.subr.bf16.mxu0 %v3206
  %3678 = vmatpush1.bf16.msra.mxu0 %v3205
  %3679 = vmatprep.subr.bf16.mxu0 %v3199
  %3680 = vmatpush1.bf16.msra.mxu0 %v3198
  %3681 = vmatprep.subr.bf16.mxu0 %v3192
  %3682 = vmatpush1.bf16.msra.mxu0 %v3191
  %3683 = vmatprep.subr.bf16.mxu0 %v3185
  %3684 = vmatpush1.bf16.msra.mxu0 %v3184
  %3685 = vmatprep.subr.bf16.mxu0 %v3178
  %3686 = vmatpush1.bf16.msra.mxu0 %v3177
  %3687 = vmatprep.subr.bf16.mxu0 %v3171
  %3688 = vmatpush1.bf16.msra.mxu0 %v3170
  %3689 = vmatprep.subr.bf16.mxu0 %v3164
  %3690 = vmatpush1.bf16.msra.mxu0 %v3163
  %3691 = vmatprep.subr.bf16.mxu0 %v3157
  %3692 = vmatpush1.bf16.msra.mxu0 %v3156
  %3693 = vmatprep.subr.bf16.mxu0 %v3262
  %3694 = vmatpush2.bf16.msra.mxu0 %v3261
  %3695 = vmatprep.subr.bf16.mxu0 %v3255
  %3696 = vmatpush2.bf16.msra.mxu0 %v3254
  %3697 = vmatprep.subr.bf16.mxu0 %v3248
  %3698 = vmatpush2.bf16.msra.mxu0 %v3247
  %3699 = vmatprep.subr.bf16.mxu0 %v3241
  %3700 = vmatpush2.bf16.msra.mxu0 %v3240
  %3701 = vmatprep.subr.bf16.mxu0 %v3234
  %3702 = vmatpush2.bf16.msra.mxu0 %v3233
  %3703 = vmatprep.subr.bf16.mxu0 %v3227
  %3704 = vmatpush2.bf16.msra.mxu0 %v3226
  %3705 = vmatprep.subr.bf16.mxu0 %v3220
  %3706 = vmatpush2.bf16.msra.mxu0 %v3219
  %3707 = vmatprep.subr.bf16.mxu0 %v3213
  %3708 = vmatpush2.bf16.msra.mxu0 %v3212
  %3709 = vmatprep.mubr.bf16.mxu0 %v2362
  %3710 = vmatmul.mubr.bf16.gmra.mxu0 %v2361
  %v3711 = vpop.f32.mrf.mxu0
  %v3712 = vadd.f32 %v2586, %v3711
  %v3713 = vpop.f32.mrf.mxu0
  %v3714 = vadd.f32 %v2590, %v3713
  %v3715 = vpop.f32.mrf.mxu0
  %v3716 = vadd.f32 %v2586, %v3715
  %v3717 = vpop.f32.mrf.mxu0
  %v3718 = vadd.f32 %v2590, %v3717
  %3719 = vdwg.mxu0
  %3720 = vmatprep.subr.bf16.mxu0 %v3318
  %3721 = vmatpush1.bf16.msra.mxu0 %v3317
  %3722 = vmatprep.subr.bf16.mxu0 %v3311
  %3723 = vmatpush1.bf16.msra.mxu0 %v3310
  %3724 = vmatprep.subr.bf16.mxu0 %v3304
  %3725 = vmatpush1.bf16.msra.mxu0 %v3303
  %3726 = vmatprep.subr.bf16.mxu0 %v3297
  %3727 = vmatpush1.bf16.msra.mxu0 %v3296
  %3728 = vmatprep.subr.bf16.mxu0 %v3290
  %3729 = vmatpush1.bf16.msra.mxu0 %v3289
  %3730 = vmatprep.subr.bf16.mxu0 %v3283
  %3731 = vmatpush1.bf16.msra.mxu0 %v3282
  %3732 = vmatprep.subr.bf16.mxu0 %v3276
  %3733 = vmatpush1.bf16.msra.mxu0 %v3275
  %3734 = vmatprep.subr.bf16.mxu0 %v3269
  %3735 = vmatpush1.bf16.msra.mxu0 %v3268
  %3736 = vmatprep.subr.bf16.mxu0 0
  %3737 = vmatpush2.bf16.msra.mxu0 0
  %3738 = vmatprep.subr.bf16.mxu0 0
  %3739 = vmatpush2.bf16.msra.mxu0 0
  %3740 = vmatprep.subr.bf16.mxu0 0
  %3741 = vmatpush2.bf16.msra.mxu0 0
  %3742 = vmatprep.subr.bf16.mxu0 0
  %3743 = vmatpush2.bf16.msra.mxu0 0
  %3744 = vmatprep.subr.bf16.mxu0 0
  %3745 = vmatpush2.bf16.msra.mxu0 0
  %3746 = vmatprep.subr.bf16.mxu0 0
  %3747 = vmatpush2.bf16.msra.mxu0 0
  %3748 = vmatprep.subr.bf16.mxu0 0
  %3749 = vmatpush2.bf16.msra.mxu0 0
  %3750 = vmatprep.subr.bf16.mxu0 %v3325
  %3751 = vmatpush2.bf16.msra.mxu0 %v3324
  %3752 = vmatprep.mubr.bf16.mxu0 %v3503
  %3753 = vmatmul.mubr.bf16.gmra.mxu0 %v2363
  %v3754 = vpop.f32.mrf.mxu0
  %v3755 = vadd.f32 %v3712, %v3754
  %v3756 = vpop.f32.mrf.mxu0
  %v3757 = vadd.f32 %v3714, %v3756
  %v3758 = vpop.f32.mrf.mxu0
  %v3759 = vadd.f32 %v3716, %v3758
  %v3760 = vpop.f32.mrf.mxu0
  %v3761 = vadd.f32 %v3718, %v3760
  %3762 = vdwg.mxu0
  %3763 = vmatprep.subr.bf16.mxu0 0
  %3764 = vmatpush1.bf16.msra.mxu0 %v3207
  %3765 = vmatprep.subr.bf16.mxu0 0
  %3766 = vmatpush1.bf16.msra.mxu0 %v3200
  %3767 = vmatprep.subr.bf16.mxu0 0
  %3768 = vmatpush1.bf16.msra.mxu0 %v3193
  %3769 = vmatprep.subr.bf16.mxu0 0
  %3770 = vmatpush1.bf16.msra.mxu0 %v3186
  %3771 = vmatprep.subr.bf16.mxu0 0
  %3772 = vmatpush1.bf16.msra.mxu0 %v3179
  %3773 = vmatprep.subr.bf16.mxu0 0
  %3774 = vmatpush1.bf16.msra.mxu0 %v3172
  %3775 = vmatprep.subr.bf16.mxu0 0
  %3776 = vmatpush1.bf16.msra.mxu0 %v3165
  %3777 = vmatprep.subr.bf16.mxu0 0
  %3778 = vmatpush1.bf16.msra.mxu0 %v3158
  %3779 = vmatprep.subr.bf16.mxu0 0
  %3780 = vmatpush2.bf16.msra.mxu0 %v3263
  %3781 = vmatprep.subr.bf16.mxu0 0
  %3782 = vmatpush2.bf16.msra.mxu0 %v3256
  %3783 = vmatprep.subr.bf16.mxu0 0
  %3784 = vmatpush2.bf16.msra.mxu0 %v3249
  %3785 = vmatprep.subr.bf16.mxu0 0
  %3786 = vmatpush2.bf16.msra.mxu0 %v3242
  %3787 = vmatprep.subr.bf16.mxu0 0
  %3788 = vmatpush2.bf16.msra.mxu0 %v3235
  %3789 = vmatprep.subr.bf16.mxu0 0
  %3790 = vmatpush2.bf16.msra.mxu0 %v3228
  %3791 = vmatprep.subr.bf16.mxu0 0
  %3792 = vmatpush2.bf16.msra.mxu0 %v3221
  %3793 = vmatprep.subr.bf16.mxu0 0
  %3794 = vmatpush2.bf16.msra.mxu0 %v3214
  %3795 = vmatprep.mubr.bf16.mxu0 %v2362
  %3796 = vmatmul.mubr.bf16.gmra.mxu0 %v2361
  %v3797 = vpop.f32.mrf.mxu0
  %v3798 = vadd.f32 %v2594, %v3797
  %v3799 = vpop.f32.mrf.mxu0
  %v3800 = vpop.f32.mrf.mxu0
  %v3801 = vadd.f32 %v2594, %v3800
  %v3802 = vpop.f32.mrf.mxu0
  %3803 = vdwg.mxu0
  %3804 = vmatprep.subr.bf16.mxu0 0
  %3805 = vmatpush1.bf16.msra.mxu0 %v3319
  %3806 = vmatprep.subr.bf16.mxu0 0
  %3807 = vmatpush1.bf16.msra.mxu0 %v3312
  %3808 = vmatprep.subr.bf16.mxu0 0
  %3809 = vmatpush1.bf16.msra.mxu0 %v3305
  %3810 = vmatprep.subr.bf16.mxu0 0
  %3811 = vmatpush1.bf16.msra.mxu0 %v3298
  %3812 = vmatprep.subr.bf16.mxu0 0
  %3813 = vmatpush1.bf16.msra.mxu0 %v3291
  %3814 = vmatprep.subr.bf16.mxu0 0
  %3815 = vmatpush1.bf16.msra.mxu0 %v3284
  %3816 = vmatprep.subr.bf16.mxu0 0
  %3817 = vmatpush1.bf16.msra.mxu0 %v3277
  %3818 = vmatprep.subr.bf16.mxu0 0
  %3819 = vmatpush1.bf16.msra.mxu0 %v3270
  %3820 = vmatprep.subr.bf16.mxu0 0
  %3821 = vmatpush2.bf16.msra.mxu0 0
  %3822 = vmatprep.subr.bf16.mxu0 0
  %3823 = vmatpush2.bf16.msra.mxu0 0
  %3824 = vmatprep.subr.bf16.mxu0 0
  %3825 = vmatpush2.bf16.msra.mxu0 0
  %3826 = vmatprep.subr.bf16.mxu0 0
  %3827 = vmatpush2.bf16.msra.mxu0 0
  %3828 = vmatprep.subr.bf16.mxu0 0
  %3829 = vmatpush2.bf16.msra.mxu0 0
  %3830 = vmatprep.subr.bf16.mxu0 0
  %3831 = vmatpush2.bf16.msra.mxu0 0
  %3832 = vmatprep.subr.bf16.mxu0 0
  %3833 = vmatpush2.bf16.msra.mxu0 0
  %3834 = vmatprep.subr.bf16.mxu0 0
  %3835 = vmatpush2.bf16.msra.mxu0 %v3326
  %3836 = vmatprep.mubr.bf16.mxu0 %v3503
  %3837 = vmatmul.mubr.bf16.gmra.mxu0 %v2363
  %v3838 = vpop.f32.mrf.mxu0
  %v3839 = vadd.f32 %v3798, %v3838
  %v3840 = vpop.f32.mrf.mxu0
  %v3841 = vpop.f32.mrf.mxu0
  %v3842 = vadd.f32 %v3801, %v3841
  %v3843 = vpop.f32.mrf.mxu0
  %3844 = vdwg.mxu0
  %v3845 = vxor.u32 %v3583, 2147483648
  %v3846 = vxor.u32 %v3585, 2147483648
  %v3847 = vxor.u32 %v3669, 2147483648
  %v3848 = vxor.u32 %v3671, 2147483648
  %v3849 = vxor.u32 %v3755, 2147483648
  %v3850 = vxor.u32 %v3757, 2147483648
  %v3851 = vxor.u32 %v3839, 2147483648
  %v3852 = vxor.u32 %v3587, 2147483648
  %v3853 = vxor.u32 %v3589, 2147483648
  %v3854 = vxor.u32 %v3673, 2147483648
  %v3855 = vxor.u32 %v3675, 2147483648
  %v3856 = vxor.u32 %v3759, 2147483648
  %v3857 = vxor.u32 %v3761, 2147483648
  %v3858 = vxor.u32 %v3842, 2147483648
  %v3859 = vmul.f32 %v3845, 1.442695
  %v3860 = vpow.pop %v3859
  %v3861 = vmul.f32 %v3846, 1.442695
  %v3862 = vpow.pop %v3861
  %v3863 = vmul.f32 %v3847, 1.442695
  %v3864 = vpow.pop %v3863
  %v3865 = vmul.f32 %v3848, 1.442695
  %v3866 = vpow.pop %v3865
  %v3867 = vmul.f32 %v3849, 1.442695
  %v3868 = vpow.pop %v3867
  %v3869 = vmul.f32 %v3850, 1.442695
  %v3870 = vpow.pop %v3869
  %v3871 = vmul.f32 %v3851, 1.442695
  %v3872 = vpow.pop %v3871
  %v3873 = vmul.f32 %v3852, 1.442695
  %v3874 = vpow.pop %v3873
  %v3875 = vmul.f32 %v3853, 1.442695
  %v3876 = vpow.pop %v3875
  %v3877 = vmul.f32 %v3854, 1.442695
  %v3878 = vpow.pop %v3877
  %v3879 = vmul.f32 %v3855, 1.442695
  %v3880 = vpow.pop %v3879
  %v3881 = vmul.f32 %v3856, 1.442695
  %v3882 = vpow.pop %v3881
  %v3883 = vmul.f32 %v3857, 1.442695
  %v3884 = vpow.pop %v3883
  %v3885 = vmul.f32 %v3858, 1.442695
  %v3886 = vpow.pop %v3885
  %v3887 = vadd.f32 %v3860, 1.0
  %v3888 = vadd.f32 %v3862, 1.0
  %v3889 = vadd.f32 %v3864, 1.0
  %v3890 = vadd.f32 %v3866, 1.0
  %v3891 = vadd.f32 %v3868, 1.0
  %v3892 = vadd.f32 %v3870, 1.0
  %v3893 = vadd.f32 %v3872, 1.0
  %v3894 = vadd.f32 %v3874, 1.0
  %v3895 = vadd.f32 %v3876, 1.0
  %v3896 = vadd.f32 %v3878, 1.0
  %v3897 = vadd.f32 %v3880, 1.0
  %v3898 = vadd.f32 %v3882, 1.0
  %v3899 = vadd.f32 %v3884, 1.0
  %v3900 = vadd.f32 %v3886, 1.0
  %v3901 = vrcp.pop %v3887
  %v3902 = vmul.f32 1.0, %v3901
  %v3903 = vrcp.pop %v3888
  %v3904 = vmul.f32 1.0, %v3903
  %v3905 = vrcp.pop %v3889
  %v3906 = vmul.f32 1.0, %v3905
  %v3907 = vrcp.pop %v3890
  %v3908 = vmul.f32 1.0, %v3907
  %v3909 = vrcp.pop %v3891
  %v3910 = vmul.f32 1.0, %v3909
  %v3911 = vrcp.pop %v3892
  %v3912 = vmul.f32 1.0, %v3911
  %v3913 = vrcp.pop %v3893
  %v3914 = vmul.f32 1.0, %v3913
  %v3915 = vrcp.pop %v3894
  %v3916 = vmul.f32 1.0, %v3915
  %v3917 = vrcp.pop %v3895
  %v3918 = vmul.f32 1.0, %v3917
  %v3919 = vrcp.pop %v3896
  %v3920 = vmul.f32 1.0, %v3919
  %v3921 = vrcp.pop %v3897
  %v3922 = vmul.f32 1.0, %v3921
  %v3923 = vrcp.pop %v3898
  %v3924 = vmul.f32 1.0, %v3923
  %v3925 = vrcp.pop %v3899
  %v3926 = vmul.f32 1.0, %v3925
  %v3927 = vrcp.pop %v3900
  %v3928 = vmul.f32 1.0, %v3927
  %3929 = vst [vmem:[%s10] sm:$0xff] %v3902
  %3930 = vst [vmem:[%s10 + $0x8] sm:$0xff] %v3904
  %3931 = vst [vmem:[%s10 + $0x10] sm:$0xff] %v3906
  %3932 = vst [vmem:[%s10 + $0x18] sm:$0xff] %v3908
  %3933 = vst [vmem:[%s10 + $0x20] sm:$0xff] %v3910
  %3934 = vst [vmem:[%s10 + $0x28] sm:$0xff] %v3912
  %3935 = vst.msk [vmem:[%s10 + $0x30] sm:$0xff] %vm1279, %v3914
  %3936 = vst [vmem:[%s10 + $0x38] sm:$0xff] %v3916
  %3937 = vst [vmem:[%s10 + $0x40] sm:$0xff] %v3918
  %3938 = vst [vmem:[%s10 + $0x48] sm:$0xff] %v3920
  %3939 = vst [vmem:[%s10 + $0x50] sm:$0xff] %v3922
  %3940 = vst [vmem:[%s10 + $0x58] sm:$0xff] %v3924
  %3941 = vst [vmem:[%s10 + $0x60] sm:$0xff] %v3926
  %3942 = vst.msk [vmem:[%s10 + $0x68] sm:$0xff] %vm1279, %v3928
  %3943 = vst [vmem:[%s11] sm:$0xff] %v2032
  %3944 = vst [vmem:[%s11 + $0x8] sm:$0xff] %v2034
  %3945 = vst [vmem:[%s11 + $0x10] sm:$0xff] %v2036
  %3946 = vst [vmem:[%s11 + $0x18] sm:$0xff] %v2038
  // Predicated region
  $region42: #{vae_forward.1} parent=0 // pred_check
    _
  $region43: #{vae_forward.1} parent=0 // pred_check_branch
    %3948 = sbr.rel (0) target = $region45
  $region44: #{vae_forward.1} parent=0 // pred_region
    _
  $region45: #{vae_forward.1} parent=0 // pred_fallthru
    _
  // Predicated region
  $region46: #{vae_forward.1} parent=0 // pred_check
    _
  $region47: #{vae_forward.1} parent=0 // pred_check_branch
    %3950 = sbr.rel (0) target = $region49
  $region48: #{vae_forward.1} parent=0 // pred_region
    _
  $region49: #{vae_forward.1} parent=0 // pred_fallthru
    _
  // Predicated region
  $region50: #{vae_forward.1} parent=0 // pred_check
    _
  $region51: #{vae_forward.1} parent=0 // pred_check_branch
    %3952 = sbr.rel (0) target = $region53
  $region52: #{vae_forward.1} parent=0 // pred_region
    _
  $region53: #{vae_forward.1} parent=0 // pred_fallthru
    _
  // Predicated region
  $region54: #{vae_forward.1} parent=0 // pred_check
    _
  $region55: #{vae_forward.1} parent=0 // pred_check_branch
    %3954 = sbr.rel (0) target = $region57
  $region56: #{vae_forward.1} parent=0 // pred_region
    _
  $region57: #{vae_forward.1} parent=0 // pred_fallthru
    _

</llo_original>
